<compile_context>
chip_gen: v5e
topology: v5e:2x2
jax: 0.10.0
libtpu: 0.0.40
codegen_flags: <defaults>
</compile_context>

<pallas_src>
import math
from functools import partial

import numpy as np
import jax
import jax.numpy as jnp
from jax.experimental import pallas as pl
from jax.experimental.pallas import tpu as pltpu

LN_EPS = 1e-5
NEG_BIG = 1e30            # additive mask magnitude
VOCAB_OUT = 257
OUT_PAD = 384             # 257 rounded up to a multiple of 128
VMEM_LIMIT = 64 * 1024 * 1024


# ----------------------------------------------------------------------------
# small helpers used inside kernels
# ----------------------------------------------------------------------------
def _layernorm(x, g, b):
    mu = jnp.mean(x, axis=-1, keepdims=True)
    var = jnp.mean((x - mu) ** 2, axis=-1, keepdims=True)
    return (x - mu) * jax.lax.rsqrt(var + LN_EPS) * g + b


def _split_heads(t, n_heads, head_dim):
    # (S, dim) -> (H, S, head_dim) via static lane slices (avoids minor-dim reshape)
    parts = [t[None, :, h * head_dim:(h + 1) * head_dim] for h in range(n_heads)]
    return jnp.concatenate(parts, axis=0)


def _merge_heads(t, n_heads):
    # (H, S, head_dim) -> (S, H*head_dim), head-major columns (== torch transpose+reshape)
    return jnp.concatenate([t[h] for h in range(n_heads)], axis=-1)


# ----------------------------------------------------------------------------
# Pallas kernels
# ----------------------------------------------------------------------------
def attn_block_kernel(x_ref, g_ref, b_ref, qkvw_ref, qkvb_ref, rotp_ref,
                      cos_ref, sin_ref, mask_ref, outw_ref, outb_ref, o_ref,
                      *, n_heads, head_dim):
    """Fused attention block for one batch element:
       out = x + out_proj( attention( rotary( qkv_proj( LN(x) ) ) ) )."""
    dim = n_heads * head_dim
    scale = 1.0 / math.sqrt(head_dim)

    x = x_ref[0].astype(jnp.float32)                                   # (Sp, dim)
    h = _layernorm(x, g_ref[...].astype(jnp.float32), b_ref[...].astype(jnp.float32))
    hb = h.astype(jnp.bfloat16)

    qkv = jnp.dot(hb, qkvw_ref[...], preferred_element_type=jnp.float32)
    qkv = qkv + qkvb_ref[...].astype(jnp.float32)                      # (Sp, 3*dim)

    q = qkv[:, :dim] * scale                                           # scale folded into q
    k = qkv[:, dim:2 * dim]
    v = qkv[:, 2 * dim:].astype(jnp.bfloat16)

    # full-width rotary: partner ("rotate-half" with sign) via a constant signed
    # permutation matmul; cos/sin tables have duplicated halves per head.
    cos = cos_ref[0]                                                   # (Sp, dim) f32
    sin = sin_ref[0]
    rotp = rotp_ref[...]                                               # (dim, dim) bf16
    q_sw = jnp.dot(q.astype(jnp.bfloat16), rotp, preferred_element_type=jnp.float32)
    k_sw = jnp.dot(k.astype(jnp.bfloat16), rotp, preferred_element_type=jnp.float32)
    qr = (q * cos + q_sw * sin).astype(jnp.bfloat16)                   # (Sp, dim)
    kr = (k * cos + k_sw * sin).astype(jnp.bfloat16)

    # head-batched attention
    qh = _split_heads(qr, n_heads, head_dim)                           # (H, Sp, hd) bf16
    kh = _split_heads(kr, n_heads, head_dim)
    vh = _split_heads(v, n_heads, head_dim)

    bias = (mask_ref[0].astype(jnp.float32) - 1.0) * NEG_BIG           # (Sp, Sp): 0 / -1e30
    s = jnp.einsum('hqd,hkd->hqk', qh, kh, preferred_element_type=jnp.float32)
    s = s + bias[None, :, :]
    s = s - jnp.max(s, axis=-1, keepdims=True)
    p = jnp.exp(s)
    p = p * pl.reciprocal(jnp.sum(p, axis=-1, keepdims=True), approx=True)
    oh = jnp.einsum('hqk,hkd->hqd', p.astype(jnp.bfloat16), vh,
                    preferred_element_type=jnp.float32)                # (H, Sp, hd)

    attn = _merge_heads(oh, n_heads).astype(jnp.bfloat16)              # (Sp, dim)

    # fused out-projection + residual
    y = jnp.dot(attn, outw_ref[...], preferred_element_type=jnp.float32)
    y = y + outb_ref[...].astype(jnp.float32) + x
    o_ref[0] = y.astype(o_ref.dtype)


def ff_kernel(x_ref, g_ref, b_ref, wa_ref, ba_ref, wg_ref, bg_ref,
              wd_ref, bd_ref, o_ref):
    """Fused FeedForward with residual: x + down(a * silu(gate))."""
    x = x_ref[...].astype(jnp.float32)
    h = _layernorm(x, g_ref[...].astype(jnp.float32), b_ref[...].astype(jnp.float32))
    hb = h.astype(wa_ref.dtype)
    a = jnp.dot(hb, wa_ref[...], preferred_element_type=jnp.float32)
    a = a + ba_ref[...].astype(jnp.float32)
    gt = jnp.dot(hb, wg_ref[...], preferred_element_type=jnp.float32)
    gt = gt + bg_ref[...].astype(jnp.float32)
    z = a * (gt * jax.nn.sigmoid(gt))                                  # a * silu(gate)
    y = jnp.dot(z.astype(wd_ref.dtype), wd_ref[...], preferred_element_type=jnp.float32)
    y = y + bd_ref[...].astype(jnp.float32) + x                        # fused residual
    o_ref[...] = y.astype(o_ref.dtype)


def ln_linear_kernel(x_ref, g_ref, b_ref, w_ref, bias_ref, o_ref):
    """out = LayerNorm(x) @ W + bias  (final out_norm + out_proj)."""
    x = x_ref[...].astype(jnp.float32)
    h = _layernorm(x, g_ref[...].astype(jnp.float32), b_ref[...].astype(jnp.float32))
    y = jnp.dot(h.astype(w_ref.dtype), w_ref[...], preferred_element_type=jnp.float32)
    y = y + bias_ref[...].astype(jnp.float32)
    o_ref[...] = y.astype(o_ref.dtype)


# ----------------------------------------------------------------------------
# pallas_call wrappers
# ----------------------------------------------------------------------------
def _row_tile(n):
    # n is always a multiple of 128 here (sequence padded once up front).
    # Prefer >= 4 grid steps so a 2-TensorCore chip (v7x) stays balanced.
    if n % 256 == 0 and n // 256 >= 4:
        return 256
    return 128


def attention_block_call(x, g, b, qkv_w, qkv_b, rotp, cos, sin, mask, out_w, out_b,
                         *, n_heads, head_dim):
    B, Sp, dim = x.shape
    kernel = partial(attn_block_kernel, n_heads=n_heads, head_dim=head_dim)
    return pl.pallas_call(
        kernel,
        out_shape=jax.ShapeDtypeStruct((B, Sp, dim), jnp.float32),
        grid=(B,),
        in_specs=[
            pl.BlockSpec((1, Sp, dim), lambda bb: (bb, 0, 0)),      # x (residual)
            pl.BlockSpec((1, dim), lambda bb: (0, 0)),              # ln gamma
            pl.BlockSpec((1, dim), lambda bb: (0, 0)),              # ln beta
            pl.BlockSpec((dim, 3 * dim), lambda bb: (0, 0)),        # qkv weight (bf16)
            pl.BlockSpec((1, 3 * dim), lambda bb: (0, 0)),          # qkv bias
            pl.BlockSpec((dim, dim), lambda bb: (0, 0)),            # signed rotate-half perm
            pl.BlockSpec((1, Sp, dim), lambda bb: (bb, 0, 0)),      # cos (full width)
            pl.BlockSpec((1, Sp, dim), lambda bb: (bb, 0, 0)),      # sin (full width)
            pl.BlockSpec((1, Sp, Sp), lambda bb: (bb, 0, 0)),       # mask int8
            pl.BlockSpec((dim, dim), lambda bb: (0, 0)),            # out_proj weight (bf16)
            pl.BlockSpec((1, dim), lambda bb: (0, 0)),              # out_proj bias
        ],
        out_specs=pl.BlockSpec((1, Sp, dim), lambda bb: (bb, 0, 0)),
        compiler_params=pltpu.CompilerParams(
            dimension_semantics=("parallel",), vmem_limit_bytes=VMEM_LIMIT),
    )(x, g.reshape(1, -1), b.reshape(1, -1), qkv_w, qkv_b.reshape(1, -1), rotp,
      cos, sin, mask, out_w, out_b.reshape(1, -1))


def feed_forward_call(x, g, b, wa, ba, wg, bg, wd, bd):
    n, dim = x.shape
    hidden = wa.shape[1]
    tm = _row_tile(n)
    # TODO(synk): for production dim/hidden on v7x (64 MiB VMEM), single-buffer the
    # constant weight blocks (pipeline_mode=pl.Buffered(1)) or tile hidden/K.
    return pl.pallas_call(
        ff_kernel,
        out_shape=jax.ShapeDtypeStruct((n, dim), jnp.float32),
        grid=(n // tm,),
        in_specs=[
            pl.BlockSpec((tm, dim), lambda i: (i, 0)),
            pl.BlockSpec((1, dim), lambda i: (0, 0)),
            pl.BlockSpec((1, dim), lambda i: (0, 0)),
            pl.BlockSpec((dim, hidden), lambda i: (0, 0)),
            pl.BlockSpec((1, hidden), lambda i: (0, 0)),
            pl.BlockSpec((dim, hidden), lambda i: (0, 0)),
            pl.BlockSpec((1, hidden), lambda i: (0, 0)),
            pl.BlockSpec((hidden, dim), lambda i: (0, 0)),
            pl.BlockSpec((1, dim), lambda i: (0, 0)),
        ],
        out_specs=pl.BlockSpec((tm, dim), lambda i: (i, 0)),
        compiler_params=pltpu.CompilerParams(
            dimension_semantics=("parallel",), vmem_limit_bytes=VMEM_LIMIT),
    )(x, g.reshape(1, -1), b.reshape(1, -1), wa, ba.reshape(1, -1),
      wg, bg.reshape(1, -1), wd, bd.reshape(1, -1))


def ln_linear(x, g, b, w, bias, out_dtype):
    n, din = x.shape
    dout = w.shape[1]
    tm = _row_tile(n)
    return pl.pallas_call(
        ln_linear_kernel,
        out_shape=jax.ShapeDtypeStruct((n, dout), out_dtype),
        grid=(n // tm,),
        in_specs=[
            pl.BlockSpec((tm, din), lambda i: (i, 0)),
            pl.BlockSpec((1, din), lambda i: (0, 0)),
            pl.BlockSpec((1, din), lambda i: (0, 0)),
            pl.BlockSpec((din, dout), lambda i: (0, 0)),
            pl.BlockSpec((1, dout), lambda i: (0, 0)),
        ],
        out_specs=pl.BlockSpec((tm, dout), lambda i: (i, 0)),
        compiler_params=pltpu.CompilerParams(
            dimension_semantics=("parallel",), vmem_limit_bytes=VMEM_LIMIT),
    )(x, g.reshape(1, -1), b.reshape(1, -1), w, bias.reshape(1, -1))


# ----------------------------------------------------------------------------
# Model glue (plain JAX): embedding gathers, one-time padding, rotary tables
# ----------------------------------------------------------------------------
def transformer_forward(params, tokens, m, p, *, head_dim):
    B, S = tokens.shape
    dim = params["class_embed"].shape[1]
    H = dim // head_dim
    Sp = ((S + 127) // 128) * 128          # pad sequence ONCE to a lane-dense multiple

    cls = params["class_embed"][tokens[:, :1]]             # (B,1,dim)
    img = params["image_embed"][tokens[:, 1:]]             # (B,S-1,dim)
    x = jnp.concatenate([cls, img], axis=1).astype(jnp.float32)
    x = jnp.pad(x, ((0, 0), (0, Sp - S), (0, 0)))           # (B,Sp,dim) residual stream f32
    # embed_drop / all dropouts: eval mode -> identity

    # rotary tables are layer-invariant: gather + cos/sin ONCE, full width with
    # duplicated halves per head (lane-dense FMAs in-kernel)
    p_pad = jnp.pad(p.astype(jnp.int32), ((0, 0), (0, Sp - S)))
    th = params["theta"][p_pad]                              # (B,Sp,H,head_dim//2)
    th_full = jnp.concatenate([th, th], axis=-1).reshape(B, Sp, dim)
    cos = jnp.cos(th_full).astype(jnp.float32)               # (B,Sp,dim)
    sin = jnp.sin(th_full).astype(jnp.float32)

    mask = jnp.pad(m, ((0, 0), (0, Sp - S), (0, Sp - S))).astype(jnp.int8)  # (B,Sp,Sp)

    rotp = params["rot_perm"]                                 # (dim,dim) bf16, layer-invariant

    for blk in params["blocks"]:
        a = blk["attn"]
        x = attention_block_call(x, a["norm_g"], a["norm_b"], a["qkv_w"], a["qkv_b"],
                                 rotp, cos, sin, mask, a["out_w"], a["out_b"],
                                 n_heads=H, head_dim=head_dim)          # x + attn(x)
        f = blk["ff"]
        xf = feed_forward_call(x.reshape(B * Sp, dim), f["norm_g"], f["norm_b"],
                               f["wa"], f["ba"], f["wg"], f["bg"],
                               f["down_w"], f["down_b"])                # x + ff(x)
        x = xf.reshape(B, Sp, dim)

    logits = ln_linear(x.reshape(B * Sp, dim), params["out_norm_g"], params["out_norm_b"],
                       params["out_proj_w"], params["out_proj_b"],
                       out_dtype=jnp.float32)                # (B*Sp, OUT_PAD)
    return logits.reshape(B, Sp, OUT_PAD)[:, :S, :VOCAB_OUT]


# ----------------------------------------------------------------------------
# Parameter / rotary-table construction (deterministic)
# ----------------------------------------------------------------------------
def make_axial_pos_np(h, w):
    h_pos = np.linspace(-1.0, 1.0, h + 1)
    w_pos = np.linspace(-1.0, 1.0, w + 1)
    h_pos = (h_pos[:-1] + h_pos[1:]) / 2
    w_pos = (w_pos[:-1] + w_pos[1:]) / 2
    hh, ww = np.meshgrid(h_pos, w_pos, indexing="ij")
    return np.stack([hh, ww], axis=-1).reshape(h * w, 2)


def make_theta(n_heads, head_dim):
    log_min, log_max = math.log(math.pi), math.log(10 * math.pi)
    freqs = np.exp(np.linspace(log_min, log_max, n_heads * head_dim // 4 + 1)[:-1])
    freqs = freqs.reshape(head_dim // 4, n_heads).T          # (n_heads, head_dim//4)
    pos = make_axial_pos_np(28, 28)                          # (784, 2)
    pos = np.concatenate(
        [np.zeros((1, 2)), pos, pos[-28:] + (pos[-28:] - pos[-56:-28])], axis=0)  # (813,2)
    theta_h = pos[:, None, 0:1] * freqs                      # (813, n_heads, head_dim//4)
    theta_w = pos[:, None, 1:2] * freqs
    theta = np.concatenate([theta_h, theta_w], axis=-1)      # (813, n_heads, head_dim//2)
    return jnp.asarray(theta, dtype=jnp.float32)


def make_rot_perm(n_heads, head_dim):
    """Signed permutation P so that (x @ P) gives the per-head rotate-half partner:
       out[:, h*hd + j]        = -x[:, h*hd + j + d]   (j <  d)
       out[:, h*hd + d + j']   = +x[:, h*hd + j']      (j' < d)"""
    dim = n_heads * head_dim
    d = head_dim // 2
    P = np.zeros((dim, dim), np.float32)
    for h in range(n_heads):
        base = h * head_dim
        for j in range(d):
            P[base + d + j, base + j] = -1.0
            P[base + j, base + d + j] = 1.0
    return jnp.asarray(P, dtype=jnp.bfloat16)


def init_params(key, depth, dim, hidden_dim, head_dim):
    n_heads = dim // head_dim
    keys = iter(jax.random.split(key, 16 + depth * 16))

    def nrm_bf16(shape, scale=0.02):
        return (jax.random.normal(next(keys), shape) * scale).astype(jnp.bfloat16)

    def nrm_f32(shape, scale=1.0):
        return (jax.random.normal(next(keys), shape) * scale).astype(jnp.float32)

    # NOTE: layers that the PyTorch module zero-initializes (attn.out_proj, ff.down,
    # final out_proj) get small random weights here so the kernels do nontrivial work.
    blocks = []
    for _ in range(depth):
        attn = dict(
            norm_g=jnp.ones((dim,), jnp.float32), norm_b=jnp.zeros((dim,), jnp.float32),
            qkv_w=nrm_bf16((dim, 3 * dim)), qkv_b=jnp.zeros((3 * dim,), jnp.float32),
            out_w=nrm_bf16((dim, dim)), out_b=jnp.zeros((dim,), jnp.float32),
        )
        # torch `up.weight.T` split into value / gate halves (columns [0:h] / [h:2h])
        ff = dict(
            norm_g=jnp.ones((dim,), jnp.float32), norm_b=jnp.zeros((dim,), jnp.float32),
            wa=nrm_bf16((dim, hidden_dim)), ba=jnp.zeros((hidden_dim,), jnp.float32),
            wg=nrm_bf16((dim, hidden_dim)), bg=jnp.zeros((hidden_dim,), jnp.float32),
            down_w=nrm_bf16((hidden_dim, dim)), down_b=jnp.zeros((dim,), jnp.float32),
        )
        blocks.append(dict(attn=attn, ff=ff))

    # final projection padded to a lane-dense width (257 -> 384), sliced in JAX
    out_w = jax.random.normal(next(keys), (dim, VOCAB_OUT)) * 0.02
    out_w = jnp.pad(out_w, ((0, 0), (0, OUT_PAD - VOCAB_OUT))).astype(jnp.bfloat16)

    return dict(
        class_embed=nrm_f32((10, dim)),
        image_embed=nrm_f32((257, dim)),
        blocks=blocks,
        out_norm_g=jnp.ones((dim,), jnp.float32),
        out_norm_b=jnp.zeros((dim,), jnp.float32),
        out_proj_w=out_w,
        out_proj_b=jnp.zeros((OUT_PAD,), jnp.float32),
        theta=make_theta(n_heads, head_dim),
        rot_perm=make_rot_perm(n_heads, head_dim),
    )


# TODO(synk): KV-cache incremental decode path (cache, index != None) not implemented;
# only the full-sequence training/eval forward is covered.

if __name__ == "__main__":
    depth, dim, hidden_dim, head_dim = 2, 32, 64, 16
    B, S = 2, 16

    params = init_params(jax.random.PRNGKey(0), depth, dim, hidden_dim, head_dim)

    k_cls, k_img = jax.random.split(jax.random.PRNGKey(0))
    cls_tok = jax.random.randint(k_cls, (B, 1), 0, 10, dtype=jnp.int32)
    img_tok = jax.random.randint(k_img, (B, S - 1), 0, 257, dtype=jnp.int32)
    tokens = jnp.concatenate([cls_tok, img_tok], axis=1)

    idx = jnp.arange(S)
    m = jnp.broadcast_to(idx[None, :] <= idx[:, None], (B, S, S))        # causal, bool
    p = jnp.broadcast_to(jnp.arange(S, dtype=jnp.int32), (B, S))         # rotary pos indices

    fwd = jax.jit(transformer_forward, static_argnames=("head_dim",))
    out = fwd(params, tokens, m, p, head_dim=head_dim)
    out = jax.block_until_ready(out)

    assert out.shape == (B, S, VOCAB_OUT)
    assert bool(jnp.all(jnp.isfinite(out)))
    print("KERNEL_OK")
</pallas_src>

<mosaic_0001>
module attributes {stable_mosaic.version = 11 : i64} {
  func.func @ln_linear_kernel(%arg0: i32, %arg1: memref<128x32xf32, #tpu.memory_space<vmem>>, %arg2: memref<1x32xf32, #tpu.memory_space<vmem>>, %arg3: memref<1x32xf32, #tpu.memory_space<vmem>>, %arg4: memref<32x384xbf16, #tpu.memory_space<vmem>>, %arg5: memref<1x384xf32, #tpu.memory_space<vmem>>, %arg6: memref<128x384xf32, #tpu.memory_space<vmem>>) attributes {dimension_semantics = [#tpu.dimension_semantics<parallel>], iteration_bounds = array<i64: 2>, scalar_prefetch = 0 : i64, scratch_operands = 0 : i64, tpu.core_type = #tpu.core_type<tc>, window_params = [{transform_indices = @transform_0, window_bounds = array<i64: 128, 32>}, {pipeline_mode = #tpu.pipeline_mode<synchronous>, transform_indices = @transform_1, window_bounds = array<i64: 1, 32>}, {pipeline_mode = #tpu.pipeline_mode<synchronous>, transform_indices = @transform_2, window_bounds = array<i64: 1, 32>}, {pipeline_mode = #tpu.pipeline_mode<synchronous>, transform_indices = @transform_3, window_bounds = array<i64: 32, 384>}, {pipeline_mode = #tpu.pipeline_mode<synchronous>, transform_indices = @transform_4, window_bounds = array<i64: 1, 384>}, {transform_indices = @transform_5, window_bounds = array<i64: 128, 384>}]} {
    %c0 = arith.constant 0 : index
    %c0_0 = arith.constant 0 : index
    %0 = vector.load %arg1[%c0, %c0_0] : memref<128x32xf32, #tpu.memory_space<vmem>>, vector<128x32xf32>
    %c0_1 = arith.constant 0 : index
    %c0_2 = arith.constant 0 : index
    %1 = vector.load %arg2[%c0_1, %c0_2] : memref<1x32xf32, #tpu.memory_space<vmem>>, vector<1x32xf32>
    %c0_3 = arith.constant 0 : index
    %c0_4 = arith.constant 0 : index
    %2 = vector.load %arg3[%c0_3, %c0_4] : memref<1x32xf32, #tpu.memory_space<vmem>>, vector<1x32xf32>
    %cst = arith.constant dense<0.000000e+00> : vector<128xf32>
    %3 = vector.multi_reduction <add>, %0, %cst [1] : vector<128x32xf32> to vector<128xf32>
    %4 = vector.shape_cast %3 : vector<128xf32> to vector<128x1xf32>
    %cst_5 = arith.constant 3.200000e+01 : f32
    %5 = vector.broadcast %cst_5 : f32 to vector<128x1xf32>
    %6 = arith.divf %4, %5 : vector<128x1xf32>
    %7 = vector.broadcast %6 : vector<128x1xf32> to vector<128x32xf32>
    %8 = arith.subf %0, %7 : vector<128x32xf32>
    %9 = arith.mulf %8, %8 : vector<128x32xf32>
    %cst_6 = arith.constant dense<0.000000e+00> : vector<128xf32>
    %10 = vector.multi_reduction <add>, %9, %cst_6 [1] : vector<128x32xf32> to vector<128xf32>
    %11 = vector.shape_cast %10 : vector<128xf32> to vector<128x1xf32>
    %cst_7 = arith.constant 3.200000e+01 : f32
    %12 = vector.broadcast %cst_7 : f32 to vector<128x1xf32>
    %13 = arith.divf %11, %12 : vector<128x1xf32>
    %14 = vector.broadcast %6 : vector<128x1xf32> to vector<128x32xf32>
    %15 = arith.subf %0, %14 : vector<128x32xf32>
    %cst_8 = arith.constant 9.99999974E-6 : f32
    %16 = vector.broadcast %cst_8 : f32 to vector<128x1xf32>
    %17 = arith.addf %13, %16 : vector<128x1xf32>
    %18 = math.rsqrt %17 : vector<128x1xf32>
    %19 = vector.broadcast %18 : vector<128x1xf32> to vector<128x32xf32>
    %20 = arith.mulf %15, %19 : vector<128x32xf32>
    %21 = vector.broadcast %1 : vector<1x32xf32> to vector<128x32xf32>
    %22 = arith.mulf %20, %21 : vector<128x32xf32>
    %23 = vector.broadcast %2 : vector<1x32xf32> to vector<128x32xf32>
    %24 = arith.addf %22, %23 : vector<128x32xf32>
    %25 = arith.truncf %24 : vector<128x32xf32> to vector<128x32xbf16>
    %c0_9 = arith.constant 0 : index
    %c0_10 = arith.constant 0 : index
    %26 = vector.load %arg4[%c0_9, %c0_10] : memref<32x384xbf16, #tpu.memory_space<vmem>>, vector<32x384xbf16>
    %cst_11 = arith.constant dense<0.000000e+00> : vector<128x384xf32>
    %27 = tpu.matmul %25, %26, %cst_11 {dimension_numbers = #tpu.dot_dimension_numbers<[1], [0], [0], [1], [0, 0, 1, 1], [], []>} : vector<128x32xbf16>, vector<32x384xbf16>, vector<128x384xf32> -> vector<128x384xf32>
    %c0_12 = arith.constant 0 : index
    %c0_13 = arith.constant 0 : index
    %28 = vector.load %arg5[%c0_12, %c0_13] : memref<1x384xf32, #tpu.memory_space<vmem>>, vector<1x384xf32>
    %29 = vector.broadcast %28 : vector<1x384xf32> to vector<128x384xf32>
    %30 = arith.addf %27, %29 : vector<128x384xf32>
    %c0_14 = arith.constant 0 : index
    %c0_15 = arith.constant 0 : index
    %31 = vector.load %arg6[%c0_14, %c0_15] : memref<128x384xf32, #tpu.memory_space<vmem>>, vector<128x384xf32>
    tpu.vector_store %arg6[%c0_14, %c0_15], %30 {strides = array<i32>} : memref<128x384xf32, #tpu.memory_space<vmem>>, vector<128x384xf32>,
    return
  }
  func.func @transform_0(%arg0: i32) -> (i32, i32) {
    %c0_i32 = arith.constant 0 : i32
    %c0_i32_0 = arith.constant 0 : i32
    return %arg0, %c0_i32 : i32, i32
  }
  func.func @transform_1(%arg0: i32) -> (i32, i32) {
    %c0_i32 = arith.constant 0 : i32
    %c0_i32_0 = arith.constant 0 : i32
    %c0_i32_1 = arith.constant 0 : i32
    return %c0_i32, %c0_i32_0 : i32, i32
  }
  func.func @transform_2(%arg0: i32) -> (i32, i32) {
    %c0_i32 = arith.constant 0 : i32
    %c0_i32_0 = arith.constant 0 : i32
    %c0_i32_1 = arith.constant 0 : i32
    return %c0_i32, %c0_i32_0 : i32, i32
  }
  func.func @transform_3(%arg0: i32) -> (i32, i32) {
    %c0_i32 = arith.constant 0 : i32
    %c0_i32_0 = arith.constant 0 : i32
    %c0_i32_1 = arith.constant 0 : i32
    return %c0_i32, %c0_i32_0 : i32, i32
  }
  func.func @transform_4(%arg0: i32) -> (i32, i32) {
    %c0_i32 = arith.constant 0 : i32
    %c0_i32_0 = arith.constant 0 : i32
    %c0_i32_1 = arith.constant 0 : i32
    return %c0_i32, %c0_i32_0 : i32, i32
  }
  func.func @transform_5(%arg0: i32) -> (i32, i32) {
    %c0_i32 = arith.constant 0 : i32
    %c0_i32_0 = arith.constant 0 : i32
    return %arg0, %c0_i32 : i32, i32
  }
}

module attributes {stable_mosaic.version = 11 : i64} {
  func.func @ff_kernel(%arg0: i32, %arg1: memref<128x32xf32, #tpu.memory_space<vmem>>, %arg2: memref<1x32xf32, #tpu.memory_space<vmem>>, %arg3: memref<1x32xf32, #tpu.memory_space<vmem>>, %arg4: memref<32x64xbf16, #tpu.memory_space<vmem>>, %arg5: memref<1x64xf32, #tpu.memory_space<vmem>>, %arg6: memref<32x64xbf16, #tpu.memory_space<vmem>>, %arg7: memref<1x64xf32, #tpu.memory_space<vmem>>, %arg8: memref<64x32xbf16, #tpu.memory_space<vmem>>, %arg9: memref<1x32xf32, #tpu.memory_space<vmem>>, %arg10: memref<128x32xf32, #tpu.memory_space<vmem>>) attributes {dimension_semantics = [#tpu.dimension_semantics<parallel>], iteration_bounds = array<i64: 2>, scalar_prefetch = 0 : i64, scratch_operands = 0 : i64, tpu.core_type = #tpu.core_type<tc>, window_params = [{transform_indices = @transform_0, window_bounds = array<i64: 128, 32>}, {pipeline_mode = #tpu.pipeline_mode<synchronous>, transform_indices = @transform_1, window_bounds = array<i64: 1, 32>}, {pipeline_mode = #tpu.pipeline_mode<synchronous>, transform_indices = @transform_2, window_bounds = array<i64: 1, 32>}, {pipeline_mode = #tpu.pipeline_mode<synchronous>, transform_indices = @transform_3, window_bounds = array<i64: 32, 64>}, {pipeline_mode = #tpu.pipeline_mode<synchronous>, transform_indices = @transform_4, window_bounds = array<i64: 1, 64>}, {pipeline_mode = #tpu.pipeline_mode<synchronous>, transform_indices = @transform_5, window_bounds = array<i64: 32, 64>}, {pipeline_mode = #tpu.pipeline_mode<synchronous>, transform_indices = @transform_6, window_bounds = array<i64: 1, 64>}, {pipeline_mode = #tpu.pipeline_mode<synchronous>, transform_indices = @transform_7, window_bounds = array<i64: 64, 32>}, {pipeline_mode = #tpu.pipeline_mode<synchronous>, transform_indices = @transform_8, window_bounds = array<i64: 1, 32>}, {transform_indices = @transform_9, window_bounds = array<i64: 128, 32>}]} {
    %c0 = arith.constant 0 : index
    %c0_0 = arith.constant 0 : index
    %0 = vector.load %arg1[%c0, %c0_0] : memref<128x32xf32, #tpu.memory_space<vmem>>, vector<128x32xf32>
    %c0_1 = arith.constant 0 : index
    %c0_2 = arith.constant 0 : index
    %1 = vector.load %arg2[%c0_1, %c0_2] : memref<1x32xf32, #tpu.memory_space<vmem>>, vector<1x32xf32>
    %c0_3 = arith.constant 0 : index
    %c0_4 = arith.constant 0 : index
    %2 = vector.load %arg3[%c0_3, %c0_4] : memref<1x32xf32, #tpu.memory_space<vmem>>, vector<1x32xf32>
    %cst = arith.constant dense<0.000000e+00> : vector<128xf32>
    %3 = vector.multi_reduction <add>, %0, %cst [1] : vector<128x32xf32> to vector<128xf32>
    %4 = vector.shape_cast %3 : vector<128xf32> to vector<128x1xf32>
    %cst_5 = arith.constant 3.200000e+01 : f32
    %5 = vector.broadcast %cst_5 : f32 to vector<128x1xf32>
    %6 = arith.divf %4, %5 : vector<128x1xf32>
    %7 = vector.broadcast %6 : vector<128x1xf32> to vector<128x32xf32>
    %8 = arith.subf %0, %7 : vector<128x32xf32>
    %9 = arith.mulf %8, %8 : vector<128x32xf32>
    %cst_6 = arith.constant dense<0.000000e+00> : vector<128xf32>
    %10 = vector.multi_reduction <add>, %9, %cst_6 [1] : vector<128x32xf32> to vector<128xf32>
    %11 = vector.shape_cast %10 : vector<128xf32> to vector<128x1xf32>
    %cst_7 = arith.constant 3.200000e+01 : f32
    %12 = vector.broadcast %cst_7 : f32 to vector<128x1xf32>
    %13 = arith.divf %11, %12 : vector<128x1xf32>
    %14 = vector.broadcast %6 : vector<128x1xf32> to vector<128x32xf32>
    %15 = arith.subf %0, %14 : vector<128x32xf32>
    %cst_8 = arith.constant 9.99999974E-6 : f32
    %16 = vector.broadcast %cst_8 : f32 to vector<128x1xf32>
    %17 = arith.addf %13, %16 : vector<128x1xf32>
    %18 = math.rsqrt %17 : vector<128x1xf32>
    %19 = vector.broadcast %18 : vector<128x1xf32> to vector<128x32xf32>
    %20 = arith.mulf %15, %19 : vector<128x32xf32>
    %21 = vector.broadcast %1 : vector<1x32xf32> to vector<128x32xf32>
    %22 = arith.mulf %20, %21 : vector<128x32xf32>
    %23 = vector.broadcast %2 : vector<1x32xf32> to vector<128x32xf32>
    %24 = arith.addf %22, %23 : vector<128x32xf32>
    %25 = arith.truncf %24 : vector<128x32xf32> to vector<128x32xbf16>
    %c0_9 = arith.constant 0 : index
    %c0_10 = arith.constant 0 : index
    %26 = vector.load %arg4[%c0_9, %c0_10] : memref<32x64xbf16, #tpu.memory_space<vmem>>, vector<32x64xbf16>
    %cst_11 = arith.constant dense<0.000000e+00> : vector<128x64xf32>
    %27 = tpu.matmul %25, %26, %cst_11 {dimension_numbers = #tpu.dot_dimension_numbers<[1], [0], [0], [1], [0, 0, 1, 1], [], []>} : vector<128x32xbf16>, vector<32x64xbf16>, vector<128x64xf32> -> vector<128x64xf32>
    %c0_12 = arith.constant 0 : index
    %c0_13 = arith.constant 0 : index
    %28 = vector.load %arg5[%c0_12, %c0_13] : memref<1x64xf32, #tpu.memory_space<vmem>>, vector<1x64xf32>
    %29 = vector.broadcast %28 : vector<1x64xf32> to vector<128x64xf32>
    %30 = arith.addf %27, %29 : vector<128x64xf32>
    %c0_14 = arith.constant 0 : index
    %c0_15 = arith.constant 0 : index
    %31 = vector.load %arg6[%c0_14, %c0_15] : memref<32x64xbf16, #tpu.memory_space<vmem>>, vector<32x64xbf16>
    %cst_16 = arith.constant dense<0.000000e+00> : vector<128x64xf32>
    %32 = tpu.matmul %25, %31, %cst_16 {dimension_numbers = #tpu.dot_dimension_numbers<[1], [0], [0], [1], [0, 0, 1, 1], [], []>} : vector<128x32xbf16>, vector<32x64xbf16>, vector<128x64xf32> -> vector<128x64xf32>
    %c0_17 = arith.constant 0 : index
    %c0_18 = arith.constant 0 : index
    %33 = vector.load %arg7[%c0_17, %c0_18] : memref<1x64xf32, #tpu.memory_space<vmem>>, vector<1x64xf32>
    %34 = vector.broadcast %33 : vector<1x64xf32> to vector<128x64xf32>
    %35 = arith.addf %32, %34 : vector<128x64xf32>
    %36 = arith.negf %35 : vector<128x64xf32>
    %37 = math.exp %36 : vector<128x64xf32>
    %cst_19 = arith.constant 1.000000e+00 : f32
    %38 = vector.broadcast %cst_19 : f32 to vector<128x64xf32>
    %39 = arith.addf %38, %37 : vector<128x64xf32>
    %40 = arith.divf %38, %39 : vector<128x64xf32>
    %41 = arith.mulf %35, %40 : vector<128x64xf32>
    %42 = arith.mulf %30, %41 : vector<128x64xf32>
    %43 = arith.truncf %42 : vector<128x64xf32> to vector<128x64xbf16>
    %c0_20 = arith.constant 0 : index
    %c0_21 = arith.constant 0 : index
    %44 = vector.load %arg8[%c0_20, %c0_21] : memref<64x32xbf16, #tpu.memory_space<vmem>>, vector<64x32xbf16>
    %cst_22 = arith.constant dense<0.000000e+00> : vector<128x32xf32>
    %45 = tpu.matmul %43, %44, %cst_22 {dimension_numbers = #tpu.dot_dimension_numbers<[1], [0], [0], [1], [0, 0, 1, 1], [], []>} : vector<128x64xbf16>, vector<64x32xbf16>, vector<128x32xf32> -> vector<128x32xf32>
    %c0_23 = arith.constant 0 : index
    %c0_24 = arith.constant 0 : index
    %46 = vector.load %arg9[%c0_23, %c0_24] : memref<1x32xf32, #tpu.memory_space<vmem>>, vector<1x32xf32>
    %47 = vector.broadcast %46 : vector<1x32xf32> to vector<128x32xf32>
    %48 = arith.addf %45, %47 : vector<128x32xf32>
    %49 = arith.addf %48, %0 : vector<128x32xf32>
    %c0_25 = arith.constant 0 : index
    %c0_26 = arith.constant 0 : index
    %50 = vector.load %arg10[%c0_25, %c0_26] : memref<128x32xf32, #tpu.memory_space<vmem>>, vector<128x32xf32>
    tpu.vector_store %arg10[%c0_25, %c0_26], %49 {strides = array<i32>} : memref<128x32xf32, #tpu.memory_space<vmem>>, vector<128x32xf32>,
    return
  }
  func.func @transform_0(%arg0: i32) -> (i32, i32) {
    %c0_i32 = arith.constant 0 : i32
    %c0_i32_0 = arith.constant 0 : i32
    return %arg0, %c0_i32 : i32, i32
  }
  func.func @transform_1(%arg0: i32) -> (i32, i32) {
    %c0_i32 = arith.constant 0 : i32
    %c0_i32_0 = arith.constant 0 : i32
    %c0_i32_1 = arith.constant 0 : i32
    return %c0_i32, %c0_i32_0 : i32, i32
  }
  func.func @transform_2(%arg0: i32) -> (i32, i32) {
    %c0_i32 = arith.constant 0 : i32
    %c0_i32_0 = arith.constant 0 : i32
    %c0_i32_1 = arith.constant 0 : i32
    return %c0_i32, %c0_i32_0 : i32, i32
  }
  func.func @transform_3(%arg0: i32) -> (i32, i32) {
    %c0_i32 = arith.constant 0 : i32
    %c0_i32_0 = arith.constant 0 : i32
    %c0_i32_1 = arith.constant 0 : i32
    return %c0_i32, %c0_i32_0 : i32, i32
  }
  func.func @transform_4(%arg0: i32) -> (i32, i32) {
    %c0_i32 = arith.constant 0 : i32
    %c0_i32_0 = arith.constant 0 : i32
    %c0_i32_1 = arith.constant 0 : i32
    return %c0_i32, %c0_i32_0 : i32, i32
  }
  func.func @transform_5(%arg0: i32) -> (i32, i32) {
    %c0_i32 = arith.constant 0 : i32
    %c0_i32_0 = arith.constant 0 : i32
    %c0_i32_1 = arith.constant 0 : i32
    return %c0_i32, %c0_i32_0 : i32, i32
  }
  func.func @transform_6(%arg0: i32) -> (i32, i32) {
    %c0_i32 = arith.constant 0 : i32
    %c0_i32_0 = arith.constant 0 : i32
    %c0_i32_1 = arith.constant 0 : i32
    return %c0_i32, %c0_i32_0 : i32, i32
  }
  func.func @transform_7(%arg0: i32) -> (i32, i32) {
    %c0_i32 = arith.constant 0 : i32
    %c0_i32_0 = arith.constant 0 : i32
    %c0_i32_1 = arith.constant 0 : i32
    return %c0_i32, %c0_i32_0 : i32, i32
  }
  func.func @transform_8(%arg0: i32) -> (i32, i32) {
    %c0_i32 = arith.constant 0 : i32
    %c0_i32_0 = arith.constant 0 : i32
    %c0_i32_1 = arith.constant 0 : i32
    return %c0_i32, %c0_i32_0 : i32, i32
  }
  func.func @transform_9(%arg0: i32) -> (i32, i32) {
    %c0_i32 = arith.constant 0 : i32
    %c0_i32_0 = arith.constant 0 : i32
    return %arg0, %c0_i32 : i32, i32
  }
}

module attributes {stable_mosaic.version = 11 : i64} {
  func.func @attn_block_kernel(%arg0: i32, %arg1: memref<1x128x32xf32, #tpu.memory_space<vmem>>, %arg2: memref<1x32xf32, #tpu.memory_space<vmem>>, %arg3: memref<1x32xf32, #tpu.memory_space<vmem>>, %arg4: memref<32x96xbf16, #tpu.memory_space<vmem>>, %arg5: memref<1x96xf32, #tpu.memory_space<vmem>>, %arg6: memref<32x32xbf16, #tpu.memory_space<vmem>>, %arg7: memref<1x128x32xf32, #tpu.memory_space<vmem>>, %arg8: memref<1x128x32xf32, #tpu.memory_space<vmem>>, %arg9: memref<1x128x128xi8, #tpu.memory_space<vmem>>, %arg10: memref<32x32xbf16, #tpu.memory_space<vmem>>, %arg11: memref<1x32xf32, #tpu.memory_space<vmem>>, %arg12: memref<1x128x32xf32, #tpu.memory_space<vmem>>) attributes {dimension_semantics = [#tpu.dimension_semantics<parallel>], iteration_bounds = array<i64: 2>, scalar_prefetch = 0 : i64, scratch_operands = 0 : i64, tpu.core_type = #tpu.core_type<tc>, window_params = [{transform_indices = @transform_0, window_bounds = array<i64: 1, 128, 32>}, {pipeline_mode = #tpu.pipeline_mode<synchronous>, transform_indices = @transform_1, window_bounds = array<i64: 1, 32>}, {pipeline_mode = #tpu.pipeline_mode<synchronous>, transform_indices = @transform_2, window_bounds = array<i64: 1, 32>}, {pipeline_mode = #tpu.pipeline_mode<synchronous>, transform_indices = @transform_3, window_bounds = array<i64: 32, 96>}, {pipeline_mode = #tpu.pipeline_mode<synchronous>, transform_indices = @transform_4, window_bounds = array<i64: 1, 96>}, {pipeline_mode = #tpu.pipeline_mode<synchronous>, transform_indices = @transform_5, window_bounds = array<i64: 32, 32>}, {transform_indices = @transform_6, window_bounds = array<i64: 1, 128, 32>}, {transform_indices = @transform_7, window_bounds = array<i64: 1, 128, 32>}, {transform_indices = @transform_8, window_bounds = array<i64: 1, 128, 128>}, {pipeline_mode = #tpu.pipeline_mode<synchronous>, transform_indices = @transform_9, window_bounds = array<i64: 32, 32>}, {pipeline_mode = #tpu.pipeline_mode<synchronous>, transform_indices = @transform_10, window_bounds = array<i64: 1, 32>}, {transform_indices = @transform_11, window_bounds = array<i64: 1, 128, 32>}]} {
    %c0 = arith.constant 0 : index
    %c0_0 = arith.constant 0 : index
    %c0_1 = arith.constant 0 : index
    %0 = vector.load %arg1[%c0, %c0_0, %c0_1] : memref<1x128x32xf32, #tpu.memory_space<vmem>>, vector<1x128x32xf32>
    %1 = vector.shape_cast %0 : vector<1x128x32xf32> to vector<128x32xf32>
    %c0_2 = arith.constant 0 : index
    %c0_3 = arith.constant 0 : index
    %2 = vector.load %arg2[%c0_2, %c0_3] : memref<1x32xf32, #tpu.memory_space<vmem>>, vector<1x32xf32>
    %c0_4 = arith.constant 0 : index
    %c0_5 = arith.constant 0 : index
    %3 = vector.load %arg3[%c0_4, %c0_5] : memref<1x32xf32, #tpu.memory_space<vmem>>, vector<1x32xf32>
    %cst = arith.constant dense<0.000000e+00> : vector<128xf32>
    %4 = vector.multi_reduction <add>, %1, %cst [1] : vector<128x32xf32> to vector<128xf32>
    %5 = vector.shape_cast %4 : vector<128xf32> to vector<128x1xf32>
    %cst_6 = arith.constant 3.200000e+01 : f32
    %6 = vector.broadcast %cst_6 : f32 to vector<128x1xf32>
    %7 = arith.divf %5, %6 : vector<128x1xf32>
    %8 = vector.broadcast %7 : vector<128x1xf32> to vector<128x32xf32>
    %9 = arith.subf %1, %8 : vector<128x32xf32>
    %10 = arith.mulf %9, %9 : vector<128x32xf32>
    %cst_7 = arith.constant dense<0.000000e+00> : vector<128xf32>
    %11 = vector.multi_reduction <add>, %10, %cst_7 [1] : vector<128x32xf32> to vector<128xf32>
    %12 = vector.shape_cast %11 : vector<128xf32> to vector<128x1xf32>
    %cst_8 = arith.constant 3.200000e+01 : f32
    %13 = vector.broadcast %cst_8 : f32 to vector<128x1xf32>
    %14 = arith.divf %12, %13 : vector<128x1xf32>
    %15 = vector.broadcast %7 : vector<128x1xf32> to vector<128x32xf32>
    %16 = arith.subf %1, %15 : vector<128x32xf32>
    %cst_9 = arith.constant 9.99999974E-6 : f32
    %17 = vector.broadcast %cst_9 : f32 to vector<128x1xf32>
    %18 = arith.addf %14, %17 : vector<128x1xf32>
    %19 = math.rsqrt %18 : vector<128x1xf32>
    %20 = vector.broadcast %19 : vector<128x1xf32> to vector<128x32xf32>
    %21 = arith.mulf %16, %20 : vector<128x32xf32>
    %22 = vector.broadcast %2 : vector<1x32xf32> to vector<128x32xf32>
    %23 = arith.mulf %21, %22 : vector<128x32xf32>
    %24 = vector.broadcast %3 : vector<1x32xf32> to vector<128x32xf32>
    %25 = arith.addf %23, %24 : vector<128x32xf32>
    %26 = arith.truncf %25 : vector<128x32xf32> to vector<128x32xbf16>
    %c0_10 = arith.constant 0 : index
    %c0_11 = arith.constant 0 : index
    %27 = vector.load %arg4[%c0_10, %c0_11] : memref<32x96xbf16, #tpu.memory_space<vmem>>, vector<32x96xbf16>
    %cst_12 = arith.constant dense<0.000000e+00> : vector<128x96xf32>
    %28 = tpu.matmul %26, %27, %cst_12 {dimension_numbers = #tpu.dot_dimension_numbers<[1], [0], [0], [1], [0, 0, 1, 1], [], []>} : vector<128x32xbf16>, vector<32x96xbf16>, vector<128x96xf32> -> vector<128x96xf32>
    %c0_13 = arith.constant 0 : index
    %c0_14 = arith.constant 0 : index
    %29 = vector.load %arg5[%c0_13, %c0_14] : memref<1x96xf32, #tpu.memory_space<vmem>>, vector<1x96xf32>
    %30 = vector.broadcast %29 : vector<1x96xf32> to vector<128x96xf32>
    %31 = arith.addf %28, %30 : vector<128x96xf32>
    %32 = vector.extract_strided_slice %31 {offsets = [0, 0], sizes = [128, 32], strides = [1, 1]} : vector<128x96xf32> to vector<128x32xf32>
    %cst_15 = arith.constant 2.500000e-01 : f32
    %33 = vector.broadcast %cst_15 : f32 to vector<128x32xf32>
    %34 = arith.mulf %32, %33 : vector<128x32xf32>
    %35 = vector.extract_strided_slice %31 {offsets = [0, 32], sizes = [128, 32], strides = [1, 1]} : vector<128x96xf32> to vector<128x32xf32>
    %36 = vector.extract_strided_slice %31 {offsets = [0, 64], sizes = [128, 32], strides = [1, 1]} : vector<128x96xf32> to vector<128x32xf32>
    %37 = arith.truncf %36 : vector<128x32xf32> to vector<128x32xbf16>
    %c0_16 = arith.constant 0 : index
    %c0_17 = arith.constant 0 : index
    %c0_18 = arith.constant 0 : index
    %38 = vector.load %arg7[%c0_16, %c0_17, %c0_18] : memref<1x128x32xf32, #tpu.memory_space<vmem>>, vector<1x128x32xf32>
    %39 = vector.shape_cast %38 : vector<1x128x32xf32> to vector<128x32xf32>
    %c0_19 = arith.constant 0 : index
    %c0_20 = arith.constant 0 : index
    %c0_21 = arith.constant 0 : index
    %40 = vector.load %arg8[%c0_19, %c0_20, %c0_21] : memref<1x128x32xf32, #tpu.memory_space<vmem>>, vector<1x128x32xf32>
    %41 = vector.shape_cast %40 : vector<1x128x32xf32> to vector<128x32xf32>
    %c0_22 = arith.constant 0 : index
    %c0_23 = arith.constant 0 : index
    %42 = vector.load %arg6[%c0_22, %c0_23] : memref<32x32xbf16, #tpu.memory_space<vmem>>, vector<32x32xbf16>
    %43 = arith.truncf %34 : vector<128x32xf32> to vector<128x32xbf16>
    %cst_24 = arith.constant dense<0.000000e+00> : vector<128x32xf32>
    %44 = tpu.matmul %43, %42, %cst_24 {dimension_numbers = #tpu.dot_dimension_numbers<[1], [0], [0], [1], [0, 0, 1, 1], [], []>} : vector<128x32xbf16>, vector<32x32xbf16>, vector<128x32xf32> -> vector<128x32xf32>
    %45 = arith.truncf %35 : vector<128x32xf32> to vector<128x32xbf16>
    %cst_25 = arith.constant dense<0.000000e+00> : vector<128x32xf32>
    %46 = tpu.matmul %45, %42, %cst_25 {dimension_numbers = #tpu.dot_dimension_numbers<[1], [0], [0], [1], [0, 0, 1, 1], [], []>} : vector<128x32xbf16>, vector<32x32xbf16>, vector<128x32xf32> -> vector<128x32xf32>
    %47 = arith.mulf %34, %39 : vector<128x32xf32>
    %48 = arith.mulf %44, %41 : vector<128x32xf32>
    %49 = arith.addf %47, %48 : vector<128x32xf32>
    %50 = arith.truncf %49 : vector<128x32xf32> to vector<128x32xbf16>
    %51 = arith.mulf %35, %39 : vector<128x32xf32>
    %52 = arith.mulf %46, %41 : vector<128x32xf32>
    %53 = arith.addf %51, %52 : vector<128x32xf32>
    %54 = arith.truncf %53 : vector<128x32xf32> to vector<128x32xbf16>
    %55 = vector.extract_strided_slice %50 {offsets = [0, 0], sizes = [128, 16], strides = [1, 1]} : vector<128x32xbf16> to vector<128x16xbf16>
    %56 = vector.shape_cast %55 : vector<128x16xbf16> to vector<1x128x16xbf16>
    %57 = vector.extract_strided_slice %50 {offsets = [0, 16], sizes = [128, 16], strides = [1, 1]} : vector<128x32xbf16> to vector<128x16xbf16>
    %58 = vector.shape_cast %57 : vector<128x16xbf16> to vector<1x128x16xbf16>
    %59 = tpu.concatenate %56, %58 in 0 : vector<1x128x16xbf16>, vector<1x128x16xbf16> -> vector<2x128x16xbf16>
    %60 = vector.extract_strided_slice %54 {offsets = [0, 0], sizes = [128, 16], strides = [1, 1]} : vector<128x32xbf16> to vector<128x16xbf16>
    %61 = vector.shape_cast %60 : vector<128x16xbf16> to vector<1x128x16xbf16>
    %62 = vector.extract_strided_slice %54 {offsets = [0, 16], sizes = [128, 16], strides = [1, 1]} : vector<128x32xbf16> to vector<128x16xbf16>
    %63 = vector.shape_cast %62 : vector<128x16xbf16> to vector<1x128x16xbf16>
    %64 = tpu.concatenate %61, %63 in 0 : vector<1x128x16xbf16>, vector<1x128x16xbf16> -> vector<2x128x16xbf16>
    %65 = vector.extract_strided_slice %37 {offsets = [0, 0], sizes = [128, 16], strides = [1, 1]} : vector<128x32xbf16> to vector<128x16xbf16>
    %66 = vector.shape_cast %65 : vector<128x16xbf16> to vector<1x128x16xbf16>
    %67 = vector.extract_strided_slice %37 {offsets = [0, 16], sizes = [128, 16], strides = [1, 1]} : vector<128x32xbf16> to vector<128x16xbf16>
    %68 = vector.shape_cast %67 : vector<128x16xbf16> to vector<1x128x16xbf16>
    %69 = tpu.concatenate %66, %68 in 0 : vector<1x128x16xbf16>, vector<1x128x16xbf16> -> vector<2x128x16xbf16>
    %c0_26 = arith.constant 0 : index
    %c0_27 = arith.constant 0 : index
    %c0_28 = arith.constant 0 : index
    %70 = vector.load %arg9[%c0_26, %c0_27, %c0_28] : memref<1x128x128xi8, #tpu.memory_space<vmem>>, vector<1x128x128xi8>
    %71 = vector.shape_cast %70 : vector<1x128x128xi8> to vector<128x128xi8>
    %72 = arith.sitofp %71 : vector<128x128xi8> to vector<128x128xf32>
    %cst_29 = arith.constant 1.000000e+00 : f32
    %73 = vector.broadcast %cst_29 : f32 to vector<128x128xf32>
    %74 = arith.subf %72, %73 : vector<128x128xf32>
    %cst_30 = arith.constant 1.000000e+30 : f32
    %75 = vector.broadcast %cst_30 : f32 to vector<128x128xf32>
    %76 = arith.mulf %74, %75 : vector<128x128xf32>
    "tpu.trace_start"() <{level = 10 : i32, message = "hqd,hkd->hqk"}> : () -> ()
    %cst_31 = arith.constant dense<0.000000e+00> : vector<2x128x128xf32>
    %77 = tpu.matmul %59, %64, %cst_31 {dimension_numbers = #tpu.dot_dimension_numbers<[2], [2], [1], [1], [0, 0, 0, 1, 1, 1], [0], [0]>} : vector<2x128x16xbf16>, vector<2x128x16xbf16>, vector<2x128x128xf32> -> vector<2x128x128xf32>
    "tpu.trace_stop"() : () -> ()
    %78 = vector.shape_cast %76 : vector<128x128xf32> to vector<1x128x128xf32>
    %79 = vector.broadcast %78 : vector<1x128x128xf32> to vector<2x128x128xf32>
    %80 = arith.addf %77, %79 : vector<2x128x128xf32>
    %cst_32 = arith.constant dense<0xFF800000> : vector<2x128xf32>
    %81 = vector.multi_reduction <maximumf>, %80, %cst_32 [2] : vector<2x128x128xf32> to vector<2x128xf32>
    %82 = vector.shape_cast %81 : vector<2x128xf32> to vector<2x128x1xf32>
    %83 = vector.broadcast %82 : vector<2x128x1xf32> to vector<2x128x128xf32>
    %84 = arith.subf %80, %83 : vector<2x128x128xf32>
    %85 = math.exp %84 : vector<2x128x128xf32>
    %cst_33 = arith.constant dense<0.000000e+00> : vector<2x128xf32>
    %86 = vector.multi_reduction <add>, %85, %cst_33 [2] : vector<2x128x128xf32> to vector<2x128xf32>
    %87 = vector.shape_cast %86 : vector<2x128xf32> to vector<2x128x1xf32>
    %88 = tpu.reciprocal %87 {approx = true} : vector<2x128x1xf32> -> vector<2x128x1xf32>
    %89 = vector.broadcast %88 : vector<2x128x1xf32> to vector<2x128x128xf32>
    %90 = arith.mulf %85, %89 : vector<2x128x128xf32>
    %91 = arith.truncf %90 : vector<2x128x128xf32> to vector<2x128x128xbf16>
    "tpu.trace_start"() <{level = 10 : i32, message = "hqk,hkd->hqd"}> : () -> ()
    %cst_34 = arith.constant dense<0.000000e+00> : vector<2x128x16xf32>
    %92 = tpu.matmul %91, %69, %cst_34 {dimension_numbers = #tpu.dot_dimension_numbers<[2], [1], [1], [2], [0, 0, 0, 1, 1, 2], [0], [0]>} : vector<2x128x128xbf16>, vector<2x128x16xbf16>, vector<2x128x16xf32> -> vector<2x128x16xf32>
    "tpu.trace_stop"() : () -> ()
    %93 = vector.extract_strided_slice %92 {offsets = [0, 0, 0], sizes = [1, 128, 16], strides = [1, 1, 1]} : vector<2x128x16xf32> to vector<1x128x16xf32>
    %94 = vector.shape_cast %93 : vector<1x128x16xf32> to vector<128x16xf32>
    %95 = vector.extract_strided_slice %92 {offsets = [1, 0, 0], sizes = [1, 128, 16], strides = [1, 1, 1]} : vector<2x128x16xf32> to vector<1x128x16xf32>
    %96 = vector.shape_cast %95 : vector<1x128x16xf32> to vector<128x16xf32>
    %97 = tpu.concatenate %94, %96 in 1 : vector<128x16xf32>, vector<128x16xf32> -> vector<128x32xf32>
    %98 = arith.truncf %97 : vector<128x32xf32> to vector<128x32xbf16>
    %c0_35 = arith.constant 0 : index
    %c0_36 = arith.constant 0 : index
    %99 = vector.load %arg10[%c0_35, %c0_36] : memref<32x32xbf16, #tpu.memory_space<vmem>>, vector<32x32xbf16>
    %cst_37 = arith.constant dense<0.000000e+00> : vector<128x32xf32>
    %100 = tpu.matmul %98, %99, %cst_37 {dimension_numbers = #tpu.dot_dimension_numbers<[1], [0], [0], [1], [0, 0, 1, 1], [], []>} : vector<128x32xbf16>, vector<32x32xbf16>, vector<128x32xf32> -> vector<128x32xf32>
    %c0_38 = arith.constant 0 : index
    %c0_39 = arith.constant 0 : index
    %101 = vector.load %arg11[%c0_38, %c0_39] : memref<1x32xf32, #tpu.memory_space<vmem>>, vector<1x32xf32>
    %102 = vector.broadcast %101 : vector<1x32xf32> to vector<128x32xf32>
    %103 = arith.addf %100, %102 : vector<128x32xf32>
    %104 = arith.addf %103, %1 : vector<128x32xf32>
    %c0_40 = arith.constant 0 : index
    %c0_41 = arith.constant 0 : index
    %c0_42 = arith.constant 0 : index
    %105 = vector.load %arg12[%c0_40, %c0_41, %c0_42] : memref<1x128x32xf32, #tpu.memory_space<vmem>>, vector<1x128x32xf32>
    %106 = vector.shape_cast %105 : vector<1x128x32xf32> to vector<128x32xf32>
    %107 = vector.shape_cast %104 : vector<128x32xf32> to vector<1x128x32xf32>
    tpu.vector_store %arg12[%c0_40, %c0_41, %c0_42], %107 {strides = array<i32>} : memref<1x128x32xf32, #tpu.memory_space<vmem>>, vector<1x128x32xf32>,
    return
  }
  func.func @transform_0(%arg0: i32) -> (i32, i32, i32) {
    %c0_i32 = arith.constant 0 : i32
    %c0_i32_0 = arith.constant 0 : i32
    %c0_i32_1 = arith.constant 0 : i32
    return %arg0, %c0_i32, %c0_i32_0 : i32, i32, i32
  }
  func.func @transform_1(%arg0: i32) -> (i32, i32) {
    %c0_i32 = arith.constant 0 : i32
    %c0_i32_0 = arith.constant 0 : i32
    %c0_i32_1 = arith.constant 0 : i32
    return %c0_i32, %c0_i32_0 : i32, i32
  }
  func.func @transform_2(%arg0: i32) -> (i32, i32) {
    %c0_i32 = arith.constant 0 : i32
    %c0_i32_0 = arith.constant 0 : i32
    %c0_i32_1 = arith.constant 0 : i32
    return %c0_i32, %c0_i32_0 : i32, i32
  }
  func.func @transform_3(%arg0: i32) -> (i32, i32) {
    %c0_i32 = arith.constant 0 : i32
    %c0_i32_0 = arith.constant 0 : i32
    %c0_i32_1 = arith.constant 0 : i32
    return %c0_i32, %c0_i32_0 : i32, i32
  }
  func.func @transform_4(%arg0: i32) -> (i32, i32) {
    %c0_i32 = arith.constant 0 : i32
    %c0_i32_0 = arith.constant 0 : i32
    %c0_i32_1 = arith.constant 0 : i32
    return %c0_i32, %c0_i32_0 : i32, i32
  }
  func.func @transform_5(%arg0: i32) -> (i32, i32) {
    %c0_i32 = arith.constant 0 : i32
    %c0_i32_0 = arith.constant 0 : i32
    %c0_i32_1 = arith.constant 0 : i32
    return %c0_i32, %c0_i32_0 : i32, i32
  }
  func.func @transform_6(%arg0: i32) -> (i32, i32, i32) {
    %c0_i32 = arith.constant 0 : i32
    %c0_i32_0 = arith.constant 0 : i32
    %c0_i32_1 = arith.constant 0 : i32
    return %arg0, %c0_i32, %c0_i32_0 : i32, i32, i32
  }
  func.func @transform_7(%arg0: i32) -> (i32, i32, i32) {
    %c0_i32 = arith.constant 0 : i32
    %c0_i32_0 = arith.constant 0 : i32
    %c0_i32_1 = arith.constant 0 : i32
    return %arg0, %c0_i32, %c0_i32_0 : i32, i32, i32
  }
  func.func @transform_8(%arg0: i32) -> (i32, i32, i32) {
    %c0_i32 = arith.constant 0 : i32
    %c0_i32_0 = arith.constant 0 : i32
    %c0_i32_1 = arith.constant 0 : i32
    return %arg0, %c0_i32, %c0_i32_0 : i32, i32, i32
  }
  func.func @transform_9(%arg0: i32) -> (i32, i32) {
    %c0_i32 = arith.constant 0 : i32
    %c0_i32_0 = arith.constant 0 : i32
    %c0_i32_1 = arith.constant 0 : i32
    return %c0_i32, %c0_i32_0 : i32, i32
  }
  func.func @transform_10(%arg0: i32) -> (i32, i32) {
    %c0_i32 = arith.constant 0 : i32
    %c0_i32_0 = arith.constant 0 : i32
    %c0_i32_1 = arith.constant 0 : i32
    return %c0_i32, %c0_i32_0 : i32, i32
  }
  func.func @transform_11(%arg0: i32) -> (i32, i32, i32) {
    %c0_i32 = arith.constant 0 : i32
    %c0_i32_0 = arith.constant 0 : i32
    %c0_i32_1 = arith.constant 0 : i32
    return %arg0, %c0_i32, %c0_i32_0 : i32, i32, i32
  }
}

</mosaic_0001>

<llo_original>
// kernel: transformer_forward.9
$region0: #{transformer_forward.9}
  #allocation0 [shape = 'u32[]', space=smem, size = 0x4, offset = 0x4, fixed_abs, tag = 'smem constant byte address 0x4 - core index']
  #allocation1 [shape = 'u32[72,128]{1,0:T(1,128)}', space=vmem, size = 0x9000, scoped, tag = 'internal scratch']
  %s0 = inlined_call_operand.vmem [shape: f32[256,32], index: 0, kind: input, shape index: {}]
  %s1 = inlined_call_operand.vmem [shape: f32[1,32], index: 1, kind: input, shape index: {}]
  %s2 = inlined_call_operand.vmem [shape: f32[1,32], index: 2, kind: input, shape index: {}]
  %s3 = inlined_call_operand.vmem [shape: bf16[32,384], index: 3, kind: input, shape index: {}]
  %s4 = inlined_call_operand.vmem [shape: f32[1,384], index: 4, kind: input, shape index: {}]
  %s5 = inlined_call_operand.vmem [shape: f32[256,384], index: 5, kind: output, shape index: {}]
  %s6 = sld [smem:[#allocation0]]
  $region53: #{transformer_forward.9} parent=0
    _
  %s8 = ssub.s32 1, %s6
  %s9 = scalar_select 0, %s8, %s6
  loop: start=0, step=1, limit=4
  $region2: #{transformer_forward.9} parent=0 // loop_pre_header
    _
  $region3: #{transformer_forward.9} parent=0 // loop_header
    %s11 = sphi 0, %s15
    %p12 = scmp.ge.s32.totalorder %s11, 4
    %s21 = sphi 0, %s23
    %s24 = sphi 0, %s21
    %s25 = sphi 0, %s24
    %s41 = sphi 0, %s25
    %s45 = sphi 0, %s45
    %s47 = sphi 0, %s45
    %s48 = sphi 0, %s47
    %s62 = sphi 0, %s48
    %s66 = sphi 0, %s66
    %s68 = sphi 0, %s66
    %s69 = sphi 0, %s68
    %s83 = sphi 0, %s69
    %s87 = sphi 0, %s87
    %s89 = sphi 0, %s87
    %s90 = sphi 0, %s89
    %s104 = sphi 0, %s90
    %s108 = sphi 0, %s108
    %s110 = sphi 0, %s108
    %s111 = sphi 0, %s110
    %s125 = sphi 0, %s111
    %s131 = sphi 0, %s133
    %s134 = sphi 0, %s131
    %s135 = sphi 0, %s134
    %s151 = sphi 0, %s135
  $region4: #{transformer_forward.9} parent=0 // loop_header_branch
    %14 = sbr.rel (%p12) target = $region8
  $region5: #{transformer_forward.9} parent=0 // loop_body
    %s16 = ssub.s32 %s11, 1
    %s17 = ssub.s32 %s11, 2
    %s18 = sadd.s32 %s11, 1
    %s19 = ssub.s32 %s11, %s18
    %p20 = scmp.eq.s32.totalorder %s19, 0
    %s22 = sadd.s32 %s21, 1
    %s23 = scalar_select %p20, %s21, %s22
    %p26 = pneg %p20
    %p27 = scmp.eq.s32.totalorder %s11, 1
    %p28 = por %p26, %p27
    %p29 = scmp.ne.s32.totalorder %s21, %s24
    %p30 = scmp.eq.s32.totalorder %s11, 0
    %p31 = por %p29, %p30
    %p32 = scmp.ne.s32.totalorder %s21, %s24
    %p33 = scmp.eq.s32.totalorder %s16, 1
    %p34 = por %p32, %p33
    %p35 = scmp.ne.s32.totalorder %s24, %s25
    %p36 = scmp.eq.s32.totalorder %s16, 0
    %p37 = por %p35, %p36
    %p38 = scmp.ne.s32.totalorder %s24, %s25
    %p39 = scmp.eq.s32.totalorder %s17, 1
    %p40 = por %p38, %p39
    %p42 = scmp.ne.s32.totalorder %s25, %s41
    %p43 = scmp.eq.s32.totalorder %s17, 0
    %p44 = por %p42, %p43
    %s46 = sadd.s32 %s45, 1
    %p49 = scmp.eq.s32.totalorder %s11, 1
    %p50 = scmp.ne.s32.totalorder %s45, %s47
    %p51 = scmp.eq.s32.totalorder %s11, 0
    %p52 = por %p50, %p51
    %p53 = scmp.ne.s32.totalorder %s45, %s47
    %p54 = scmp.eq.s32.totalorder %s16, 1
    %p55 = por %p53, %p54
    %p56 = scmp.ne.s32.totalorder %s47, %s48
    %p57 = scmp.eq.s32.totalorder %s16, 0
    %p58 = por %p56, %p57
    %p59 = scmp.ne.s32.totalorder %s47, %s48
    %p60 = scmp.eq.s32.totalorder %s17, 1
    %p61 = por %p59, %p60
    %p63 = scmp.ne.s32.totalorder %s48, %s62
    %p64 = scmp.eq.s32.totalorder %s17, 0
    %p65 = por %p63, %p64
    %s67 = sadd.s32 %s66, 1
    %p70 = scmp.eq.s32.totalorder %s11, 1
    %p71 = scmp.ne.s32.totalorder %s66, %s68
    %p72 = scmp.eq.s32.totalorder %s11, 0
    %p73 = por %p71, %p72
    %p74 = scmp.ne.s32.totalorder %s66, %s68
    %p75 = scmp.eq.s32.totalorder %s16, 1
    %p76 = por %p74, %p75
    %p77 = scmp.ne.s32.totalorder %s68, %s69
    %p78 = scmp.eq.s32.totalorder %s16, 0
    %p79 = por %p77, %p78
    %p80 = scmp.ne.s32.totalorder %s68, %s69
    %p81 = scmp.eq.s32.totalorder %s17, 1
    %p82 = por %p80, %p81
    %p84 = scmp.ne.s32.totalorder %s69, %s83
    %p85 = scmp.eq.s32.totalorder %s17, 0
    %p86 = por %p84, %p85
    %s88 = sadd.s32 %s87, 1
    %p91 = scmp.eq.s32.totalorder %s11, 1
    %p92 = scmp.ne.s32.totalorder %s87, %s89
    %p93 = scmp.eq.s32.totalorder %s11, 0
    %p94 = por %p92, %p93
    %p95 = scmp.ne.s32.totalorder %s87, %s89
    %p96 = scmp.eq.s32.totalorder %s16, 1
    %p97 = por %p95, %p96
    %p98 = scmp.ne.s32.totalorder %s89, %s90
    %p99 = scmp.eq.s32.totalorder %s16, 0
    %p100 = por %p98, %p99
    %p101 = scmp.ne.s32.totalorder %s89, %s90
    %p102 = scmp.eq.s32.totalorder %s17, 1
    %p103 = por %p101, %p102
    %p105 = scmp.ne.s32.totalorder %s90, %s104
    %p106 = scmp.eq.s32.totalorder %s17, 0
    %p107 = por %p105, %p106
    %s109 = sadd.s32 %s108, 1
    %p112 = scmp.eq.s32.totalorder %s11, 1
    %p113 = scmp.ne.s32.totalorder %s108, %s110
    %p114 = scmp.eq.s32.totalorder %s11, 0
    %p115 = por %p113, %p114
    %p116 = scmp.ne.s32.totalorder %s108, %s110
    %p117 = scmp.eq.s32.totalorder %s16, 1
    %p118 = por %p116, %p117
    %p119 = scmp.ne.s32.totalorder %s110, %s111
    %p120 = scmp.eq.s32.totalorder %s16, 0
    %p121 = por %p119, %p120
    %p122 = scmp.ne.s32.totalorder %s110, %s111
    %p123 = scmp.eq.s32.totalorder %s17, 1
    %p124 = por %p122, %p123
    %p126 = scmp.ne.s32.totalorder %s111, %s125
    %p127 = scmp.eq.s32.totalorder %s17, 0
    %p128 = por %p126, %p127
    %s129 = ssub.s32 %s11, %s18
    %p130 = scmp.eq.s32.totalorder %s129, 0
    %s132 = sadd.s32 %s131, 1
    %s133 = scalar_select %p130, %s131, %s132
    %p136 = pneg %p130
    %p137 = scmp.eq.s32.totalorder %s11, 1
    %p138 = por %p136, %p137
    %p139 = scmp.ne.s32.totalorder %s131, %s134
    %p140 = scmp.eq.s32.totalorder %s11, 0
    %p141 = por %p139, %p140
    %p142 = scmp.ne.s32.totalorder %s131, %s134
    %p143 = scmp.eq.s32.totalorder %s16, 1
    %p144 = por %p142, %p143
    %p145 = scmp.ne.s32.totalorder %s134, %s135
    %p146 = scmp.eq.s32.totalorder %s16, 0
    %p147 = por %p145, %p146
    %p148 = scmp.ne.s32.totalorder %s134, %s135
    %p149 = scmp.eq.s32.totalorder %s17, 1
    %p150 = por %p148, %p149
    %p152 = scmp.ne.s32.totalorder %s135, %s151
    %p153 = scmp.eq.s32.totalorder %s17, 0
    %p154 = por %p152, %p153
    %p155 = scmp.le.s32.totalorder 1, %s11
    %p156 = scmp.lt.s32.totalorder %s11, 3
    %p157 = pnand %p155, %p156
    %p158 = pneg %p157
    // Predicated region
    $region9: #{transformer_forward.9} parent=5 // pred_check
      _
    $region10: #{transformer_forward.9} parent=5 // pred_check_branch
      %160 = sbr.rel (%p157) target = $region12
    $region11: #{transformer_forward.9} parent=5 // pred_region
      %s161 = ssub.s32 %s11, 1
      // Predicated region
      $region13: #{transformer_forward.9} parent=11 // pred_check
        %p162 = pneg %p58
      $region14: #{transformer_forward.9} parent=11 // pred_check_branch
        %164 = sbr.rel (%p162) target = $region16
      $region15: #{transformer_forward.9} parent=11 // pred_region
        _
      $region16: #{transformer_forward.9} parent=11 // pred_fallthru
        _
      // Predicated region
      $region17: #{transformer_forward.9} parent=11 // pred_check
        %p165 = pneg %p79
      $region18: #{transformer_forward.9} parent=11 // pred_check_branch
        %167 = sbr.rel (%p165) target = $region20
      $region19: #{transformer_forward.9} parent=11 // pred_region
        _
      $region20: #{transformer_forward.9} parent=11 // pred_fallthru
        _
      // Predicated region
      $region21: #{transformer_forward.9} parent=11 // pred_check
        %p168 = pneg %p100
      $region22: #{transformer_forward.9} parent=11 // pred_check_branch
        %170 = sbr.rel (%p168) target = $region24
      $region23: #{transformer_forward.9} parent=11 // pred_region
        _
      $region24: #{transformer_forward.9} parent=11 // pred_fallthru
        _
      // Predicated region
      $region25: #{transformer_forward.9} parent=11 // pred_check
        %p171 = pneg %p121
      $region26: #{transformer_forward.9} parent=11 // pred_check_branch
        %173 = sbr.rel (%p171) target = $region28
      $region27: #{transformer_forward.9} parent=11 // pred_region
        _
      $region28: #{transformer_forward.9} parent=11 // pred_fallthru
        _
    $region12: #{transformer_forward.9} parent=5 // pred_fallthru
      _
    %p174 = scmp.lt.s32.totalorder %s11, 2
    // Predicated region
    $region29: #{transformer_forward.9} parent=5 // pred_check
      %p175 = pneg %p174
    $region30: #{transformer_forward.9} parent=5 // pred_check_branch
      %177 = sbr.rel (%p175) target = $region32
    $region31: #{transformer_forward.9} parent=5 // pred_region
      // Predicated region
      $region33: #{transformer_forward.9} parent=31 // pred_check
        %p178 = pneg %p31
      $region34: #{transformer_forward.9} parent=31 // pred_check_branch
        %180 = sbr.rel (%p178) target = $region36
      $region35: #{transformer_forward.9} parent=31 // pred_region
        %s181 = smul.u32 16, %s11
        %p182 = scmp.lt.s32.totalorder %s181, 31
        %s183 = scalar_select %p182, %s181, 31
        %s184 = smul.addr %s183, 8
        %s185 = scalar_lea.vmem %s0, %s184
        %s186 = smul.u32 16, %s11
      $region36: #{transformer_forward.9} parent=31 // pred_fallthru
        _
    $region32: #{transformer_forward.9} parent=5 // pred_fallthru
      _
    %p187 = scmp.le.s32.totalorder 1, %s11
    %p188 = scmp.lt.s32.totalorder %s11, 3
    %p189 = pnand %p187, %p188
    %p190 = pneg %p189
    // Predicated region
    $region37: #{transformer_forward.9} parent=5 // pred_check
      _
    $region38: #{transformer_forward.9} parent=5 // pred_check_branch
      %192 = sbr.rel (%p189) target = $region40
    $region39: #{transformer_forward.9} parent=5 // pred_region
      %s193 = ssub.s32 %s11, 1
      %s194 = smul.u32 16, %s16
      %p195 = scmp.lt.s32.totalorder %s194, 31
      %s196 = scalar_select %p195, %s194, 31
      %s197 = smul.addr %s196, 8
      %s198 = scalar_lea.vmem %s0, %s197
      %p199 = pneg %p37
      %p200 = pneg %p34
      %p201 = pneg %p58
      %p202 = pneg %p55
      %p203 = pneg %p79
      %p204 = pneg %p76
      %p205 = pneg %p100
      %p206 = pneg %p97
      %p207 = pneg %p121
      %p208 = pneg %p118
      %p209 = pneg %p147
      %p210 = pneg %p144
      %s211 = smul.u32 16, %s16
      %p212 = scmp.lt.s32.totalorder %s211, 31
      %s213 = scalar_select %p212, %s211, 31
      %s214 = smul.addr %s213, 3
      %s215 = smul.addr %s214, 8
      %s216 = scalar_lea.vmem %s5, %s215
      %s217 = smul.u32 16, %s16
      %p218 = scmp.lt.s32.totalorder %s217, 31
      %s219 = scalar_select %p218, %s217, 31
      %s220 = smul.addr %s219, 8
      %s221 = scalar_lea.vmem %s0, %s220
      %s222 = smul.u32 16, %s16
      %s223 = smul.u32 16, %s16
      %p224 = scmp.lt.s32.totalorder %s223, 31
      %s225 = scalar_select %p224, %s223, 31
      %s226 = smul.addr %s225, 3
      %s227 = smul.addr %s226, 8
      %s228 = scalar_lea.vmem %s5, %s227
      %s229 = smul.u32 16, %s16
      %v231 = vld [vmem:[%s221] sm:$0xff]
      %v232 = vld [vmem:[%s221 + $0x8] sm:$0xff]
      %v233 = vld [vmem:[%s221 + $0x10] sm:$0xff]
      %v234 = vld [vmem:[%s221 + $0x18] sm:$0xff]
      %v235 = vld [vmem:[%s221 + $0x20] sm:$0xff]
      %v236 = vld [vmem:[%s221 + $0x28] sm:$0xff]
      %v237 = vld [vmem:[%s221 + $0x30] sm:$0xff]
      %v238 = vld [vmem:[%s221 + $0x38] sm:$0xff]
      %v239 = vld [vmem:[%s221 + $0x40] sm:$0xff]
      %v240 = vld [vmem:[%s221 + $0x48] sm:$0xff]
      %v241 = vld [vmem:[%s221 + $0x50] sm:$0xff]
      %v242 = vld [vmem:[%s221 + $0x58] sm:$0xff]
      %v243 = vld [vmem:[%s221 + $0x60] sm:$0xff]
      %v244 = vld [vmem:[%s221 + $0x68] sm:$0xff]
      %v245 = vld [vmem:[%s221 + $0x70] sm:$0xff]
      %v246 = vld [vmem:[%s221 + $0x78] sm:$0xff]
      %v247 = vld [vmem:[%s1] sm:$0x1]
      %v248 = vld [vmem:[%s2] sm:$0x1]
      %vm249 = vcmask 261120
      %v250 = vsel %vm249, %v231, 0.0
      %251 = vadd.xlane.f32.xlu0 %v250
      %v252 = vpop.xlane.xlu0 %251
      %v253 = vsel %vm249, %v232, 0.0
      %254 = vadd.xlane.f32.xlu0 %v253
      %v255 = vpop.xlane.xlu0 %254
      %v256 = vsel %vm249, %v233, 0.0
      %257 = vadd.xlane.f32.xlu0 %v256
      %v258 = vpop.xlane.xlu0 %257
      %v259 = vsel %vm249, %v234, 0.0
      %260 = vadd.xlane.f32.xlu0 %v259
      %v261 = vpop.xlane.xlu0 %260
      %v262 = vsel %vm249, %v235, 0.0
      %263 = vadd.xlane.f32.xlu0 %v262
      %v264 = vpop.xlane.xlu0 %263
      %v265 = vsel %vm249, %v236, 0.0
      %266 = vadd.xlane.f32.xlu0 %v265
      %v267 = vpop.xlane.xlu0 %266
      %v268 = vsel %vm249, %v237, 0.0
      %269 = vadd.xlane.f32.xlu0 %v268
      %v270 = vpop.xlane.xlu0 %269
      %v271 = vsel %vm249, %v238, 0.0
      %272 = vadd.xlane.f32.xlu0 %v271
      %v273 = vpop.xlane.xlu0 %272
      %v274 = vsel %vm249, %v239, 0.0
      %275 = vadd.xlane.f32.xlu0 %v274
      %v276 = vpop.xlane.xlu0 %275
      %v277 = vsel %vm249, %v240, 0.0
      %278 = vadd.xlane.f32.xlu0 %v277
      %v279 = vpop.xlane.xlu0 %278
      %v280 = vsel %vm249, %v241, 0.0
      %281 = vadd.xlane.f32.xlu0 %v280
      %v282 = vpop.xlane.xlu0 %281
      %v283 = vsel %vm249, %v242, 0.0
      %284 = vadd.xlane.f32.xlu0 %v283
      %v285 = vpop.xlane.xlu0 %284
      %v286 = vsel %vm249, %v243, 0.0
      %287 = vadd.xlane.f32.xlu0 %v286
      %v288 = vpop.xlane.xlu0 %287
      %v289 = vsel %vm249, %v244, 0.0
      %290 = vadd.xlane.f32.xlu0 %v289
      %v291 = vpop.xlane.xlu0 %290
      %v292 = vsel %vm249, %v245, 0.0
      %293 = vadd.xlane.f32.xlu0 %v292
      %v294 = vpop.xlane.xlu0 %293
      %v295 = vsel %vm249, %v246, 0.0
      %296 = vadd.xlane.f32.xlu0 %v295
      %v297 = vpop.xlane.xlu0 %296
      %v298 = vrcp.pop 32.0
      %v299 = vmul.f32 32.0, %v298
      %v300 = vsub.f32 1.0, %v299
      %v301 = vmul.f32 %v298, %v300
      %v302 = vadd.f32 %v298, %v301
      %vm303 = vweird.f32 %v298
      %v304 = vsel %vm303, %v298, %v302
      %v305 = vmul.f32 %v252, %v304
      %v306 = vmul.f32 %v255, %v304
      %v307 = vmul.f32 %v258, %v304
      %v308 = vmul.f32 %v261, %v304
      %v309 = vmul.f32 %v264, %v304
      %v310 = vmul.f32 %v267, %v304
      %v311 = vmul.f32 %v270, %v304
      %v312 = vmul.f32 %v273, %v304
      %v313 = vmul.f32 %v276, %v304
      %v314 = vmul.f32 %v279, %v304
      %v315 = vmul.f32 %v282, %v304
      %v316 = vmul.f32 %v285, %v304
      %v317 = vmul.f32 %v288, %v304
      %v318 = vmul.f32 %v291, %v304
      %v319 = vmul.f32 %v294, %v304
      %v320 = vmul.f32 %v297, %v304
      %v321 = vsub.f32 %v231, %v305
      %v322 = vsub.f32 %v232, %v306
      %v323 = vsub.f32 %v233, %v307
      %v324 = vsub.f32 %v234, %v308
      %v325 = vsub.f32 %v235, %v309
      %v326 = vsub.f32 %v236, %v310
      %v327 = vsub.f32 %v237, %v311
      %v328 = vsub.f32 %v238, %v312
      %v329 = vsub.f32 %v239, %v313
      %v330 = vsub.f32 %v240, %v314
      %v331 = vsub.f32 %v241, %v315
      %v332 = vsub.f32 %v242, %v316
      %v333 = vsub.f32 %v243, %v317
      %v334 = vsub.f32 %v244, %v318
      %v335 = vsub.f32 %v245, %v319
      %v336 = vsub.f32 %v246, %v320
      %v337 = vmul.f32 %v321, %v321
      %v338 = vmul.f32 %v322, %v322
      %v339 = vmul.f32 %v323, %v323
      %v340 = vmul.f32 %v324, %v324
      %v341 = vmul.f32 %v325, %v325
      %v342 = vmul.f32 %v326, %v326
      %v343 = vmul.f32 %v327, %v327
      %v344 = vmul.f32 %v328, %v328
      %v345 = vmul.f32 %v329, %v329
      %v346 = vmul.f32 %v330, %v330
      %v347 = vmul.f32 %v331, %v331
      %v348 = vmul.f32 %v332, %v332
      %v349 = vmul.f32 %v333, %v333
      %v350 = vmul.f32 %v334, %v334
      %v351 = vmul.f32 %v335, %v335
      %v352 = vmul.f32 %v336, %v336
      %v353 = vsel %vm249, %v337, 0.0
      %354 = vadd.xlane.f32.xlu0 %v353
      %v355 = vpop.xlane.xlu0 %354
      %v356 = vsel %vm249, %v338, 0.0
      %357 = vadd.xlane.f32.xlu0 %v356
      %v358 = vpop.xlane.xlu0 %357
      %v359 = vsel %vm249, %v339, 0.0
      %360 = vadd.xlane.f32.xlu0 %v359
      %v361 = vpop.xlane.xlu0 %360
      %v362 = vsel %vm249, %v340, 0.0
      %363 = vadd.xlane.f32.xlu0 %v362
      %v364 = vpop.xlane.xlu0 %363
      %v365 = vsel %vm249, %v341, 0.0
      %366 = vadd.xlane.f32.xlu0 %v365
      %v367 = vpop.xlane.xlu0 %366
      %v368 = vsel %vm249, %v342, 0.0
      %369 = vadd.xlane.f32.xlu0 %v368
      %v370 = vpop.xlane.xlu0 %369
      %v371 = vsel %vm249, %v343, 0.0
      %372 = vadd.xlane.f32.xlu0 %v371
      %v373 = vpop.xlane.xlu0 %372
      %v374 = vsel %vm249, %v344, 0.0
      %375 = vadd.xlane.f32.xlu0 %v374
      %v376 = vpop.xlane.xlu0 %375
      %v377 = vsel %vm249, %v345, 0.0
      %378 = vadd.xlane.f32.xlu0 %v377
      %v379 = vpop.xlane.xlu0 %378
      %v380 = vsel %vm249, %v346, 0.0
      %381 = vadd.xlane.f32.xlu0 %v380
      %v382 = vpop.xlane.xlu0 %381
      %v383 = vsel %vm249, %v347, 0.0
      %384 = vadd.xlane.f32.xlu0 %v383
      %v385 = vpop.xlane.xlu0 %384
      %v386 = vsel %vm249, %v348, 0.0
      %387 = vadd.xlane.f32.xlu0 %v386
      %v388 = vpop.xlane.xlu0 %387
      %v389 = vsel %vm249, %v349, 0.0
      %390 = vadd.xlane.f32.xlu0 %v389
      %v391 = vpop.xlane.xlu0 %390
      %v392 = vsel %vm249, %v350, 0.0
      %393 = vadd.xlane.f32.xlu0 %v392
      %v394 = vpop.xlane.xlu0 %393
      %v395 = vsel %vm249, %v351, 0.0
      %396 = vadd.xlane.f32.xlu0 %v395
      %v397 = vpop.xlane.xlu0 %396
      %v398 = vsel %vm249, %v352, 0.0
      %399 = vadd.xlane.f32.xlu0 %v398
      %v400 = vpop.xlane.xlu0 %399
      %v401 = vmul.f32 %v355, %v304
      %v402 = vmul.f32 %v358, %v304
      %v403 = vmul.f32 %v361, %v304
      %v404 = vmul.f32 %v364, %v304
      %v405 = vmul.f32 %v367, %v304
      %v406 = vmul.f32 %v370, %v304
      %v407 = vmul.f32 %v373, %v304
      %v408 = vmul.f32 %v376, %v304
      %v409 = vmul.f32 %v379, %v304
      %v410 = vmul.f32 %v382, %v304
      %v411 = vmul.f32 %v385, %v304
      %v412 = vmul.f32 %v388, %v304
      %v413 = vmul.f32 %v391, %v304
      %v414 = vmul.f32 %v394, %v304
      %v415 = vmul.f32 %v397, %v304
      %v416 = vmul.f32 %v400, %v304
      %v417 = vadd.f32 %v401, 1e-05
      %v418 = vadd.f32 %v402, 1e-05
      %v419 = vadd.f32 %v403, 1e-05
      %v420 = vadd.f32 %v404, 1e-05
      %v421 = vadd.f32 %v405, 1e-05
      %v422 = vadd.f32 %v406, 1e-05
      %v423 = vadd.f32 %v407, 1e-05
      %v424 = vadd.f32 %v408, 1e-05
      %v425 = vadd.f32 %v409, 1e-05
      %v426 = vadd.f32 %v410, 1e-05
      %v427 = vadd.f32 %v411, 1e-05
      %v428 = vadd.f32 %v412, 1e-05
      %v429 = vadd.f32 %v413, 1e-05
      %v430 = vadd.f32 %v414, 1e-05
      %v431 = vadd.f32 %v415, 1e-05
      %v432 = vadd.f32 %v416, 1e-05
      %v433 = vrsqrt.pop %v417
      %v434 = vmul.f32 %v433, %v417
      %v435 = vmul.f32 %v434, %v433
      %v436 = vmul.f32 0.5, %v435
      %v437 = vsub.f32 1.5, %v436
      %v438 = vmul.f32 %v433, %v437
      %vm439 = vweird.f32 %v417
      %vm440 = vweird.f32 %v433
      %vm441 = vmor %vm439, %vm440
      %v442 = vsel %vm441, %v433, %v438
      %v443 = vrsqrt.pop %v418
      %v444 = vmul.f32 %v443, %v418
      %v445 = vmul.f32 %v444, %v443
      %v446 = vmul.f32 0.5, %v445
      %v447 = vsub.f32 1.5, %v446
      %v448 = vmul.f32 %v443, %v447
      %vm449 = vweird.f32 %v418
      %vm450 = vweird.f32 %v443
      %vm451 = vmor %vm449, %vm450
      %v452 = vsel %vm451, %v443, %v448
      %v453 = vrsqrt.pop %v419
      %v454 = vmul.f32 %v453, %v419
      %v455 = vmul.f32 %v454, %v453
      %v456 = vmul.f32 0.5, %v455
      %v457 = vsub.f32 1.5, %v456
      %v458 = vmul.f32 %v453, %v457
      %vm459 = vweird.f32 %v419
      %vm460 = vweird.f32 %v453
      %vm461 = vmor %vm459, %vm460
      %v462 = vsel %vm461, %v453, %v458
      %v463 = vrsqrt.pop %v420
      %v464 = vmul.f32 %v463, %v420
      %v465 = vmul.f32 %v464, %v463
      %v466 = vmul.f32 0.5, %v465
      %v467 = vsub.f32 1.5, %v466
      %v468 = vmul.f32 %v463, %v467
      %vm469 = vweird.f32 %v420
      %vm470 = vweird.f32 %v463
      %vm471 = vmor %vm469, %vm470
      %v472 = vsel %vm471, %v463, %v468
      %v473 = vrsqrt.pop %v421
      %v474 = vmul.f32 %v473, %v421
      %v475 = vmul.f32 %v474, %v473
      %v476 = vmul.f32 0.5, %v475
      %v477 = vsub.f32 1.5, %v476
      %v478 = vmul.f32 %v473, %v477
      %vm479 = vweird.f32 %v421
      %vm480 = vweird.f32 %v473
      %vm481 = vmor %vm479, %vm480
      %v482 = vsel %vm481, %v473, %v478
      %v483 = vrsqrt.pop %v422
      %v484 = vmul.f32 %v483, %v422
      %v485 = vmul.f32 %v484, %v483
      %v486 = vmul.f32 0.5, %v485
      %v487 = vsub.f32 1.5, %v486
      %v488 = vmul.f32 %v483, %v487
      %vm489 = vweird.f32 %v422
      %vm490 = vweird.f32 %v483
      %vm491 = vmor %vm489, %vm490
      %v492 = vsel %vm491, %v483, %v488
      %v493 = vrsqrt.pop %v423
      %v494 = vmul.f32 %v493, %v423
      %v495 = vmul.f32 %v494, %v493
      %v496 = vmul.f32 0.5, %v495
      %v497 = vsub.f32 1.5, %v496
      %v498 = vmul.f32 %v493, %v497
      %vm499 = vweird.f32 %v423
      %vm500 = vweird.f32 %v493
      %vm501 = vmor %vm499, %vm500
      %v502 = vsel %vm501, %v493, %v498
      %v503 = vrsqrt.pop %v424
      %v504 = vmul.f32 %v503, %v424
      %v505 = vmul.f32 %v504, %v503
      %v506 = vmul.f32 0.5, %v505
      %v507 = vsub.f32 1.5, %v506
      %v508 = vmul.f32 %v503, %v507
      %vm509 = vweird.f32 %v424
      %vm510 = vweird.f32 %v503
      %vm511 = vmor %vm509, %vm510
      %v512 = vsel %vm511, %v503, %v508
      %v513 = vrsqrt.pop %v425
      %v514 = vmul.f32 %v513, %v425
      %v515 = vmul.f32 %v514, %v513
      %v516 = vmul.f32 0.5, %v515
      %v517 = vsub.f32 1.5, %v516
      %v518 = vmul.f32 %v513, %v517
      %vm519 = vweird.f32 %v425
      %vm520 = vweird.f32 %v513
      %vm521 = vmor %vm519, %vm520
      %v522 = vsel %vm521, %v513, %v518
      %v523 = vrsqrt.pop %v426
      %v524 = vmul.f32 %v523, %v426
      %v525 = vmul.f32 %v524, %v523
      %v526 = vmul.f32 0.5, %v525
      %v527 = vsub.f32 1.5, %v526
      %v528 = vmul.f32 %v523, %v527
      %vm529 = vweird.f32 %v426
      %vm530 = vweird.f32 %v523
      %vm531 = vmor %vm529, %vm530
      %v532 = vsel %vm531, %v523, %v528
      %v533 = vrsqrt.pop %v427
      %v534 = vmul.f32 %v533, %v427
      %v535 = vmul.f32 %v534, %v533
      %v536 = vmul.f32 0.5, %v535
      %v537 = vsub.f32 1.5, %v536
      %v538 = vmul.f32 %v533, %v537
      %vm539 = vweird.f32 %v427
      %vm540 = vweird.f32 %v533
      %vm541 = vmor %vm539, %vm540
      %v542 = vsel %vm541, %v533, %v538
      %v543 = vrsqrt.pop %v428
      %v544 = vmul.f32 %v543, %v428
      %v545 = vmul.f32 %v544, %v543
      %v546 = vmul.f32 0.5, %v545
      %v547 = vsub.f32 1.5, %v546
      %v548 = vmul.f32 %v543, %v547
      %vm549 = vweird.f32 %v428
      %vm550 = vweird.f32 %v543
      %vm551 = vmor %vm549, %vm550
      %v552 = vsel %vm551, %v543, %v548
      %v553 = vrsqrt.pop %v429
      %v554 = vmul.f32 %v553, %v429
      %v555 = vmul.f32 %v554, %v553
      %v556 = vmul.f32 0.5, %v555
      %v557 = vsub.f32 1.5, %v556
      %v558 = vmul.f32 %v553, %v557
      %vm559 = vweird.f32 %v429
      %vm560 = vweird.f32 %v553
      %vm561 = vmor %vm559, %vm560
      %v562 = vsel %vm561, %v553, %v558
      %v563 = vrsqrt.pop %v430
      %v564 = vmul.f32 %v563, %v430
      %v565 = vmul.f32 %v564, %v563
      %v566 = vmul.f32 0.5, %v565
      %v567 = vsub.f32 1.5, %v566
      %v568 = vmul.f32 %v563, %v567
      %vm569 = vweird.f32 %v430
      %vm570 = vweird.f32 %v563
      %vm571 = vmor %vm569, %vm570
      %v572 = vsel %vm571, %v563, %v568
      %v573 = vrsqrt.pop %v431
      %v574 = vmul.f32 %v573, %v431
      %v575 = vmul.f32 %v574, %v573
      %v576 = vmul.f32 0.5, %v575
      %v577 = vsub.f32 1.5, %v576
      %v578 = vmul.f32 %v573, %v577
      %vm579 = vweird.f32 %v431
      %vm580 = vweird.f32 %v573
      %vm581 = vmor %vm579, %vm580
      %v582 = vsel %vm581, %v573, %v578
      %v583 = vrsqrt.pop %v432
      %v584 = vmul.f32 %v583, %v432
      %v585 = vmul.f32 %v584, %v583
      %v586 = vmul.f32 0.5, %v585
      %v587 = vsub.f32 1.5, %v586
      %v588 = vmul.f32 %v583, %v587
      %vm589 = vweird.f32 %v432
      %vm590 = vweird.f32 %v583
      %vm591 = vmor %vm589, %vm590
      %v592 = vsel %vm591, %v583, %v588
      %v593 = vmul.f32 %v321, %v442
      %v594 = vmul.f32 %v322, %v452
      %v595 = vmul.f32 %v323, %v462
      %v596 = vmul.f32 %v324, %v472
      %v597 = vmul.f32 %v325, %v482
      %v598 = vmul.f32 %v326, %v492
      %v599 = vmul.f32 %v327, %v502
      %v600 = vmul.f32 %v328, %v512
      %v601 = vmul.f32 %v329, %v522
      %v602 = vmul.f32 %v330, %v532
      %v603 = vmul.f32 %v331, %v542
      %v604 = vmul.f32 %v332, %v552
      %v605 = vmul.f32 %v333, %v562
      %v606 = vmul.f32 %v334, %v572
      %v607 = vmul.f32 %v335, %v582
      %v608 = vmul.f32 %v336, %v592
      %v610 = vperm.slane %v247, 0
      %v612 = vmul.f32 %v593, %v610
      %v613 = vmul.f32 %v594, %v610
      %v614 = vmul.f32 %v595, %v610
      %v615 = vmul.f32 %v596, %v610
      %v616 = vmul.f32 %v597, %v610
      %v617 = vmul.f32 %v598, %v610
      %v618 = vmul.f32 %v599, %v610
      %v619 = vmul.f32 %v600, %v610
      %v620 = vmul.f32 %v601, %v610
      %v621 = vmul.f32 %v602, %v610
      %v622 = vmul.f32 %v603, %v610
      %v623 = vmul.f32 %v604, %v610
      %v624 = vmul.f32 %v605, %v610
      %v625 = vmul.f32 %v606, %v610
      %v626 = vmul.f32 %v607, %v610
      %v627 = vmul.f32 %v608, %v610
      %v629 = vperm.slane %v248, 0
      %v631 = vadd.f32 %v612, %v629
      %v632 = vadd.f32 %v613, %v629
      %v633 = vadd.f32 %v614, %v629
      %v634 = vadd.f32 %v615, %v629
      %v635 = vadd.f32 %v616, %v629
      %v636 = vadd.f32 %v617, %v629
      %v637 = vadd.f32 %v618, %v629
      %v638 = vadd.f32 %v619, %v629
      %v639 = vadd.f32 %v620, %v629
      %v640 = vadd.f32 %v621, %v629
      %v641 = vadd.f32 %v622, %v629
      %v642 = vadd.f32 %v623, %v629
      %v643 = vadd.f32 %v624, %v629
      %v644 = vadd.f32 %v625, %v629
      %v645 = vadd.f32 %v626, %v629
      %v646 = vadd.f32 %v627, %v629
      %v647 = vpack.c.bf16 %v632, %v631
      %v648 = vpack.c.bf16 %v634, %v633
      %v649 = vpack.c.bf16 %v636, %v635
      %v650 = vpack.c.bf16 %v638, %v637
      %v651 = vpack.c.bf16 %v640, %v639
      %v652 = vpack.c.bf16 %v642, %v641
      %v653 = vpack.c.bf16 %v644, %v643
      %v654 = vpack.c.bf16 %v646, %v645
      %v655 = vld [vmem:[%s3] sm:$0xff]
      %v656 = vld [vmem:[%s3 + $0x8] sm:$0xf]
      %v657 = vld [vmem:[%s3 + $0xc] sm:$0xff]
      %v658 = vld [vmem:[%s3 + $0x14] sm:$0xf]
      %v659 = vld [vmem:[%s3 + $0x18] sm:$0xff]
      %v660 = vld [vmem:[%s3 + $0x20] sm:$0xf]
      %v661 = vld [vmem:[%s3 + $0x24] sm:$0xff]
      %v662 = vld [vmem:[%s3 + $0x2c] sm:$0xf]
      %v663 = vld [vmem:[%s4] sm:$0x7]
      %v665 = vperm.slane %v663, 0
      %v666 = vperm.slane %v663, 1
      %v667 = vperm.slane %v663, 2
      %v679 = vunpack.c.l.b16 %v655
      %v680 = vunpack.c.h.b16 %v655
      %v681 = vunpack.c.l.b16 %v656
      %v682 = vunpack.c.l.b16 %v657
      %v683 = vunpack.c.h.b16 %v657
      %v684 = vunpack.c.l.b16 %v658
      %v685 = vunpack.c.l.b16 %v659
      %v686 = vunpack.c.h.b16 %v659
      %v687 = vunpack.c.l.b16 %v660
      %v688 = vunpack.c.l.b16 %v661
      %v689 = vunpack.c.h.b16 %v661
      %v690 = vunpack.c.l.b16 %v662
      %v691 = vpack.c.b16 %v682, %v679
      %v692 = vpack.c.b16 %v683, %v680
      %v693 = vpack.c.b16 %v684, %v681
      %v694 = vpack.c.b16 %v688, %v685
      %v695 = vpack.c.b16 %v689, %v686
      %v696 = vpack.c.b16 %v690, %v687
      %v704 = vsel %vm249, %v647, 0
      %v707 = vsel %vm249, %v648, 0
      %v710 = vsel %vm249, %v649, 0
      %v713 = vsel %vm249, %v650, 0
      %v716 = vsel %vm249, %v651, 0
      %v719 = vsel %vm249, %v652, 0
      %v722 = vsel %vm249, %v653, 0
      %v725 = vsel %vm249, %v654, 0
      %727 = vmatpush.bf16.msra.mxu0 0
      %728 = vmatpush.bf16.msra.mxu0 0
      %729 = vmatpush.bf16.msra.mxu0 0
      %730 = vmatpush.bf16.msra.mxu0 0
      %731 = vmatpush.bf16.msra.mxu0 0
      %732 = vmatpush.bf16.msra.mxu0 0
      %733 = vmatpush.bf16.msra.mxu0 %v694
      %734 = vmatpush.bf16.msra.mxu0 %v691
      %735 = vmatmul.bf16.gmra.mxu0 %v704
      %v736 = vpop.f32.mrf.mxu0
      %v737 = vadd.f32 %v665, %v736
      %v738 = vpop.f32.mrf.mxu0
      %v739 = vadd.f32 %v665, %v738
      %740 = vmatmul.bf16.gmra.mxu0 %v707
      %v741 = vpop.f32.mrf.mxu0
      %v742 = vadd.f32 %v665, %v741
      %v743 = vpop.f32.mrf.mxu0
      %v744 = vadd.f32 %v665, %v743
      %745 = vmatmul.bf16.gmra.mxu0 %v710
      %v746 = vpop.f32.mrf.mxu0
      %v747 = vadd.f32 %v665, %v746
      %v748 = vpop.f32.mrf.mxu0
      %v749 = vadd.f32 %v665, %v748
      %750 = vmatmul.bf16.gmra.mxu0 %v713
      %v751 = vpop.f32.mrf.mxu0
      %v752 = vadd.f32 %v665, %v751
      %v753 = vpop.f32.mrf.mxu0
      %v754 = vadd.f32 %v665, %v753
      %755 = vmatmul.bf16.gmra.mxu0 %v716
      %v756 = vpop.f32.mrf.mxu0
      %v757 = vadd.f32 %v665, %v756
      %v758 = vpop.f32.mrf.mxu0
      %v759 = vadd.f32 %v665, %v758
      %760 = vmatmul.bf16.gmra.mxu0 %v719
      %v761 = vpop.f32.mrf.mxu0
      %v762 = vadd.f32 %v665, %v761
      %v763 = vpop.f32.mrf.mxu0
      %v764 = vadd.f32 %v665, %v763
      %765 = vmatmul.bf16.gmra.mxu0 %v722
      %v766 = vpop.f32.mrf.mxu0
      %v767 = vadd.f32 %v665, %v766
      %v768 = vpop.f32.mrf.mxu0
      %v769 = vadd.f32 %v665, %v768
      %770 = vmatmul.bf16.gmra.mxu0 %v725
      %v771 = vpop.f32.mrf.mxu0
      %v772 = vadd.f32 %v665, %v771
      %v773 = vpop.f32.mrf.mxu0
      %v774 = vadd.f32 %v665, %v773
      %775 = vdwg.mxu0
      %776 = vmatpush.bf16.msra.mxu0 0
      %777 = vmatpush.bf16.msra.mxu0 0
      %778 = vmatpush.bf16.msra.mxu0 0
      %779 = vmatpush.bf16.msra.mxu0 0
      %780 = vmatpush.bf16.msra.mxu0 0
      %781 = vmatpush.bf16.msra.mxu0 0
      %782 = vmatpush.bf16.msra.mxu0 %v695
      %783 = vmatpush.bf16.msra.mxu0 %v692
      %784 = vmatmul.bf16.gmra.mxu0 %v704
      %v785 = vpop.f32.mrf.mxu0
      %v786 = vadd.f32 %v666, %v785
      %v787 = vpop.f32.mrf.mxu0
      %v788 = vadd.f32 %v666, %v787
      %789 = vmatmul.bf16.gmra.mxu0 %v707
      %v790 = vpop.f32.mrf.mxu0
      %v791 = vadd.f32 %v666, %v790
      %v792 = vpop.f32.mrf.mxu0
      %v793 = vadd.f32 %v666, %v792
      %794 = vmatmul.bf16.gmra.mxu0 %v710
      %v795 = vpop.f32.mrf.mxu0
      %v796 = vadd.f32 %v666, %v795
      %v797 = vpop.f32.mrf.mxu0
      %v798 = vadd.f32 %v666, %v797
      %799 = vmatmul.bf16.gmra.mxu0 %v713
      %v800 = vpop.f32.mrf.mxu0
      %v801 = vadd.f32 %v666, %v800
      %v802 = vpop.f32.mrf.mxu0
      %v803 = vadd.f32 %v666, %v802
      %804 = vmatmul.bf16.gmra.mxu0 %v716
      %v805 = vpop.f32.mrf.mxu0
      %v806 = vadd.f32 %v666, %v805
      %v807 = vpop.f32.mrf.mxu0
      %v808 = vadd.f32 %v666, %v807
      %809 = vmatmul.bf16.gmra.mxu0 %v719
      %v810 = vpop.f32.mrf.mxu0
      %v811 = vadd.f32 %v666, %v810
      %v812 = vpop.f32.mrf.mxu0
      %v813 = vadd.f32 %v666, %v812
      %814 = vmatmul.bf16.gmra.mxu0 %v722
      %v815 = vpop.f32.mrf.mxu0
      %v816 = vadd.f32 %v666, %v815
      %v817 = vpop.f32.mrf.mxu0
      %v818 = vadd.f32 %v666, %v817
      %819 = vmatmul.bf16.gmra.mxu0 %v725
      %v820 = vpop.f32.mrf.mxu0
      %v821 = vadd.f32 %v666, %v820
      %v822 = vpop.f32.mrf.mxu0
      %v823 = vadd.f32 %v666, %v822
      %824 = vdwg.mxu0
      %825 = vmatpush.bf16.msra.mxu0 0
      %826 = vmatpush.bf16.msra.mxu0 0
      %827 = vmatpush.bf16.msra.mxu0 0
      %828 = vmatpush.bf16.msra.mxu0 0
      %829 = vmatpush.bf16.msra.mxu0 0
      %830 = vmatpush.bf16.msra.mxu0 0
      %831 = vmatpush.bf16.msra.mxu0 %v696
      %832 = vmatpush.bf16.msra.mxu0 %v693
      %833 = vmatmul.bf16.gmra.mxu0 %v704
      %v834 = vpop.f32.mrf.mxu0
      %v835 = vadd.f32 %v667, %v834
      %v836 = vpop.f32.mrf.mxu0
      %v837 = vadd.f32 %v667, %v836
      %838 = vmatmul.bf16.gmra.mxu0 %v707
      %v839 = vpop.f32.mrf.mxu0
      %v840 = vadd.f32 %v667, %v839
      %v841 = vpop.f32.mrf.mxu0
      %v842 = vadd.f32 %v667, %v841
      %843 = vmatmul.bf16.gmra.mxu0 %v710
      %v844 = vpop.f32.mrf.mxu0
      %v845 = vadd.f32 %v667, %v844
      %v846 = vpop.f32.mrf.mxu0
      %v847 = vadd.f32 %v667, %v846
      %848 = vmatmul.bf16.gmra.mxu0 %v713
      %v849 = vpop.f32.mrf.mxu0
      %v850 = vadd.f32 %v667, %v849
      %v851 = vpop.f32.mrf.mxu0
      %v852 = vadd.f32 %v667, %v851
      %853 = vmatmul.bf16.gmra.mxu0 %v716
      %v854 = vpop.f32.mrf.mxu0
      %v855 = vadd.f32 %v667, %v854
      %v856 = vpop.f32.mrf.mxu0
      %v857 = vadd.f32 %v667, %v856
      %858 = vmatmul.bf16.gmra.mxu0 %v719
      %v859 = vpop.f32.mrf.mxu0
      %v860 = vadd.f32 %v667, %v859
      %v861 = vpop.f32.mrf.mxu0
      %v862 = vadd.f32 %v667, %v861
      %863 = vmatmul.bf16.gmra.mxu0 %v722
      %v864 = vpop.f32.mrf.mxu0
      %v865 = vadd.f32 %v667, %v864
      %v866 = vpop.f32.mrf.mxu0
      %v867 = vadd.f32 %v667, %v866
      %868 = vmatmul.bf16.gmra.mxu0 %v725
      %v869 = vpop.f32.mrf.mxu0
      %v870 = vadd.f32 %v667, %v869
      %v871 = vpop.f32.mrf.mxu0
      %v872 = vadd.f32 %v667, %v871
      %873 = vdwg.mxu0
      %874 = vst [vmem:[%s228] sm:$0xff] %v737
      %875 = vst [vmem:[%s228 + $0x8] sm:$0xff] %v786
      %876 = vst [vmem:[%s228 + $0x10] sm:$0xff] %v835
      %877 = vst [vmem:[%s228 + $0x18] sm:$0xff] %v739
      %878 = vst [vmem:[%s228 + $0x20] sm:$0xff] %v788
      %879 = vst [vmem:[%s228 + $0x28] sm:$0xff] %v837
      %880 = vst [vmem:[%s228 + $0x30] sm:$0xff] %v742
      %881 = vst [vmem:[%s228 + $0x38] sm:$0xff] %v791
      %882 = vst [vmem:[%s228 + $0x40] sm:$0xff] %v840
      %883 = vst [vmem:[%s228 + $0x48] sm:$0xff] %v744
      %884 = vst [vmem:[%s228 + $0x50] sm:$0xff] %v793
      %885 = vst [vmem:[%s228 + $0x58] sm:$0xff] %v842
      %886 = vst [vmem:[%s228 + $0x60] sm:$0xff] %v747
      %887 = vst [vmem:[%s228 + $0x68] sm:$0xff] %v796
      %888 = vst [vmem:[%s228 + $0x70] sm:$0xff] %v845
      %889 = vst [vmem:[%s228 + $0x78] sm:$0xff] %v749
      %890 = vst [vmem:[%s228 + $0x80] sm:$0xff] %v798
      %891 = vst [vmem:[%s228 + $0x88] sm:$0xff] %v847
      %892 = vst [vmem:[%s228 + $0x90] sm:$0xff] %v752
      %893 = vst [vmem:[%s228 + $0x98] sm:$0xff] %v801
      %894 = vst [vmem:[%s228 + $0xa0] sm:$0xff] %v850
      %895 = vst [vmem:[%s228 + $0xa8] sm:$0xff] %v754
      %896 = vst [vmem:[%s228 + $0xb0] sm:$0xff] %v803
      %897 = vst [vmem:[%s228 + $0xb8] sm:$0xff] %v852
      %898 = vst [vmem:[%s228 + $0xc0] sm:$0xff] %v757
      %899 = vst [vmem:[%s228 + $0xc8] sm:$0xff] %v806
      %900 = vst [vmem:[%s228 + $0xd0] sm:$0xff] %v855
      %901 = vst [vmem:[%s228 + $0xd8] sm:$0xff] %v759
      %902 = vst [vmem:[%s228 + $0xe0] sm:$0xff] %v808
      %903 = vst [vmem:[%s228 + $0xe8] sm:$0xff] %v857
      %904 = vst [vmem:[%s228 + $0xf0] sm:$0xff] %v762
      %905 = vst [vmem:[%s228 + $0xf8] sm:$0xff] %v811
      %906 = vst [vmem:[%s228 + $0x100] sm:$0xff] %v860
      %907 = vst [vmem:[%s228 + $0x108] sm:$0xff] %v764
      %908 = vst [vmem:[%s228 + $0x110] sm:$0xff] %v813
      %909 = vst [vmem:[%s228 + $0x118] sm:$0xff] %v862
      %910 = vst [vmem:[%s228 + $0x120] sm:$0xff] %v767
      %911 = vst [vmem:[%s228 + $0x128] sm:$0xff] %v816
      %912 = vst [vmem:[%s228 + $0x130] sm:$0xff] %v865
      %913 = vst [vmem:[%s228 + $0x138] sm:$0xff] %v769
      %914 = vst [vmem:[%s228 + $0x140] sm:$0xff] %v818
      %915 = vst [vmem:[%s228 + $0x148] sm:$0xff] %v867
      %916 = vst [vmem:[%s228 + $0x150] sm:$0xff] %v772
      %917 = vst [vmem:[%s228 + $0x158] sm:$0xff] %v821
      %918 = vst [vmem:[%s228 + $0x160] sm:$0xff] %v870
      %919 = vst [vmem:[%s228 + $0x168] sm:$0xff] %v774
      %920 = vst [vmem:[%s228 + $0x170] sm:$0xff] %v823
      %921 = vst [vmem:[%s228 + $0x178] sm:$0xff] %v872
      %s922 = smul.u32 16, %s16
      %p923 = scmp.lt.s32.totalorder %s922, 31
      %s924 = scalar_select %p923, %s922, 31
      %s925 = smul.addr %s924, 3
      %s926 = smul.addr %s925, 8
      %s927 = scalar_lea.vmem %s5, %s926
      // Predicated region
      $region41: #{transformer_forward.9} parent=39 // pred_check
        %p928 = pneg %p144
      $region42: #{transformer_forward.9} parent=39 // pred_check_branch
        %930 = sbr.rel (%p928) target = $region44
      $region43: #{transformer_forward.9} parent=39 // pred_region
        %s931 = smul.u32 16, %s16
      $region44: #{transformer_forward.9} parent=39 // pred_fallthru
        _
    $region40: #{transformer_forward.9} parent=5 // pred_fallthru
      _
    %p932 = scmp.le.s32.totalorder 2, %s11
    // Predicated region
    $region45: #{transformer_forward.9} parent=5 // pred_check
      %p933 = pneg %p932
    $region46: #{transformer_forward.9} parent=5 // pred_check_branch
      %935 = sbr.rel (%p933) target = $region48
    $region47: #{transformer_forward.9} parent=5 // pred_region
      %s936 = ssub.s32 %s11, 2
      // Predicated region
      $region49: #{transformer_forward.9} parent=47 // pred_check
        %p937 = pneg %p150
      $region50: #{transformer_forward.9} parent=47 // pred_check_branch
        %939 = sbr.rel (%p937) target = $region52
      $region51: #{transformer_forward.9} parent=47 // pred_region
        %s940 = smul.u32 16, %s17
        %p941 = scmp.lt.s32.totalorder %s940, 31
        %s942 = scalar_select %p941, %s940, 31
        %s943 = smul.addr %s942, 3
        %s944 = smul.addr %s943, 8
        %s945 = scalar_lea.vmem %s5, %s944
      $region52: #{transformer_forward.9} parent=47 // pred_fallthru
        _
    $region48: #{transformer_forward.9} parent=5 // pred_fallthru
      _
  $region6: #{transformer_forward.9} parent=0 // loop_footer
    %s15 = sadd.s32 1, %s11
  $region7: #{transformer_forward.9} parent=0 // loop_footer_branch
    %10 = sbr.rel target = $region3
  $region8: #{transformer_forward.9} parent=0 // loop_exit
    _

// kernel: transformer_forward.6
$region0: #{transformer_forward.6}
  #allocation0 [shape = 'u32[]', space=smem, size = 0x4, offset = 0x4, fixed_abs, tag = 'smem constant byte address 0x4 - core index']
  #allocation1 [shape = 'u32[72,128]{1,0:T(1,128)}', space=vmem, size = 0x9000, scoped, tag = 'internal scratch']
  %s0 = inlined_call_operand.vmem [shape: f32[256,32], index: 0, kind: input, shape index: {}]
  %s1 = inlined_call_operand.vmem [shape: f32[1,32], index: 1, kind: input, shape index: {}]
  %s2 = inlined_call_operand.vmem [shape: f32[1,32], index: 2, kind: input, shape index: {}]
  %s3 = inlined_call_operand.vmem [shape: bf16[32,64], index: 3, kind: input, shape index: {}]
  %s4 = inlined_call_operand.vmem [shape: f32[1,64], index: 4, kind: input, shape index: {}]
  %s5 = inlined_call_operand.vmem [shape: bf16[32,64], index: 5, kind: input, shape index: {}]
  %s6 = inlined_call_operand.vmem [shape: f32[1,64], index: 6, kind: input, shape index: {}]
  %s7 = inlined_call_operand.vmem [shape: bf16[64,32], index: 7, kind: input, shape index: {}]
  %s8 = inlined_call_operand.vmem [shape: f32[1,32], index: 8, kind: input, shape index: {}]
  %s9 = inlined_call_operand.vmem [shape: f32[256,32], index: 9, kind: output, shape index: {}]
  %s10 = sld [smem:[#allocation0]]
  $region69: #{transformer_forward.6} parent=0
    _
  %s12 = ssub.s32 1, %s10
  %s13 = scalar_select 0, %s12, %s10
  loop: start=0, step=1, limit=4
  $region2: #{transformer_forward.6} parent=0 // loop_pre_header
    _
  $region3: #{transformer_forward.6} parent=0 // loop_header
    %s15 = sphi 0, %s19
    %p16 = scmp.ge.s32.totalorder %s15, 4
    %s25 = sphi 0, %s27
    %s28 = sphi 0, %s25
    %s29 = sphi 0, %s28
    %s45 = sphi 0, %s29
    %s49 = sphi 0, %s49
    %s51 = sphi 0, %s49
    %s52 = sphi 0, %s51
    %s66 = sphi 0, %s52
    %s70 = sphi 0, %s70
    %s72 = sphi 0, %s70
    %s73 = sphi 0, %s72
    %s87 = sphi 0, %s73
    %s91 = sphi 0, %s91
    %s93 = sphi 0, %s91
    %s94 = sphi 0, %s93
    %s108 = sphi 0, %s94
    %s112 = sphi 0, %s112
    %s114 = sphi 0, %s112
    %s115 = sphi 0, %s114
    %s129 = sphi 0, %s115
    %s133 = sphi 0, %s133
    %s135 = sphi 0, %s133
    %s136 = sphi 0, %s135
    %s150 = sphi 0, %s136
    %s154 = sphi 0, %s154
    %s156 = sphi 0, %s154
    %s157 = sphi 0, %s156
    %s171 = sphi 0, %s157
    %s175 = sphi 0, %s175
    %s177 = sphi 0, %s175
    %s178 = sphi 0, %s177
    %s192 = sphi 0, %s178
    %s196 = sphi 0, %s196
    %s198 = sphi 0, %s196
    %s199 = sphi 0, %s198
    %s213 = sphi 0, %s199
    %s219 = sphi 0, %s221
    %s222 = sphi 0, %s219
    %s223 = sphi 0, %s222
    %s239 = sphi 0, %s223
  $region4: #{transformer_forward.6} parent=0 // loop_header_branch
    %18 = sbr.rel (%p16) target = $region8
  $region5: #{transformer_forward.6} parent=0 // loop_body
    %s20 = ssub.s32 %s15, 1
    %s21 = ssub.s32 %s15, 2
    %s22 = sadd.s32 %s15, 1
    %s23 = ssub.s32 %s15, %s22
    %p24 = scmp.eq.s32.totalorder %s23, 0
    %s26 = sadd.s32 %s25, 1
    %s27 = scalar_select %p24, %s25, %s26
    %p30 = pneg %p24
    %p31 = scmp.eq.s32.totalorder %s15, 1
    %p32 = por %p30, %p31
    %p33 = scmp.ne.s32.totalorder %s25, %s28
    %p34 = scmp.eq.s32.totalorder %s15, 0
    %p35 = por %p33, %p34
    %p36 = scmp.ne.s32.totalorder %s25, %s28
    %p37 = scmp.eq.s32.totalorder %s20, 1
    %p38 = por %p36, %p37
    %p39 = scmp.ne.s32.totalorder %s28, %s29
    %p40 = scmp.eq.s32.totalorder %s20, 0
    %p41 = por %p39, %p40
    %p42 = scmp.ne.s32.totalorder %s28, %s29
    %p43 = scmp.eq.s32.totalorder %s21, 1
    %p44 = por %p42, %p43
    %p46 = scmp.ne.s32.totalorder %s29, %s45
    %p47 = scmp.eq.s32.totalorder %s21, 0
    %p48 = por %p46, %p47
    %s50 = sadd.s32 %s49, 1
    %p53 = scmp.eq.s32.totalorder %s15, 1
    %p54 = scmp.ne.s32.totalorder %s49, %s51
    %p55 = scmp.eq.s32.totalorder %s15, 0
    %p56 = por %p54, %p55
    %p57 = scmp.ne.s32.totalorder %s49, %s51
    %p58 = scmp.eq.s32.totalorder %s20, 1
    %p59 = por %p57, %p58
    %p60 = scmp.ne.s32.totalorder %s51, %s52
    %p61 = scmp.eq.s32.totalorder %s20, 0
    %p62 = por %p60, %p61
    %p63 = scmp.ne.s32.totalorder %s51, %s52
    %p64 = scmp.eq.s32.totalorder %s21, 1
    %p65 = por %p63, %p64
    %p67 = scmp.ne.s32.totalorder %s52, %s66
    %p68 = scmp.eq.s32.totalorder %s21, 0
    %p69 = por %p67, %p68
    %s71 = sadd.s32 %s70, 1
    %p74 = scmp.eq.s32.totalorder %s15, 1
    %p75 = scmp.ne.s32.totalorder %s70, %s72
    %p76 = scmp.eq.s32.totalorder %s15, 0
    %p77 = por %p75, %p76
    %p78 = scmp.ne.s32.totalorder %s70, %s72
    %p79 = scmp.eq.s32.totalorder %s20, 1
    %p80 = por %p78, %p79
    %p81 = scmp.ne.s32.totalorder %s72, %s73
    %p82 = scmp.eq.s32.totalorder %s20, 0
    %p83 = por %p81, %p82
    %p84 = scmp.ne.s32.totalorder %s72, %s73
    %p85 = scmp.eq.s32.totalorder %s21, 1
    %p86 = por %p84, %p85
    %p88 = scmp.ne.s32.totalorder %s73, %s87
    %p89 = scmp.eq.s32.totalorder %s21, 0
    %p90 = por %p88, %p89
    %s92 = sadd.s32 %s91, 1
    %p95 = scmp.eq.s32.totalorder %s15, 1
    %p96 = scmp.ne.s32.totalorder %s91, %s93
    %p97 = scmp.eq.s32.totalorder %s15, 0
    %p98 = por %p96, %p97
    %p99 = scmp.ne.s32.totalorder %s91, %s93
    %p100 = scmp.eq.s32.totalorder %s20, 1
    %p101 = por %p99, %p100
    %p102 = scmp.ne.s32.totalorder %s93, %s94
    %p103 = scmp.eq.s32.totalorder %s20, 0
    %p104 = por %p102, %p103
    %p105 = scmp.ne.s32.totalorder %s93, %s94
    %p106 = scmp.eq.s32.totalorder %s21, 1
    %p107 = por %p105, %p106
    %p109 = scmp.ne.s32.totalorder %s94, %s108
    %p110 = scmp.eq.s32.totalorder %s21, 0
    %p111 = por %p109, %p110
    %s113 = sadd.s32 %s112, 1
    %p116 = scmp.eq.s32.totalorder %s15, 1
    %p117 = scmp.ne.s32.totalorder %s112, %s114
    %p118 = scmp.eq.s32.totalorder %s15, 0
    %p119 = por %p117, %p118
    %p120 = scmp.ne.s32.totalorder %s112, %s114
    %p121 = scmp.eq.s32.totalorder %s20, 1
    %p122 = por %p120, %p121
    %p123 = scmp.ne.s32.totalorder %s114, %s115
    %p124 = scmp.eq.s32.totalorder %s20, 0
    %p125 = por %p123, %p124
    %p126 = scmp.ne.s32.totalorder %s114, %s115
    %p127 = scmp.eq.s32.totalorder %s21, 1
    %p128 = por %p126, %p127
    %p130 = scmp.ne.s32.totalorder %s115, %s129
    %p131 = scmp.eq.s32.totalorder %s21, 0
    %p132 = por %p130, %p131
    %s134 = sadd.s32 %s133, 1
    %p137 = scmp.eq.s32.totalorder %s15, 1
    %p138 = scmp.ne.s32.totalorder %s133, %s135
    %p139 = scmp.eq.s32.totalorder %s15, 0
    %p140 = por %p138, %p139
    %p141 = scmp.ne.s32.totalorder %s133, %s135
    %p142 = scmp.eq.s32.totalorder %s20, 1
    %p143 = por %p141, %p142
    %p144 = scmp.ne.s32.totalorder %s135, %s136
    %p145 = scmp.eq.s32.totalorder %s20, 0
    %p146 = por %p144, %p145
    %p147 = scmp.ne.s32.totalorder %s135, %s136
    %p148 = scmp.eq.s32.totalorder %s21, 1
    %p149 = por %p147, %p148
    %p151 = scmp.ne.s32.totalorder %s136, %s150
    %p152 = scmp.eq.s32.totalorder %s21, 0
    %p153 = por %p151, %p152
    %s155 = sadd.s32 %s154, 1
    %p158 = scmp.eq.s32.totalorder %s15, 1
    %p159 = scmp.ne.s32.totalorder %s154, %s156
    %p160 = scmp.eq.s32.totalorder %s15, 0
    %p161 = por %p159, %p160
    %p162 = scmp.ne.s32.totalorder %s154, %s156
    %p163 = scmp.eq.s32.totalorder %s20, 1
    %p164 = por %p162, %p163
    %p165 = scmp.ne.s32.totalorder %s156, %s157
    %p166 = scmp.eq.s32.totalorder %s20, 0
    %p167 = por %p165, %p166
    %p168 = scmp.ne.s32.totalorder %s156, %s157
    %p169 = scmp.eq.s32.totalorder %s21, 1
    %p170 = por %p168, %p169
    %p172 = scmp.ne.s32.totalorder %s157, %s171
    %p173 = scmp.eq.s32.totalorder %s21, 0
    %p174 = por %p172, %p173
    %s176 = sadd.s32 %s175, 1
    %p179 = scmp.eq.s32.totalorder %s15, 1
    %p180 = scmp.ne.s32.totalorder %s175, %s177
    %p181 = scmp.eq.s32.totalorder %s15, 0
    %p182 = por %p180, %p181
    %p183 = scmp.ne.s32.totalorder %s175, %s177
    %p184 = scmp.eq.s32.totalorder %s20, 1
    %p185 = por %p183, %p184
    %p186 = scmp.ne.s32.totalorder %s177, %s178
    %p187 = scmp.eq.s32.totalorder %s20, 0
    %p188 = por %p186, %p187
    %p189 = scmp.ne.s32.totalorder %s177, %s178
    %p190 = scmp.eq.s32.totalorder %s21, 1
    %p191 = por %p189, %p190
    %p193 = scmp.ne.s32.totalorder %s178, %s192
    %p194 = scmp.eq.s32.totalorder %s21, 0
    %p195 = por %p193, %p194
    %s197 = sadd.s32 %s196, 1
    %p200 = scmp.eq.s32.totalorder %s15, 1
    %p201 = scmp.ne.s32.totalorder %s196, %s198
    %p202 = scmp.eq.s32.totalorder %s15, 0
    %p203 = por %p201, %p202
    %p204 = scmp.ne.s32.totalorder %s196, %s198
    %p205 = scmp.eq.s32.totalorder %s20, 1
    %p206 = por %p204, %p205
    %p207 = scmp.ne.s32.totalorder %s198, %s199
    %p208 = scmp.eq.s32.totalorder %s20, 0
    %p209 = por %p207, %p208
    %p210 = scmp.ne.s32.totalorder %s198, %s199
    %p211 = scmp.eq.s32.totalorder %s21, 1
    %p212 = por %p210, %p211
    %p214 = scmp.ne.s32.totalorder %s199, %s213
    %p215 = scmp.eq.s32.totalorder %s21, 0
    %p216 = por %p214, %p215
    %s217 = ssub.s32 %s15, %s22
    %p218 = scmp.eq.s32.totalorder %s217, 0
    %s220 = sadd.s32 %s219, 1
    %s221 = scalar_select %p218, %s219, %s220
    %p224 = pneg %p218
    %p225 = scmp.eq.s32.totalorder %s15, 1
    %p226 = por %p224, %p225
    %p227 = scmp.ne.s32.totalorder %s219, %s222
    %p228 = scmp.eq.s32.totalorder %s15, 0
    %p229 = por %p227, %p228
    %p230 = scmp.ne.s32.totalorder %s219, %s222
    %p231 = scmp.eq.s32.totalorder %s20, 1
    %p232 = por %p230, %p231
    %p233 = scmp.ne.s32.totalorder %s222, %s223
    %p234 = scmp.eq.s32.totalorder %s20, 0
    %p235 = por %p233, %p234
    %p236 = scmp.ne.s32.totalorder %s222, %s223
    %p237 = scmp.eq.s32.totalorder %s21, 1
    %p238 = por %p236, %p237
    %p240 = scmp.ne.s32.totalorder %s223, %s239
    %p241 = scmp.eq.s32.totalorder %s21, 0
    %p242 = por %p240, %p241
    %p243 = scmp.le.s32.totalorder 1, %s15
    %p244 = scmp.lt.s32.totalorder %s15, 3
    %p245 = pnand %p243, %p244
    %p246 = pneg %p245
    // Predicated region
    $region9: #{transformer_forward.6} parent=5 // pred_check
      _
    $region10: #{transformer_forward.6} parent=5 // pred_check_branch
      %248 = sbr.rel (%p245) target = $region12
    $region11: #{transformer_forward.6} parent=5 // pred_region
      %s249 = ssub.s32 %s15, 1
      // Predicated region
      $region13: #{transformer_forward.6} parent=11 // pred_check
        %p250 = pneg %p62
      $region14: #{transformer_forward.6} parent=11 // pred_check_branch
        %252 = sbr.rel (%p250) target = $region16
      $region15: #{transformer_forward.6} parent=11 // pred_region
        _
      $region16: #{transformer_forward.6} parent=11 // pred_fallthru
        _
      // Predicated region
      $region17: #{transformer_forward.6} parent=11 // pred_check
        %p253 = pneg %p83
      $region18: #{transformer_forward.6} parent=11 // pred_check_branch
        %255 = sbr.rel (%p253) target = $region20
      $region19: #{transformer_forward.6} parent=11 // pred_region
        _
      $region20: #{transformer_forward.6} parent=11 // pred_fallthru
        _
      // Predicated region
      $region21: #{transformer_forward.6} parent=11 // pred_check
        %p256 = pneg %p104
      $region22: #{transformer_forward.6} parent=11 // pred_check_branch
        %258 = sbr.rel (%p256) target = $region24
      $region23: #{transformer_forward.6} parent=11 // pred_region
        _
      $region24: #{transformer_forward.6} parent=11 // pred_fallthru
        _
      // Predicated region
      $region25: #{transformer_forward.6} parent=11 // pred_check
        %p259 = pneg %p125
      $region26: #{transformer_forward.6} parent=11 // pred_check_branch
        %261 = sbr.rel (%p259) target = $region28
      $region27: #{transformer_forward.6} parent=11 // pred_region
        _
      $region28: #{transformer_forward.6} parent=11 // pred_fallthru
        _
      // Predicated region
      $region29: #{transformer_forward.6} parent=11 // pred_check
        %p262 = pneg %p146
      $region30: #{transformer_forward.6} parent=11 // pred_check_branch
        %264 = sbr.rel (%p262) target = $region32
      $region31: #{transformer_forward.6} parent=11 // pred_region
        _
      $region32: #{transformer_forward.6} parent=11 // pred_fallthru
        _
      // Predicated region
      $region33: #{transformer_forward.6} parent=11 // pred_check
        %p265 = pneg %p167
      $region34: #{transformer_forward.6} parent=11 // pred_check_branch
        %267 = sbr.rel (%p265) target = $region36
      $region35: #{transformer_forward.6} parent=11 // pred_region
        _
      $region36: #{transformer_forward.6} parent=11 // pred_fallthru
        _
      // Predicated region
      $region37: #{transformer_forward.6} parent=11 // pred_check
        %p268 = pneg %p188
      $region38: #{transformer_forward.6} parent=11 // pred_check_branch
        %270 = sbr.rel (%p268) target = $region40
      $region39: #{transformer_forward.6} parent=11 // pred_region
        _
      $region40: #{transformer_forward.6} parent=11 // pred_fallthru
        _
      // Predicated region
      $region41: #{transformer_forward.6} parent=11 // pred_check
        %p271 = pneg %p209
      $region42: #{transformer_forward.6} parent=11 // pred_check_branch
        %273 = sbr.rel (%p271) target = $region44
      $region43: #{transformer_forward.6} parent=11 // pred_region
        _
      $region44: #{transformer_forward.6} parent=11 // pred_fallthru
        _
    $region12: #{transformer_forward.6} parent=5 // pred_fallthru
      _
    %p274 = scmp.lt.s32.totalorder %s15, 2
    // Predicated region
    $region45: #{transformer_forward.6} parent=5 // pred_check
      %p275 = pneg %p274
    $region46: #{transformer_forward.6} parent=5 // pred_check_branch
      %277 = sbr.rel (%p275) target = $region48
    $region47: #{transformer_forward.6} parent=5 // pred_region
      // Predicated region
      $region49: #{transformer_forward.6} parent=47 // pred_check
        %p278 = pneg %p35
      $region50: #{transformer_forward.6} parent=47 // pred_check_branch
        %280 = sbr.rel (%p278) target = $region52
      $region51: #{transformer_forward.6} parent=47 // pred_region
        %s281 = smul.u32 16, %s15
        %p282 = scmp.lt.s32.totalorder %s281, 31
        %s283 = scalar_select %p282, %s281, 31
        %s284 = smul.addr %s283, 8
        %s285 = scalar_lea.vmem %s0, %s284
        %s286 = smul.u32 16, %s15
      $region52: #{transformer_forward.6} parent=47 // pred_fallthru
        _
    $region48: #{transformer_forward.6} parent=5 // pred_fallthru
      _
    %p287 = scmp.le.s32.totalorder 1, %s15
    %p288 = scmp.lt.s32.totalorder %s15, 3
    %p289 = pnand %p287, %p288
    %p290 = pneg %p289
    // Predicated region
    $region53: #{transformer_forward.6} parent=5 // pred_check
      _
    $region54: #{transformer_forward.6} parent=5 // pred_check_branch
      %292 = sbr.rel (%p289) target = $region56
    $region55: #{transformer_forward.6} parent=5 // pred_region
      %s293 = ssub.s32 %s15, 1
      %s294 = smul.u32 16, %s20
      %p295 = scmp.lt.s32.totalorder %s294, 31
      %s296 = scalar_select %p295, %s294, 31
      %s297 = smul.addr %s296, 8
      %s298 = scalar_lea.vmem %s0, %s297
      %p299 = pneg %p41
      %p300 = pneg %p38
      %p301 = pneg %p62
      %p302 = pneg %p59
      %p303 = pneg %p83
      %p304 = pneg %p80
      %p305 = pneg %p104
      %p306 = pneg %p101
      %p307 = pneg %p125
      %p308 = pneg %p122
      %p309 = pneg %p146
      %p310 = pneg %p143
      %p311 = pneg %p167
      %p312 = pneg %p164
      %p313 = pneg %p188
      %p314 = pneg %p185
      %p315 = pneg %p209
      %p316 = pneg %p206
      %p317 = pneg %p235
      %p318 = pneg %p232
      %s319 = smul.u32 16, %s20
      %p320 = scmp.lt.s32.totalorder %s319, 31
      %s321 = scalar_select %p320, %s319, 31
      %s322 = smul.addr %s321, 8
      %s323 = scalar_lea.vmem %s9, %s322
      %s324 = smul.u32 16, %s20
      %p325 = scmp.lt.s32.totalorder %s324, 31
      %s326 = scalar_select %p325, %s324, 31
      %s327 = smul.addr %s326, 8
      %s328 = scalar_lea.vmem %s0, %s327
      %s329 = smul.u32 16, %s20
      %s330 = smul.u32 16, %s20
      %p331 = scmp.lt.s32.totalorder %s330, 31
      %s332 = scalar_select %p331, %s330, 31
      %s333 = smul.addr %s332, 8
      %s334 = scalar_lea.vmem %s9, %s333
      %s335 = smul.u32 16, %s20
      %v337 = vld [vmem:[%s328] sm:$0xff]
      %v338 = vld [vmem:[%s328 + $0x8] sm:$0xff]
      %v339 = vld [vmem:[%s328 + $0x10] sm:$0xff]
      %v340 = vld [vmem:[%s328 + $0x18] sm:$0xff]
      %v341 = vld [vmem:[%s328 + $0x20] sm:$0xff]
      %v342 = vld [vmem:[%s328 + $0x28] sm:$0xff]
      %v343 = vld [vmem:[%s328 + $0x30] sm:$0xff]
      %v344 = vld [vmem:[%s328 + $0x38] sm:$0xff]
      %v345 = vld [vmem:[%s328 + $0x40] sm:$0xff]
      %v346 = vld [vmem:[%s328 + $0x48] sm:$0xff]
      %v347 = vld [vmem:[%s328 + $0x50] sm:$0xff]
      %v348 = vld [vmem:[%s328 + $0x58] sm:$0xff]
      %v349 = vld [vmem:[%s328 + $0x60] sm:$0xff]
      %v350 = vld [vmem:[%s328 + $0x68] sm:$0xff]
      %v351 = vld [vmem:[%s328 + $0x70] sm:$0xff]
      %v352 = vld [vmem:[%s328 + $0x78] sm:$0xff]
      %v353 = vld [vmem:[%s1] sm:$0x1]
      %v354 = vld [vmem:[%s2] sm:$0x1]
      %vm355 = vcmask 261120
      %v356 = vsel %vm355, %v337, 0.0
      %357 = vadd.xlane.f32.xlu0 %v356
      %v358 = vpop.xlane.xlu0 %357
      %v359 = vsel %vm355, %v338, 0.0
      %360 = vadd.xlane.f32.xlu0 %v359
      %v361 = vpop.xlane.xlu0 %360
      %v362 = vsel %vm355, %v339, 0.0
      %363 = vadd.xlane.f32.xlu0 %v362
      %v364 = vpop.xlane.xlu0 %363
      %v365 = vsel %vm355, %v340, 0.0
      %366 = vadd.xlane.f32.xlu0 %v365
      %v367 = vpop.xlane.xlu0 %366
      %v368 = vsel %vm355, %v341, 0.0
      %369 = vadd.xlane.f32.xlu0 %v368
      %v370 = vpop.xlane.xlu0 %369
      %v371 = vsel %vm355, %v342, 0.0
      %372 = vadd.xlane.f32.xlu0 %v371
      %v373 = vpop.xlane.xlu0 %372
      %v374 = vsel %vm355, %v343, 0.0
      %375 = vadd.xlane.f32.xlu0 %v374
      %v376 = vpop.xlane.xlu0 %375
      %v377 = vsel %vm355, %v344, 0.0
      %378 = vadd.xlane.f32.xlu0 %v377
      %v379 = vpop.xlane.xlu0 %378
      %v380 = vsel %vm355, %v345, 0.0
      %381 = vadd.xlane.f32.xlu0 %v380
      %v382 = vpop.xlane.xlu0 %381
      %v383 = vsel %vm355, %v346, 0.0
      %384 = vadd.xlane.f32.xlu0 %v383
      %v385 = vpop.xlane.xlu0 %384
      %v386 = vsel %vm355, %v347, 0.0
      %387 = vadd.xlane.f32.xlu0 %v386
      %v388 = vpop.xlane.xlu0 %387
      %v389 = vsel %vm355, %v348, 0.0
      %390 = vadd.xlane.f32.xlu0 %v389
      %v391 = vpop.xlane.xlu0 %390
      %v392 = vsel %vm355, %v349, 0.0
      %393 = vadd.xlane.f32.xlu0 %v392
      %v394 = vpop.xlane.xlu0 %393
      %v395 = vsel %vm355, %v350, 0.0
      %396 = vadd.xlane.f32.xlu0 %v395
      %v397 = vpop.xlane.xlu0 %396
      %v398 = vsel %vm355, %v351, 0.0
      %399 = vadd.xlane.f32.xlu0 %v398
      %v400 = vpop.xlane.xlu0 %399
      %v401 = vsel %vm355, %v352, 0.0
      %402 = vadd.xlane.f32.xlu0 %v401
      %v403 = vpop.xlane.xlu0 %402
      %v404 = vrcp.pop 32.0
      %v405 = vmul.f32 32.0, %v404
      %v406 = vsub.f32 1.0, %v405
      %v407 = vmul.f32 %v404, %v406
      %v408 = vadd.f32 %v404, %v407
      %vm409 = vweird.f32 %v404
      %v410 = vsel %vm409, %v404, %v408
      %v411 = vmul.f32 %v358, %v410
      %v412 = vmul.f32 %v361, %v410
      %v413 = vmul.f32 %v364, %v410
      %v414 = vmul.f32 %v367, %v410
      %v415 = vmul.f32 %v370, %v410
      %v416 = vmul.f32 %v373, %v410
      %v417 = vmul.f32 %v376, %v410
      %v418 = vmul.f32 %v379, %v410
      %v419 = vmul.f32 %v382, %v410
      %v420 = vmul.f32 %v385, %v410
      %v421 = vmul.f32 %v388, %v410
      %v422 = vmul.f32 %v391, %v410
      %v423 = vmul.f32 %v394, %v410
      %v424 = vmul.f32 %v397, %v410
      %v425 = vmul.f32 %v400, %v410
      %v426 = vmul.f32 %v403, %v410
      %v427 = vsub.f32 %v337, %v411
      %v428 = vsub.f32 %v338, %v412
      %v429 = vsub.f32 %v339, %v413
      %v430 = vsub.f32 %v340, %v414
      %v431 = vsub.f32 %v341, %v415
      %v432 = vsub.f32 %v342, %v416
      %v433 = vsub.f32 %v343, %v417
      %v434 = vsub.f32 %v344, %v418
      %v435 = vsub.f32 %v345, %v419
      %v436 = vsub.f32 %v346, %v420
      %v437 = vsub.f32 %v347, %v421
      %v438 = vsub.f32 %v348, %v422
      %v439 = vsub.f32 %v349, %v423
      %v440 = vsub.f32 %v350, %v424
      %v441 = vsub.f32 %v351, %v425
      %v442 = vsub.f32 %v352, %v426
      %v443 = vmul.f32 %v427, %v427
      %v444 = vmul.f32 %v428, %v428
      %v445 = vmul.f32 %v429, %v429
      %v446 = vmul.f32 %v430, %v430
      %v447 = vmul.f32 %v431, %v431
      %v448 = vmul.f32 %v432, %v432
      %v449 = vmul.f32 %v433, %v433
      %v450 = vmul.f32 %v434, %v434
      %v451 = vmul.f32 %v435, %v435
      %v452 = vmul.f32 %v436, %v436
      %v453 = vmul.f32 %v437, %v437
      %v454 = vmul.f32 %v438, %v438
      %v455 = vmul.f32 %v439, %v439
      %v456 = vmul.f32 %v440, %v440
      %v457 = vmul.f32 %v441, %v441
      %v458 = vmul.f32 %v442, %v442
      %v459 = vsel %vm355, %v443, 0.0
      %460 = vadd.xlane.f32.xlu0 %v459
      %v461 = vpop.xlane.xlu0 %460
      %v462 = vsel %vm355, %v444, 0.0
      %463 = vadd.xlane.f32.xlu0 %v462
      %v464 = vpop.xlane.xlu0 %463
      %v465 = vsel %vm355, %v445, 0.0
      %466 = vadd.xlane.f32.xlu0 %v465
      %v467 = vpop.xlane.xlu0 %466
      %v468 = vsel %vm355, %v446, 0.0
      %469 = vadd.xlane.f32.xlu0 %v468
      %v470 = vpop.xlane.xlu0 %469
      %v471 = vsel %vm355, %v447, 0.0
      %472 = vadd.xlane.f32.xlu0 %v471
      %v473 = vpop.xlane.xlu0 %472
      %v474 = vsel %vm355, %v448, 0.0
      %475 = vadd.xlane.f32.xlu0 %v474
      %v476 = vpop.xlane.xlu0 %475
      %v477 = vsel %vm355, %v449, 0.0
      %478 = vadd.xlane.f32.xlu0 %v477
      %v479 = vpop.xlane.xlu0 %478
      %v480 = vsel %vm355, %v450, 0.0
      %481 = vadd.xlane.f32.xlu0 %v480
      %v482 = vpop.xlane.xlu0 %481
      %v483 = vsel %vm355, %v451, 0.0
      %484 = vadd.xlane.f32.xlu0 %v483
      %v485 = vpop.xlane.xlu0 %484
      %v486 = vsel %vm355, %v452, 0.0
      %487 = vadd.xlane.f32.xlu0 %v486
      %v488 = vpop.xlane.xlu0 %487
      %v489 = vsel %vm355, %v453, 0.0
      %490 = vadd.xlane.f32.xlu0 %v489
      %v491 = vpop.xlane.xlu0 %490
      %v492 = vsel %vm355, %v454, 0.0
      %493 = vadd.xlane.f32.xlu0 %v492
      %v494 = vpop.xlane.xlu0 %493
      %v495 = vsel %vm355, %v455, 0.0
      %496 = vadd.xlane.f32.xlu0 %v495
      %v497 = vpop.xlane.xlu0 %496
      %v498 = vsel %vm355, %v456, 0.0
      %499 = vadd.xlane.f32.xlu0 %v498
      %v500 = vpop.xlane.xlu0 %499
      %v501 = vsel %vm355, %v457, 0.0
      %502 = vadd.xlane.f32.xlu0 %v501
      %v503 = vpop.xlane.xlu0 %502
      %v504 = vsel %vm355, %v458, 0.0
      %505 = vadd.xlane.f32.xlu0 %v504
      %v506 = vpop.xlane.xlu0 %505
      %v507 = vmul.f32 %v461, %v410
      %v508 = vmul.f32 %v464, %v410
      %v509 = vmul.f32 %v467, %v410
      %v510 = vmul.f32 %v470, %v410
      %v511 = vmul.f32 %v473, %v410
      %v512 = vmul.f32 %v476, %v410
      %v513 = vmul.f32 %v479, %v410
      %v514 = vmul.f32 %v482, %v410
      %v515 = vmul.f32 %v485, %v410
      %v516 = vmul.f32 %v488, %v410
      %v517 = vmul.f32 %v491, %v410
      %v518 = vmul.f32 %v494, %v410
      %v519 = vmul.f32 %v497, %v410
      %v520 = vmul.f32 %v500, %v410
      %v521 = vmul.f32 %v503, %v410
      %v522 = vmul.f32 %v506, %v410
      %v523 = vadd.f32 %v507, 1e-05
      %v524 = vadd.f32 %v508, 1e-05
      %v525 = vadd.f32 %v509, 1e-05
      %v526 = vadd.f32 %v510, 1e-05
      %v527 = vadd.f32 %v511, 1e-05
      %v528 = vadd.f32 %v512, 1e-05
      %v529 = vadd.f32 %v513, 1e-05
      %v530 = vadd.f32 %v514, 1e-05
      %v531 = vadd.f32 %v515, 1e-05
      %v532 = vadd.f32 %v516, 1e-05
      %v533 = vadd.f32 %v517, 1e-05
      %v534 = vadd.f32 %v518, 1e-05
      %v535 = vadd.f32 %v519, 1e-05
      %v536 = vadd.f32 %v520, 1e-05
      %v537 = vadd.f32 %v521, 1e-05
      %v538 = vadd.f32 %v522, 1e-05
      %v539 = vrsqrt.pop %v523
      %v540 = vmul.f32 %v539, %v523
      %v541 = vmul.f32 %v540, %v539
      %v542 = vmul.f32 0.5, %v541
      %v543 = vsub.f32 1.5, %v542
      %v544 = vmul.f32 %v539, %v543
      %vm545 = vweird.f32 %v523
      %vm546 = vweird.f32 %v539
      %vm547 = vmor %vm545, %vm546
      %v548 = vsel %vm547, %v539, %v544
      %v549 = vrsqrt.pop %v524
      %v550 = vmul.f32 %v549, %v524
      %v551 = vmul.f32 %v550, %v549
      %v552 = vmul.f32 0.5, %v551
      %v553 = vsub.f32 1.5, %v552
      %v554 = vmul.f32 %v549, %v553
      %vm555 = vweird.f32 %v524
      %vm556 = vweird.f32 %v549
      %vm557 = vmor %vm555, %vm556
      %v558 = vsel %vm557, %v549, %v554
      %v559 = vrsqrt.pop %v525
      %v560 = vmul.f32 %v559, %v525
      %v561 = vmul.f32 %v560, %v559
      %v562 = vmul.f32 0.5, %v561
      %v563 = vsub.f32 1.5, %v562
      %v564 = vmul.f32 %v559, %v563
      %vm565 = vweird.f32 %v525
      %vm566 = vweird.f32 %v559
      %vm567 = vmor %vm565, %vm566
      %v568 = vsel %vm567, %v559, %v564
      %v569 = vrsqrt.pop %v526
      %v570 = vmul.f32 %v569, %v526
      %v571 = vmul.f32 %v570, %v569
      %v572 = vmul.f32 0.5, %v571
      %v573 = vsub.f32 1.5, %v572
      %v574 = vmul.f32 %v569, %v573
      %vm575 = vweird.f32 %v526
      %vm576 = vweird.f32 %v569
      %vm577 = vmor %vm575, %vm576
      %v578 = vsel %vm577, %v569, %v574
      %v579 = vrsqrt.pop %v527
      %v580 = vmul.f32 %v579, %v527
      %v581 = vmul.f32 %v580, %v579
      %v582 = vmul.f32 0.5, %v581
      %v583 = vsub.f32 1.5, %v582
      %v584 = vmul.f32 %v579, %v583
      %vm585 = vweird.f32 %v527
      %vm586 = vweird.f32 %v579
      %vm587 = vmor %vm585, %vm586
      %v588 = vsel %vm587, %v579, %v584
      %v589 = vrsqrt.pop %v528
      %v590 = vmul.f32 %v589, %v528
      %v591 = vmul.f32 %v590, %v589
      %v592 = vmul.f32 0.5, %v591
      %v593 = vsub.f32 1.5, %v592
      %v594 = vmul.f32 %v589, %v593
      %vm595 = vweird.f32 %v528
      %vm596 = vweird.f32 %v589
      %vm597 = vmor %vm595, %vm596
      %v598 = vsel %vm597, %v589, %v594
      %v599 = vrsqrt.pop %v529
      %v600 = vmul.f32 %v599, %v529
      %v601 = vmul.f32 %v600, %v599
      %v602 = vmul.f32 0.5, %v601
      %v603 = vsub.f32 1.5, %v602
      %v604 = vmul.f32 %v599, %v603
      %vm605 = vweird.f32 %v529
      %vm606 = vweird.f32 %v599
      %vm607 = vmor %vm605, %vm606
      %v608 = vsel %vm607, %v599, %v604
      %v609 = vrsqrt.pop %v530
      %v610 = vmul.f32 %v609, %v530
      %v611 = vmul.f32 %v610, %v609
      %v612 = vmul.f32 0.5, %v611
      %v613 = vsub.f32 1.5, %v612
      %v614 = vmul.f32 %v609, %v613
      %vm615 = vweird.f32 %v530
      %vm616 = vweird.f32 %v609
      %vm617 = vmor %vm615, %vm616
      %v618 = vsel %vm617, %v609, %v614
      %v619 = vrsqrt.pop %v531
      %v620 = vmul.f32 %v619, %v531
      %v621 = vmul.f32 %v620, %v619
      %v622 = vmul.f32 0.5, %v621
      %v623 = vsub.f32 1.5, %v622
      %v624 = vmul.f32 %v619, %v623
      %vm625 = vweird.f32 %v531
      %vm626 = vweird.f32 %v619
      %vm627 = vmor %vm625, %vm626
      %v628 = vsel %vm627, %v619, %v624
      %v629 = vrsqrt.pop %v532
      %v630 = vmul.f32 %v629, %v532
      %v631 = vmul.f32 %v630, %v629
      %v632 = vmul.f32 0.5, %v631
      %v633 = vsub.f32 1.5, %v632
      %v634 = vmul.f32 %v629, %v633
      %vm635 = vweird.f32 %v532
      %vm636 = vweird.f32 %v629
      %vm637 = vmor %vm635, %vm636
      %v638 = vsel %vm637, %v629, %v634
      %v639 = vrsqrt.pop %v533
      %v640 = vmul.f32 %v639, %v533
      %v641 = vmul.f32 %v640, %v639
      %v642 = vmul.f32 0.5, %v641
      %v643 = vsub.f32 1.5, %v642
      %v644 = vmul.f32 %v639, %v643
      %vm645 = vweird.f32 %v533
      %vm646 = vweird.f32 %v639
      %vm647 = vmor %vm645, %vm646
      %v648 = vsel %vm647, %v639, %v644
      %v649 = vrsqrt.pop %v534
      %v650 = vmul.f32 %v649, %v534
      %v651 = vmul.f32 %v650, %v649
      %v652 = vmul.f32 0.5, %v651
      %v653 = vsub.f32 1.5, %v652
      %v654 = vmul.f32 %v649, %v653
      %vm655 = vweird.f32 %v534
      %vm656 = vweird.f32 %v649
      %vm657 = vmor %vm655, %vm656
      %v658 = vsel %vm657, %v649, %v654
      %v659 = vrsqrt.pop %v535
      %v660 = vmul.f32 %v659, %v535
      %v661 = vmul.f32 %v660, %v659
      %v662 = vmul.f32 0.5, %v661
      %v663 = vsub.f32 1.5, %v662
      %v664 = vmul.f32 %v659, %v663
      %vm665 = vweird.f32 %v535
      %vm666 = vweird.f32 %v659
      %vm667 = vmor %vm665, %vm666
      %v668 = vsel %vm667, %v659, %v664
      %v669 = vrsqrt.pop %v536
      %v670 = vmul.f32 %v669, %v536
      %v671 = vmul.f32 %v670, %v669
      %v672 = vmul.f32 0.5, %v671
      %v673 = vsub.f32 1.5, %v672
      %v674 = vmul.f32 %v669, %v673
      %vm675 = vweird.f32 %v536
      %vm676 = vweird.f32 %v669
      %vm677 = vmor %vm675, %vm676
      %v678 = vsel %vm677, %v669, %v674
      %v679 = vrsqrt.pop %v537
      %v680 = vmul.f32 %v679, %v537
      %v681 = vmul.f32 %v680, %v679
      %v682 = vmul.f32 0.5, %v681
      %v683 = vsub.f32 1.5, %v682
      %v684 = vmul.f32 %v679, %v683
      %vm685 = vweird.f32 %v537
      %vm686 = vweird.f32 %v679
      %vm687 = vmor %vm685, %vm686
      %v688 = vsel %vm687, %v679, %v684
      %v689 = vrsqrt.pop %v538
      %v690 = vmul.f32 %v689, %v538
      %v691 = vmul.f32 %v690, %v689
      %v692 = vmul.f32 0.5, %v691
      %v693 = vsub.f32 1.5, %v692
      %v694 = vmul.f32 %v689, %v693
      %vm695 = vweird.f32 %v538
      %vm696 = vweird.f32 %v689
      %vm697 = vmor %vm695, %vm696
      %v698 = vsel %vm697, %v689, %v694
      %v699 = vmul.f32 %v427, %v548
      %v700 = vmul.f32 %v428, %v558
      %v701 = vmul.f32 %v429, %v568
      %v702 = vmul.f32 %v430, %v578
      %v703 = vmul.f32 %v431, %v588
      %v704 = vmul.f32 %v432, %v598
      %v705 = vmul.f32 %v433, %v608
      %v706 = vmul.f32 %v434, %v618
      %v707 = vmul.f32 %v435, %v628
      %v708 = vmul.f32 %v436, %v638
      %v709 = vmul.f32 %v437, %v648
      %v710 = vmul.f32 %v438, %v658
      %v711 = vmul.f32 %v439, %v668
      %v712 = vmul.f32 %v440, %v678
      %v713 = vmul.f32 %v441, %v688
      %v714 = vmul.f32 %v442, %v698
      %v716 = vperm.slane %v353, 0
      %v718 = vmul.f32 %v699, %v716
      %v719 = vmul.f32 %v700, %v716
      %v720 = vmul.f32 %v701, %v716
      %v721 = vmul.f32 %v702, %v716
      %v722 = vmul.f32 %v703, %v716
      %v723 = vmul.f32 %v704, %v716
      %v724 = vmul.f32 %v705, %v716
      %v725 = vmul.f32 %v706, %v716
      %v726 = vmul.f32 %v707, %v716
      %v727 = vmul.f32 %v708, %v716
      %v728 = vmul.f32 %v709, %v716
      %v729 = vmul.f32 %v710, %v716
      %v730 = vmul.f32 %v711, %v716
      %v731 = vmul.f32 %v712, %v716
      %v732 = vmul.f32 %v713, %v716
      %v733 = vmul.f32 %v714, %v716
      %v735 = vperm.slane %v354, 0
      %v737 = vadd.f32 %v718, %v735
      %v738 = vadd.f32 %v719, %v735
      %v739 = vadd.f32 %v720, %v735
      %v740 = vadd.f32 %v721, %v735
      %v741 = vadd.f32 %v722, %v735
      %v742 = vadd.f32 %v723, %v735
      %v743 = vadd.f32 %v724, %v735
      %v744 = vadd.f32 %v725, %v735
      %v745 = vadd.f32 %v726, %v735
      %v746 = vadd.f32 %v727, %v735
      %v747 = vadd.f32 %v728, %v735
      %v748 = vadd.f32 %v729, %v735
      %v749 = vadd.f32 %v730, %v735
      %v750 = vadd.f32 %v731, %v735
      %v751 = vadd.f32 %v732, %v735
      %v752 = vadd.f32 %v733, %v735
      %v753 = vpack.c.bf16 %v738, %v737
      %v754 = vpack.c.bf16 %v740, %v739
      %v755 = vpack.c.bf16 %v742, %v741
      %v756 = vpack.c.bf16 %v744, %v743
      %v757 = vpack.c.bf16 %v746, %v745
      %v758 = vpack.c.bf16 %v748, %v747
      %v759 = vpack.c.bf16 %v750, %v749
      %v760 = vpack.c.bf16 %v752, %v751
      %v761 = vld [vmem:[%s3] sm:$0xf]
      %v762 = vld [vmem:[%s3 + $0x4] sm:$0xf]
      %v763 = vld [vmem:[%s3 + $0x8] sm:$0xf]
      %v764 = vld [vmem:[%s3 + $0xc] sm:$0xf]
      %v765 = vld [vmem:[%s4] sm:$0x1]
      %v767 = vperm.slane %v765, 0
      %v773 = vunpack.c.l.b16 %v761
      %v774 = vunpack.c.l.b16 %v762
      %v775 = vunpack.c.l.b16 %v763
      %v776 = vunpack.c.l.b16 %v764
      %v777 = vpack.c.b16 %v774, %v773
      %v778 = vpack.c.b16 %v776, %v775
      %v782 = vsel %vm355, %v753, 0
      %v785 = vsel %vm355, %v754, 0
      %v788 = vsel %vm355, %v755, 0
      %v791 = vsel %vm355, %v756, 0
      %v794 = vsel %vm355, %v757, 0
      %v797 = vsel %vm355, %v758, 0
      %v800 = vsel %vm355, %v759, 0
      %v803 = vsel %vm355, %v760, 0
      %805 = vmatpush.bf16.msra.mxu0 0
      %806 = vmatpush.bf16.msra.mxu0 0
      %807 = vmatpush.bf16.msra.mxu0 0
      %808 = vmatpush.bf16.msra.mxu0 0
      %809 = vmatpush.bf16.msra.mxu0 0
      %810 = vmatpush.bf16.msra.mxu0 0
      %811 = vmatpush.bf16.msra.mxu0 %v778
      %812 = vmatpush.bf16.msra.mxu0 %v777
      %813 = vmatmul.bf16.gmra.mxu0 %v782
      %v814 = vpop.f32.mrf.mxu0
      %v815 = vadd.f32 %v767, %v814
      %v816 = vpop.f32.mrf.mxu0
      %v817 = vadd.f32 %v767, %v816
      %818 = vmatmul.bf16.gmra.mxu0 %v785
      %v819 = vpop.f32.mrf.mxu0
      %v820 = vadd.f32 %v767, %v819
      %v821 = vpop.f32.mrf.mxu0
      %v822 = vadd.f32 %v767, %v821
      %823 = vmatmul.bf16.gmra.mxu0 %v788
      %v824 = vpop.f32.mrf.mxu0
      %v825 = vadd.f32 %v767, %v824
      %v826 = vpop.f32.mrf.mxu0
      %v827 = vadd.f32 %v767, %v826
      %828 = vmatmul.bf16.gmra.mxu0 %v791
      %v829 = vpop.f32.mrf.mxu0
      %v830 = vadd.f32 %v767, %v829
      %v831 = vpop.f32.mrf.mxu0
      %v832 = vadd.f32 %v767, %v831
      %833 = vmatmul.bf16.gmra.mxu0 %v794
      %v834 = vpop.f32.mrf.mxu0
      %v835 = vadd.f32 %v767, %v834
      %v836 = vpop.f32.mrf.mxu0
      %v837 = vadd.f32 %v767, %v836
      %838 = vmatmul.bf16.gmra.mxu0 %v797
      %v839 = vpop.f32.mrf.mxu0
      %v840 = vadd.f32 %v767, %v839
      %v841 = vpop.f32.mrf.mxu0
      %v842 = vadd.f32 %v767, %v841
      %843 = vmatmul.bf16.gmra.mxu0 %v800
      %v844 = vpop.f32.mrf.mxu0
      %v845 = vadd.f32 %v767, %v844
      %v846 = vpop.f32.mrf.mxu0
      %v847 = vadd.f32 %v767, %v846
      %848 = vmatmul.bf16.gmra.mxu0 %v803
      %v849 = vpop.f32.mrf.mxu0
      %v850 = vadd.f32 %v767, %v849
      %v851 = vpop.f32.mrf.mxu0
      %v852 = vadd.f32 %v767, %v851
      %853 = vdwg.mxu0
      %v854 = vld [vmem:[%s5] sm:$0xf]
      %v855 = vld [vmem:[%s5 + $0x4] sm:$0xf]
      %v856 = vld [vmem:[%s5 + $0x8] sm:$0xf]
      %v857 = vld [vmem:[%s5 + $0xc] sm:$0xf]
      %v858 = vld [vmem:[%s6] sm:$0x1]
      %v860 = vperm.slane %v858, 0
      %v866 = vunpack.c.l.b16 %v854
      %v867 = vunpack.c.l.b16 %v855
      %v868 = vunpack.c.l.b16 %v856
      %v869 = vunpack.c.l.b16 %v857
      %v870 = vpack.c.b16 %v867, %v866
      %v871 = vpack.c.b16 %v869, %v868
      %874 = vmatpush.bf16.msra.mxu0 0
      %875 = vmatpush.bf16.msra.mxu0 0
      %876 = vmatpush.bf16.msra.mxu0 0
      %877 = vmatpush.bf16.msra.mxu0 0
      %878 = vmatpush.bf16.msra.mxu0 0
      %879 = vmatpush.bf16.msra.mxu0 0
      %880 = vmatpush.bf16.msra.mxu0 %v871
      %881 = vmatpush.bf16.msra.mxu0 %v870
      %882 = vmatmul.bf16.gmra.mxu0 %v782
      %v883 = vpop.f32.mrf.mxu0
      %v884 = vadd.f32 %v860, %v883
      %v885 = vpop.f32.mrf.mxu0
      %v886 = vadd.f32 %v860, %v885
      %887 = vmatmul.bf16.gmra.mxu0 %v785
      %v888 = vpop.f32.mrf.mxu0
      %v889 = vadd.f32 %v860, %v888
      %v890 = vpop.f32.mrf.mxu0
      %v891 = vadd.f32 %v860, %v890
      %892 = vmatmul.bf16.gmra.mxu0 %v788
      %v893 = vpop.f32.mrf.mxu0
      %v894 = vadd.f32 %v860, %v893
      %v895 = vpop.f32.mrf.mxu0
      %v896 = vadd.f32 %v860, %v895
      %897 = vmatmul.bf16.gmra.mxu0 %v791
      %v898 = vpop.f32.mrf.mxu0
      %v899 = vadd.f32 %v860, %v898
      %v900 = vpop.f32.mrf.mxu0
      %v901 = vadd.f32 %v860, %v900
      %902 = vmatmul.bf16.gmra.mxu0 %v794
      %v903 = vpop.f32.mrf.mxu0
      %v904 = vadd.f32 %v860, %v903
      %v905 = vpop.f32.mrf.mxu0
      %v906 = vadd.f32 %v860, %v905
      %907 = vmatmul.bf16.gmra.mxu0 %v797
      %v908 = vpop.f32.mrf.mxu0
      %v909 = vadd.f32 %v860, %v908
      %v910 = vpop.f32.mrf.mxu0
      %v911 = vadd.f32 %v860, %v910
      %912 = vmatmul.bf16.gmra.mxu0 %v800
      %v913 = vpop.f32.mrf.mxu0
      %v914 = vadd.f32 %v860, %v913
      %v915 = vpop.f32.mrf.mxu0
      %v916 = vadd.f32 %v860, %v915
      %917 = vmatmul.bf16.gmra.mxu0 %v803
      %v918 = vpop.f32.mrf.mxu0
      %v919 = vadd.f32 %v860, %v918
      %v920 = vpop.f32.mrf.mxu0
      %v921 = vadd.f32 %v860, %v920
      %922 = vdwg.mxu0
      %v923 = vxor.u32 %v884, 2147483648
      %v924 = vxor.u32 %v886, 2147483648
      %v925 = vxor.u32 %v889, 2147483648
      %v926 = vxor.u32 %v891, 2147483648
      %v927 = vxor.u32 %v894, 2147483648
      %v928 = vxor.u32 %v896, 2147483648
      %v929 = vxor.u32 %v899, 2147483648
      %v930 = vxor.u32 %v901, 2147483648
      %v931 = vxor.u32 %v904, 2147483648
      %v932 = vxor.u32 %v906, 2147483648
      %v933 = vxor.u32 %v909, 2147483648
      %v934 = vxor.u32 %v911, 2147483648
      %v935 = vxor.u32 %v914, 2147483648
      %v936 = vxor.u32 %v916, 2147483648
      %v937 = vxor.u32 %v919, 2147483648
      %v938 = vxor.u32 %v921, 2147483648
      %v939 = vmul.f32 %v923, 1.442695
      %v940 = vpow.pop %v939
      %v941 = vmul.f32 %v924, 1.442695
      %v942 = vpow.pop %v941
      %v943 = vmul.f32 %v925, 1.442695
      %v944 = vpow.pop %v943
      %v945 = vmul.f32 %v926, 1.442695
      %v946 = vpow.pop %v945
      %v947 = vmul.f32 %v927, 1.442695
      %v948 = vpow.pop %v947
      %v949 = vmul.f32 %v928, 1.442695
      %v950 = vpow.pop %v949
      %v951 = vmul.f32 %v929, 1.442695
      %v952 = vpow.pop %v951
      %v953 = vmul.f32 %v930, 1.442695
      %v954 = vpow.pop %v953
      %v955 = vmul.f32 %v931, 1.442695
      %v956 = vpow.pop %v955
      %v957 = vmul.f32 %v932, 1.442695
      %v958 = vpow.pop %v957
      %v959 = vmul.f32 %v933, 1.442695
      %v960 = vpow.pop %v959
      %v961 = vmul.f32 %v934, 1.442695
      %v962 = vpow.pop %v961
      %v963 = vmul.f32 %v935, 1.442695
      %v964 = vpow.pop %v963
      %v965 = vmul.f32 %v936, 1.442695
      %v966 = vpow.pop %v965
      %v967 = vmul.f32 %v937, 1.442695
      %v968 = vpow.pop %v967
      %v969 = vmul.f32 %v938, 1.442695
      %v970 = vpow.pop %v969
      %v971 = vadd.f32 %v940, 1.0
      %v972 = vadd.f32 %v942, 1.0
      %v973 = vadd.f32 %v944, 1.0
      %v974 = vadd.f32 %v946, 1.0
      %v975 = vadd.f32 %v948, 1.0
      %v976 = vadd.f32 %v950, 1.0
      %v977 = vadd.f32 %v952, 1.0
      %v978 = vadd.f32 %v954, 1.0
      %v979 = vadd.f32 %v956, 1.0
      %v980 = vadd.f32 %v958, 1.0
      %v981 = vadd.f32 %v960, 1.0
      %v982 = vadd.f32 %v962, 1.0
      %v983 = vadd.f32 %v964, 1.0
      %v984 = vadd.f32 %v966, 1.0
      %v985 = vadd.f32 %v968, 1.0
      %v986 = vadd.f32 %v970, 1.0
      %v987 = vrcp.pop %v971
      %v988 = vmul.f32 %v971, %v987
      %v989 = vsub.f32 1.0, %v988
      %v990 = vmul.f32 %v987, %v989
      %v991 = vadd.f32 %v987, %v990
      %vm992 = vweird.f32 %v971
      %vm993 = vweird.f32 %v987
      %vm994 = vmor %vm992, %vm993
      %v995 = vsel %vm994, %v987, %v991
      %v996 = vand.u32 2147483647, %v971
      %vm997 = vcmp.eq.f32.partialorder %v996, 8.507059e+37
      %v998 = vand.u32 %v971, 2147483648
      %v999 = vor.u32 1.1754944e-38, %v998
      %v1000 = vsel %vm997, %v999, %v995
      %v1001 = vmul.f32 1.0, %v1000
      %v1002 = vrcp.pop %v972
      %v1003 = vmul.f32 %v972, %v1002
      %v1004 = vsub.f32 1.0, %v1003
      %v1005 = vmul.f32 %v1002, %v1004
      %v1006 = vadd.f32 %v1002, %v1005
      %vm1007 = vweird.f32 %v972
      %vm1008 = vweird.f32 %v1002
      %vm1009 = vmor %vm1007, %vm1008
      %v1010 = vsel %vm1009, %v1002, %v1006
      %v1011 = vand.u32 2147483647, %v972
      %vm1012 = vcmp.eq.f32.partialorder %v1011, 8.507059e+37
      %v1013 = vand.u32 %v972, 2147483648
      %v1014 = vor.u32 1.1754944e-38, %v1013
      %v1015 = vsel %vm1012, %v1014, %v1010
      %v1016 = vmul.f32 1.0, %v1015
      %v1017 = vrcp.pop %v973
      %v1018 = vmul.f32 %v973, %v1017
      %v1019 = vsub.f32 1.0, %v1018
      %v1020 = vmul.f32 %v1017, %v1019
      %v1021 = vadd.f32 %v1017, %v1020
      %vm1022 = vweird.f32 %v973
      %vm1023 = vweird.f32 %v1017
      %vm1024 = vmor %vm1022, %vm1023
      %v1025 = vsel %vm1024, %v1017, %v1021
      %v1026 = vand.u32 2147483647, %v973
      %vm1027 = vcmp.eq.f32.partialorder %v1026, 8.507059e+37
      %v1028 = vand.u32 %v973, 2147483648
      %v1029 = vor.u32 1.1754944e-38, %v1028
      %v1030 = vsel %vm1027, %v1029, %v1025
      %v1031 = vmul.f32 1.0, %v1030
      %v1032 = vrcp.pop %v974
      %v1033 = vmul.f32 %v974, %v1032
      %v1034 = vsub.f32 1.0, %v1033
      %v1035 = vmul.f32 %v1032, %v1034
      %v1036 = vadd.f32 %v1032, %v1035
      %vm1037 = vweird.f32 %v974
      %vm1038 = vweird.f32 %v1032
      %vm1039 = vmor %vm1037, %vm1038
      %v1040 = vsel %vm1039, %v1032, %v1036
      %v1041 = vand.u32 2147483647, %v974
      %vm1042 = vcmp.eq.f32.partialorder %v1041, 8.507059e+37
      %v1043 = vand.u32 %v974, 2147483648
      %v1044 = vor.u32 1.1754944e-38, %v1043
      %v1045 = vsel %vm1042, %v1044, %v1040
      %v1046 = vmul.f32 1.0, %v1045
      %v1047 = vrcp.pop %v975
      %v1048 = vmul.f32 %v975, %v1047
      %v1049 = vsub.f32 1.0, %v1048
      %v1050 = vmul.f32 %v1047, %v1049
      %v1051 = vadd.f32 %v1047, %v1050
      %vm1052 = vweird.f32 %v975
      %vm1053 = vweird.f32 %v1047
      %vm1054 = vmor %vm1052, %vm1053
      %v1055 = vsel %vm1054, %v1047, %v1051
      %v1056 = vand.u32 2147483647, %v975
      %vm1057 = vcmp.eq.f32.partialorder %v1056, 8.507059e+37
      %v1058 = vand.u32 %v975, 2147483648
      %v1059 = vor.u32 1.1754944e-38, %v1058
      %v1060 = vsel %vm1057, %v1059, %v1055
      %v1061 = vmul.f32 1.0, %v1060
      %v1062 = vrcp.pop %v976
      %v1063 = vmul.f32 %v976, %v1062
      %v1064 = vsub.f32 1.0, %v1063
      %v1065 = vmul.f32 %v1062, %v1064
      %v1066 = vadd.f32 %v1062, %v1065
      %vm1067 = vweird.f32 %v976
      %vm1068 = vweird.f32 %v1062
      %vm1069 = vmor %vm1067, %vm1068
      %v1070 = vsel %vm1069, %v1062, %v1066
      %v1071 = vand.u32 2147483647, %v976
      %vm1072 = vcmp.eq.f32.partialorder %v1071, 8.507059e+37
      %v1073 = vand.u32 %v976, 2147483648
      %v1074 = vor.u32 1.1754944e-38, %v1073
      %v1075 = vsel %vm1072, %v1074, %v1070
      %v1076 = vmul.f32 1.0, %v1075
      %v1077 = vrcp.pop %v977
      %v1078 = vmul.f32 %v977, %v1077
      %v1079 = vsub.f32 1.0, %v1078
      %v1080 = vmul.f32 %v1077, %v1079
      %v1081 = vadd.f32 %v1077, %v1080
      %vm1082 = vweird.f32 %v977
      %vm1083 = vweird.f32 %v1077
      %vm1084 = vmor %vm1082, %vm1083
      %v1085 = vsel %vm1084, %v1077, %v1081
      %v1086 = vand.u32 2147483647, %v977
      %vm1087 = vcmp.eq.f32.partialorder %v1086, 8.507059e+37
      %v1088 = vand.u32 %v977, 2147483648
      %v1089 = vor.u32 1.1754944e-38, %v1088
      %v1090 = vsel %vm1087, %v1089, %v1085
      %v1091 = vmul.f32 1.0, %v1090
      %v1092 = vrcp.pop %v978
      %v1093 = vmul.f32 %v978, %v1092
      %v1094 = vsub.f32 1.0, %v1093
      %v1095 = vmul.f32 %v1092, %v1094
      %v1096 = vadd.f32 %v1092, %v1095
      %vm1097 = vweird.f32 %v978
      %vm1098 = vweird.f32 %v1092
      %vm1099 = vmor %vm1097, %vm1098
      %v1100 = vsel %vm1099, %v1092, %v1096
      %v1101 = vand.u32 2147483647, %v978
      %vm1102 = vcmp.eq.f32.partialorder %v1101, 8.507059e+37
      %v1103 = vand.u32 %v978, 2147483648
      %v1104 = vor.u32 1.1754944e-38, %v1103
      %v1105 = vsel %vm1102, %v1104, %v1100
      %v1106 = vmul.f32 1.0, %v1105
      %v1107 = vrcp.pop %v979
      %v1108 = vmul.f32 %v979, %v1107
      %v1109 = vsub.f32 1.0, %v1108
      %v1110 = vmul.f32 %v1107, %v1109
      %v1111 = vadd.f32 %v1107, %v1110
      %vm1112 = vweird.f32 %v979
      %vm1113 = vweird.f32 %v1107
      %vm1114 = vmor %vm1112, %vm1113
      %v1115 = vsel %vm1114, %v1107, %v1111
      %v1116 = vand.u32 2147483647, %v979
      %vm1117 = vcmp.eq.f32.partialorder %v1116, 8.507059e+37
      %v1118 = vand.u32 %v979, 2147483648
      %v1119 = vor.u32 1.1754944e-38, %v1118
      %v1120 = vsel %vm1117, %v1119, %v1115
      %v1121 = vmul.f32 1.0, %v1120
      %v1122 = vrcp.pop %v980
      %v1123 = vmul.f32 %v980, %v1122
      %v1124 = vsub.f32 1.0, %v1123
      %v1125 = vmul.f32 %v1122, %v1124
      %v1126 = vadd.f32 %v1122, %v1125
      %vm1127 = vweird.f32 %v980
      %vm1128 = vweird.f32 %v1122
      %vm1129 = vmor %vm1127, %vm1128
      %v1130 = vsel %vm1129, %v1122, %v1126
      %v1131 = vand.u32 2147483647, %v980
      %vm1132 = vcmp.eq.f32.partialorder %v1131, 8.507059e+37
      %v1133 = vand.u32 %v980, 2147483648
      %v1134 = vor.u32 1.1754944e-38, %v1133
      %v1135 = vsel %vm1132, %v1134, %v1130
      %v1136 = vmul.f32 1.0, %v1135
      %v1137 = vrcp.pop %v981
      %v1138 = vmul.f32 %v981, %v1137
      %v1139 = vsub.f32 1.0, %v1138
      %v1140 = vmul.f32 %v1137, %v1139
      %v1141 = vadd.f32 %v1137, %v1140
      %vm1142 = vweird.f32 %v981
      %vm1143 = vweird.f32 %v1137
      %vm1144 = vmor %vm1142, %vm1143
      %v1145 = vsel %vm1144, %v1137, %v1141
      %v1146 = vand.u32 2147483647, %v981
      %vm1147 = vcmp.eq.f32.partialorder %v1146, 8.507059e+37
      %v1148 = vand.u32 %v981, 2147483648
      %v1149 = vor.u32 1.1754944e-38, %v1148
      %v1150 = vsel %vm1147, %v1149, %v1145
      %v1151 = vmul.f32 1.0, %v1150
      %v1152 = vrcp.pop %v982
      %v1153 = vmul.f32 %v982, %v1152
      %v1154 = vsub.f32 1.0, %v1153
      %v1155 = vmul.f32 %v1152, %v1154
      %v1156 = vadd.f32 %v1152, %v1155
      %vm1157 = vweird.f32 %v982
      %vm1158 = vweird.f32 %v1152
      %vm1159 = vmor %vm1157, %vm1158
      %v1160 = vsel %vm1159, %v1152, %v1156
      %v1161 = vand.u32 2147483647, %v982
      %vm1162 = vcmp.eq.f32.partialorder %v1161, 8.507059e+37
      %v1163 = vand.u32 %v982, 2147483648
      %v1164 = vor.u32 1.1754944e-38, %v1163
      %v1165 = vsel %vm1162, %v1164, %v1160
      %v1166 = vmul.f32 1.0, %v1165
      %v1167 = vrcp.pop %v983
      %v1168 = vmul.f32 %v983, %v1167
      %v1169 = vsub.f32 1.0, %v1168
      %v1170 = vmul.f32 %v1167, %v1169
      %v1171 = vadd.f32 %v1167, %v1170
      %vm1172 = vweird.f32 %v983
      %vm1173 = vweird.f32 %v1167
      %vm1174 = vmor %vm1172, %vm1173
      %v1175 = vsel %vm1174, %v1167, %v1171
      %v1176 = vand.u32 2147483647, %v983
      %vm1177 = vcmp.eq.f32.partialorder %v1176, 8.507059e+37
      %v1178 = vand.u32 %v983, 2147483648
      %v1179 = vor.u32 1.1754944e-38, %v1178
      %v1180 = vsel %vm1177, %v1179, %v1175
      %v1181 = vmul.f32 1.0, %v1180
      %v1182 = vrcp.pop %v984
      %v1183 = vmul.f32 %v984, %v1182
      %v1184 = vsub.f32 1.0, %v1183
      %v1185 = vmul.f32 %v1182, %v1184
      %v1186 = vadd.f32 %v1182, %v1185
      %vm1187 = vweird.f32 %v984
      %vm1188 = vweird.f32 %v1182
      %vm1189 = vmor %vm1187, %vm1188
      %v1190 = vsel %vm1189, %v1182, %v1186
      %v1191 = vand.u32 2147483647, %v984
      %vm1192 = vcmp.eq.f32.partialorder %v1191, 8.507059e+37
      %v1193 = vand.u32 %v984, 2147483648
      %v1194 = vor.u32 1.1754944e-38, %v1193
      %v1195 = vsel %vm1192, %v1194, %v1190
      %v1196 = vmul.f32 1.0, %v1195
      %v1197 = vrcp.pop %v985
      %v1198 = vmul.f32 %v985, %v1197
      %v1199 = vsub.f32 1.0, %v1198
      %v1200 = vmul.f32 %v1197, %v1199
      %v1201 = vadd.f32 %v1197, %v1200
      %vm1202 = vweird.f32 %v985
      %vm1203 = vweird.f32 %v1197
      %vm1204 = vmor %vm1202, %vm1203
      %v1205 = vsel %vm1204, %v1197, %v1201
      %v1206 = vand.u32 2147483647, %v985
      %vm1207 = vcmp.eq.f32.partialorder %v1206, 8.507059e+37
      %v1208 = vand.u32 %v985, 2147483648
      %v1209 = vor.u32 1.1754944e-38, %v1208
      %v1210 = vsel %vm1207, %v1209, %v1205
      %v1211 = vmul.f32 1.0, %v1210
      %v1212 = vrcp.pop %v986
      %v1213 = vmul.f32 %v986, %v1212
      %v1214 = vsub.f32 1.0, %v1213
      %v1215 = vmul.f32 %v1212, %v1214
      %v1216 = vadd.f32 %v1212, %v1215
      %vm1217 = vweird.f32 %v986
      %vm1218 = vweird.f32 %v1212
      %vm1219 = vmor %vm1217, %vm1218
      %v1220 = vsel %vm1219, %v1212, %v1216
      %v1221 = vand.u32 2147483647, %v986
      %vm1222 = vcmp.eq.f32.partialorder %v1221, 8.507059e+37
      %v1223 = vand.u32 %v986, 2147483648
      %v1224 = vor.u32 1.1754944e-38, %v1223
      %v1225 = vsel %vm1222, %v1224, %v1220
      %v1226 = vmul.f32 1.0, %v1225
      %v1227 = vmul.f32 %v884, %v1001
      %v1228 = vmul.f32 %v886, %v1016
      %v1229 = vmul.f32 %v889, %v1031
      %v1230 = vmul.f32 %v891, %v1046
      %v1231 = vmul.f32 %v894, %v1061
      %v1232 = vmul.f32 %v896, %v1076
      %v1233 = vmul.f32 %v899, %v1091
      %v1234 = vmul.f32 %v901, %v1106
      %v1235 = vmul.f32 %v904, %v1121
      %v1236 = vmul.f32 %v906, %v1136
      %v1237 = vmul.f32 %v909, %v1151
      %v1238 = vmul.f32 %v911, %v1166
      %v1239 = vmul.f32 %v914, %v1181
      %v1240 = vmul.f32 %v916, %v1196
      %v1241 = vmul.f32 %v919, %v1211
      %v1242 = vmul.f32 %v921, %v1226
      %v1243 = vmul.f32 %v815, %v1227
      %v1244 = vmul.f32 %v817, %v1228
      %v1245 = vmul.f32 %v820, %v1229
      %v1246 = vmul.f32 %v822, %v1230
      %v1247 = vmul.f32 %v825, %v1231
      %v1248 = vmul.f32 %v827, %v1232
      %v1249 = vmul.f32 %v830, %v1233
      %v1250 = vmul.f32 %v832, %v1234
      %v1251 = vmul.f32 %v835, %v1235
      %v1252 = vmul.f32 %v837, %v1236
      %v1253 = vmul.f32 %v840, %v1237
      %v1254 = vmul.f32 %v842, %v1238
      %v1255 = vmul.f32 %v845, %v1239
      %v1256 = vmul.f32 %v847, %v1240
      %v1257 = vmul.f32 %v850, %v1241
      %v1258 = vmul.f32 %v852, %v1242
      %v1259 = vpack.c.bf16 %v1244, %v1243
      %v1260 = vpack.c.bf16 %v1246, %v1245
      %v1261 = vpack.c.bf16 %v1248, %v1247
      %v1262 = vpack.c.bf16 %v1250, %v1249
      %v1263 = vpack.c.bf16 %v1252, %v1251
      %v1264 = vpack.c.bf16 %v1254, %v1253
      %v1265 = vpack.c.bf16 %v1256, %v1255
      %v1266 = vpack.c.bf16 %v1258, %v1257
      %v1267 = vld [vmem:[%s7] sm:$0xf]
      %v1268 = vld [vmem:[%s7 + $0x4] sm:$0xf]
      %v1269 = vld [vmem:[%s7 + $0x8] sm:$0xf]
      %v1270 = vld [vmem:[%s7 + $0xc] sm:$0xf]
      %v1271 = vld [vmem:[%s7 + $0x10] sm:$0xf]
      %v1272 = vld [vmem:[%s7 + $0x14] sm:$0xf]
      %v1273 = vld [vmem:[%s7 + $0x18] sm:$0xf]
      %v1274 = vld [vmem:[%s7 + $0x1c] sm:$0xf]
      %v1275 = vld [vmem:[%s8] sm:$0x1]
      %v1277 = vperm.slane %v1275, 0
      %v1287 = vunpack.c.l.b16 %v1267
      %v1288 = vunpack.c.l.b16 %v1268
      %v1289 = vunpack.c.l.b16 %v1269
      %v1290 = vunpack.c.l.b16 %v1270
      %v1291 = vunpack.c.l.b16 %v1271
      %v1292 = vunpack.c.l.b16 %v1272
      %v1293 = vunpack.c.l.b16 %v1273
      %v1294 = vunpack.c.l.b16 %v1274
      %v1295 = vpack.c.b16 %v1288, %v1287
      %v1296 = vpack.c.b16 %v1290, %v1289
      %v1297 = vpack.c.b16 %v1292, %v1291
      %v1298 = vpack.c.b16 %v1294, %v1293
      %vm1303 = vcmask 523264
      %v1305 = vsel %vm1303, %v1259, 0
      %v1308 = vsel %vm1303, %v1260, 0
      %v1311 = vsel %vm1303, %v1261, 0
      %v1314 = vsel %vm1303, %v1262, 0
      %v1317 = vsel %vm1303, %v1263, 0
      %v1320 = vsel %vm1303, %v1264, 0
      %v1323 = vsel %vm1303, %v1265, 0
      %v1326 = vsel %vm1303, %v1266, 0
      %1328 = vmatpush.bf16.msra.mxu0 0
      %1329 = vmatpush.bf16.msra.mxu0 0
      %1330 = vmatpush.bf16.msra.mxu0 0
      %1331 = vmatpush.bf16.msra.mxu0 0
      %1332 = vmatpush.bf16.msra.mxu0 %v1298
      %1333 = vmatpush.bf16.msra.mxu0 %v1297
      %1334 = vmatpush.bf16.msra.mxu0 %v1296
      %1335 = vmatpush.bf16.msra.mxu0 %v1295
      %1336 = vmatmul.bf16.gmra.mxu0 %v1305
      %v1337 = vpop.f32.mrf.mxu0
      %v1338 = vadd.f32 %v1277, %v1337
      %v1339 = vpop.f32.mrf.mxu0
      %v1340 = vadd.f32 %v1277, %v1339
      %1341 = vmatmul.bf16.gmra.mxu0 %v1308
      %v1342 = vpop.f32.mrf.mxu0
      %v1343 = vadd.f32 %v1277, %v1342
      %v1344 = vpop.f32.mrf.mxu0
      %v1345 = vadd.f32 %v1277, %v1344
      %1346 = vmatmul.bf16.gmra.mxu0 %v1311
      %v1347 = vpop.f32.mrf.mxu0
      %v1348 = vadd.f32 %v1277, %v1347
      %v1349 = vpop.f32.mrf.mxu0
      %v1350 = vadd.f32 %v1277, %v1349
      %1351 = vmatmul.bf16.gmra.mxu0 %v1314
      %v1352 = vpop.f32.mrf.mxu0
      %v1353 = vadd.f32 %v1277, %v1352
      %v1354 = vpop.f32.mrf.mxu0
      %v1355 = vadd.f32 %v1277, %v1354
      %1356 = vmatmul.bf16.gmra.mxu0 %v1317
      %v1357 = vpop.f32.mrf.mxu0
      %v1358 = vadd.f32 %v1277, %v1357
      %v1359 = vpop.f32.mrf.mxu0
      %v1360 = vadd.f32 %v1277, %v1359
      %1361 = vmatmul.bf16.gmra.mxu0 %v1320
      %v1362 = vpop.f32.mrf.mxu0
      %v1363 = vadd.f32 %v1277, %v1362
      %v1364 = vpop.f32.mrf.mxu0
      %v1365 = vadd.f32 %v1277, %v1364
      %1366 = vmatmul.bf16.gmra.mxu0 %v1323
      %v1367 = vpop.f32.mrf.mxu0
      %v1368 = vadd.f32 %v1277, %v1367
      %v1369 = vpop.f32.mrf.mxu0
      %v1370 = vadd.f32 %v1277, %v1369
      %1371 = vmatmul.bf16.gmra.mxu0 %v1326
      %v1372 = vpop.f32.mrf.mxu0
      %v1373 = vadd.f32 %v1277, %v1372
      %v1374 = vpop.f32.mrf.mxu0
      %v1375 = vadd.f32 %v1277, %v1374
      %1376 = vdwg.mxu0
      %v1377 = vadd.f32 %v1338, %v337
      %v1378 = vadd.f32 %v1340, %v338
      %v1379 = vadd.f32 %v1343, %v339
      %v1380 = vadd.f32 %v1345, %v340
      %v1381 = vadd.f32 %v1348, %v341
      %v1382 = vadd.f32 %v1350, %v342
      %v1383 = vadd.f32 %v1353, %v343
      %v1384 = vadd.f32 %v1355, %v344
      %v1385 = vadd.f32 %v1358, %v345
      %v1386 = vadd.f32 %v1360, %v346
      %v1387 = vadd.f32 %v1363, %v347
      %v1388 = vadd.f32 %v1365, %v348
      %v1389 = vadd.f32 %v1368, %v349
      %v1390 = vadd.f32 %v1370, %v350
      %v1391 = vadd.f32 %v1373, %v351
      %v1392 = vadd.f32 %v1375, %v352
      %1393 = vst.msk [vmem:[%s334] sm:$0xff] %vm355, %v1377
      %1394 = vst.msk [vmem:[%s334 + $0x8] sm:$0xff] %vm355, %v1378
      %1395 = vst.msk [vmem:[%s334 + $0x10] sm:$0xff] %vm355, %v1379
      %1396 = vst.msk [vmem:[%s334 + $0x18] sm:$0xff] %vm355, %v1380
      %1397 = vst.msk [vmem:[%s334 + $0x20] sm:$0xff] %vm355, %v1381
      %1398 = vst.msk [vmem:[%s334 + $0x28] sm:$0xff] %vm355, %v1382
      %1399 = vst.msk [vmem:[%s334 + $0x30] sm:$0xff] %vm355, %v1383
      %1400 = vst.msk [vmem:[%s334 + $0x38] sm:$0xff] %vm355, %v1384
      %1401 = vst.msk [vmem:[%s334 + $0x40] sm:$0xff] %vm355, %v1385
      %1402 = vst.msk [vmem:[%s334 + $0x48] sm:$0xff] %vm355, %v1386
      %1403 = vst.msk [vmem:[%s334 + $0x50] sm:$0xff] %vm355, %v1387
      %1404 = vst.msk [vmem:[%s334 + $0x58] sm:$0xff] %vm355, %v1388
      %1405 = vst.msk [vmem:[%s334 + $0x60] sm:$0xff] %vm355, %v1389
      %1406 = vst.msk [vmem:[%s334 + $0x68] sm:$0xff] %vm355, %v1390
      %1407 = vst.msk [vmem:[%s334 + $0x70] sm:$0xff] %vm355, %v1391
      %1408 = vst.msk [vmem:[%s334 + $0x78] sm:$0xff] %vm355, %v1392
      %s1409 = smul.u32 16, %s20
      %p1410 = scmp.lt.s32.totalorder %s1409, 31
      %s1411 = scalar_select %p1410, %s1409, 31
      %s1412 = smul.addr %s1411, 8
      %s1413 = scalar_lea.vmem %s9, %s1412
      // Predicated region
      $region57: #{transformer_forward.6} parent=55 // pred_check
        %p1414 = pneg %p232
      $region58: #{transformer_forward.6} parent=55 // pred_check_branch
        %1416 = sbr.rel (%p1414) target = $region60
      $region59: #{transformer_forward.6} parent=55 // pred_region
        %s1417 = smul.u32 16, %s20
      $region60: #{transformer_forward.6} parent=55 // pred_fallthru
        _
    $region56: #{transformer_forward.6} parent=5 // pred_fallthru
      _
    %p1418 = scmp.le.s32.totalorder 2, %s15
    // Predicated region
    $region61: #{transformer_forward.6} parent=5 // pred_check
      %p1419 = pneg %p1418
    $region62: #{transformer_forward.6} parent=5 // pred_check_branch
      %1421 = sbr.rel (%p1419) target = $region64
    $region63: #{transformer_forward.6} parent=5 // pred_region
      %s1422 = ssub.s32 %s15, 2
      // Predicated region
      $region65: #{transformer_forward.6} parent=63 // pred_check
        %p1423 = pneg %p238
      $region66: #{transformer_forward.6} parent=63 // pred_check_branch
        %1425 = sbr.rel (%p1423) target = $region68
      $region67: #{transformer_forward.6} parent=63 // pred_region
        %s1426 = smul.u32 16, %s21
        %p1427 = scmp.lt.s32.totalorder %s1426, 31
        %s1428 = scalar_select %p1427, %s1426, 31
        %s1429 = smul.addr %s1428, 8
        %s1430 = scalar_lea.vmem %s9, %s1429
      $region68: #{transformer_forward.6} parent=63 // pred_fallthru
        _
    $region64: #{transformer_forward.6} parent=5 // pred_fallthru
      _
  $region6: #{transformer_forward.6} parent=0 // loop_footer
    %s19 = sadd.s32 1, %s15
  $region7: #{transformer_forward.6} parent=0 // loop_footer_branch
    %14 = sbr.rel target = $region3
  $region8: #{transformer_forward.6} parent=0 // loop_exit
    _

// kernel: transformer_forward.5
$region0: #{transformer_forward.5}
  #allocation0 [shape = 'u32[]', space=smem, size = 0x4, offset = 0x4, fixed_abs, tag = 'smem constant byte address 0x4 - core index']
  #allocation1 [shape = 'u32[72,128]{1,0:T(1,128)}', space=vmem, size = 0x9000, scoped, tag = 'internal scratch']
  %s0 = inlined_call_operand.vmem [shape: f32[2,128,32], index: 0, kind: input, shape index: {}]
  %s1 = inlined_call_operand.vmem [shape: f32[1,32], index: 1, kind: input, shape index: {}]
  %s2 = inlined_call_operand.vmem [shape: f32[1,32], index: 2, kind: input, shape index: {}]
  %s3 = inlined_call_operand.vmem [shape: bf16[32,96], index: 3, kind: input, shape index: {}]
  %s4 = inlined_call_operand.vmem [shape: f32[1,96], index: 4, kind: input, shape index: {}]
  %s5 = inlined_call_operand.vmem [shape: bf16[32,32], index: 5, kind: input, shape index: {}]
  %s6 = inlined_call_operand.vmem [shape: f32[2,128,32], index: 6, kind: input, shape index: {}]
  %s7 = inlined_call_operand.vmem [shape: f32[2,128,32], index: 7, kind: input, shape index: {}]
  %s8 = inlined_call_operand.vmem [shape: s8[2,128,128], index: 8, kind: input, shape index: {}]
  %s9 = inlined_call_operand.vmem [shape: bf16[32,32], index: 9, kind: input, shape index: {}]
  %s10 = inlined_call_operand.vmem [shape: f32[1,32], index: 10, kind: input, shape index: {}]
  %s11 = inlined_call_operand.vmem [shape: f32[2,128,32], index: 11, kind: output, shape index: {}]
  %s12 = sld [smem:[#allocation0]]
  $region77: #{transformer_forward.5} parent=0
    _
  %s14 = ssub.s32 1, %s12
  %s15 = scalar_select 0, %s14, %s12
  loop: start=0, step=1, limit=4
  $region2: #{transformer_forward.5} parent=0 // loop_pre_header
    _
  $region3: #{transformer_forward.5} parent=0 // loop_header
    %s17 = sphi 0, %s21
    %p18 = scmp.ge.s32.totalorder %s17, 4
    %s27 = sphi 0, %s29
    %s30 = sphi 0, %s27
    %s31 = sphi 0, %s30
    %s47 = sphi 0, %s31
    %s51 = sphi 0, %s51
    %s53 = sphi 0, %s51
    %s54 = sphi 0, %s53
    %s68 = sphi 0, %s54
    %s72 = sphi 0, %s72
    %s74 = sphi 0, %s72
    %s75 = sphi 0, %s74
    %s89 = sphi 0, %s75
    %s93 = sphi 0, %s93
    %s95 = sphi 0, %s93
    %s96 = sphi 0, %s95
    %s110 = sphi 0, %s96
    %s114 = sphi 0, %s114
    %s116 = sphi 0, %s114
    %s117 = sphi 0, %s116
    %s131 = sphi 0, %s117
    %s135 = sphi 0, %s135
    %s137 = sphi 0, %s135
    %s138 = sphi 0, %s137
    %s152 = sphi 0, %s138
    %s158 = sphi 0, %s160
    %s161 = sphi 0, %s158
    %s162 = sphi 0, %s161
    %s178 = sphi 0, %s162
    %s184 = sphi 0, %s186
    %s187 = sphi 0, %s184
    %s188 = sphi 0, %s187
    %s204 = sphi 0, %s188
    %s210 = sphi 0, %s212
    %s213 = sphi 0, %s210
    %s214 = sphi 0, %s213
    %s230 = sphi 0, %s214
    %s234 = sphi 0, %s234
    %s236 = sphi 0, %s234
    %s237 = sphi 0, %s236
    %s251 = sphi 0, %s237
    %s255 = sphi 0, %s255
    %s257 = sphi 0, %s255
    %s258 = sphi 0, %s257
    %s272 = sphi 0, %s258
    %s278 = sphi 0, %s280
    %s281 = sphi 0, %s278
    %s282 = sphi 0, %s281
    %s298 = sphi 0, %s282
  $region4: #{transformer_forward.5} parent=0 // loop_header_branch
    %20 = sbr.rel (%p18) target = $region8
  $region5: #{transformer_forward.5} parent=0 // loop_body
    %s22 = ssub.s32 %s17, 1
    %s23 = ssub.s32 %s17, 2
    %s24 = sadd.s32 %s17, 1
    %s25 = ssub.s32 %s17, %s24
    %p26 = scmp.eq.s32.totalorder %s25, 0
    %s28 = sadd.s32 %s27, 1
    %s29 = scalar_select %p26, %s27, %s28
    %p32 = pneg %p26
    %p33 = scmp.eq.s32.totalorder %s17, 1
    %p34 = por %p32, %p33
    %p35 = scmp.ne.s32.totalorder %s27, %s30
    %p36 = scmp.eq.s32.totalorder %s17, 0
    %p37 = por %p35, %p36
    %p38 = scmp.ne.s32.totalorder %s27, %s30
    %p39 = scmp.eq.s32.totalorder %s22, 1
    %p40 = por %p38, %p39
    %p41 = scmp.ne.s32.totalorder %s30, %s31
    %p42 = scmp.eq.s32.totalorder %s22, 0
    %p43 = por %p41, %p42
    %p44 = scmp.ne.s32.totalorder %s30, %s31
    %p45 = scmp.eq.s32.totalorder %s23, 1
    %p46 = por %p44, %p45
    %p48 = scmp.ne.s32.totalorder %s31, %s47
    %p49 = scmp.eq.s32.totalorder %s23, 0
    %p50 = por %p48, %p49
    %s52 = sadd.s32 %s51, 1
    %p55 = scmp.eq.s32.totalorder %s17, 1
    %p56 = scmp.ne.s32.totalorder %s51, %s53
    %p57 = scmp.eq.s32.totalorder %s17, 0
    %p58 = por %p56, %p57
    %p59 = scmp.ne.s32.totalorder %s51, %s53
    %p60 = scmp.eq.s32.totalorder %s22, 1
    %p61 = por %p59, %p60
    %p62 = scmp.ne.s32.totalorder %s53, %s54
    %p63 = scmp.eq.s32.totalorder %s22, 0
    %p64 = por %p62, %p63
    %p65 = scmp.ne.s32.totalorder %s53, %s54
    %p66 = scmp.eq.s32.totalorder %s23, 1
    %p67 = por %p65, %p66
    %p69 = scmp.ne.s32.totalorder %s54, %s68
    %p70 = scmp.eq.s32.totalorder %s23, 0
    %p71 = por %p69, %p70
    %s73 = sadd.s32 %s72, 1
    %p76 = scmp.eq.s32.totalorder %s17, 1
    %p77 = scmp.ne.s32.totalorder %s72, %s74
    %p78 = scmp.eq.s32.totalorder %s17, 0
    %p79 = por %p77, %p78
    %p80 = scmp.ne.s32.totalorder %s72, %s74
    %p81 = scmp.eq.s32.totalorder %s22, 1
    %p82 = por %p80, %p81
    %p83 = scmp.ne.s32.totalorder %s74, %s75
    %p84 = scmp.eq.s32.totalorder %s22, 0
    %p85 = por %p83, %p84
    %p86 = scmp.ne.s32.totalorder %s74, %s75
    %p87 = scmp.eq.s32.totalorder %s23, 1
    %p88 = por %p86, %p87
    %p90 = scmp.ne.s32.totalorder %s75, %s89
    %p91 = scmp.eq.s32.totalorder %s23, 0
    %p92 = por %p90, %p91
    %s94 = sadd.s32 %s93, 1
    %p97 = scmp.eq.s32.totalorder %s17, 1
    %p98 = scmp.ne.s32.totalorder %s93, %s95
    %p99 = scmp.eq.s32.totalorder %s17, 0
    %p100 = por %p98, %p99
    %p101 = scmp.ne.s32.totalorder %s93, %s95
    %p102 = scmp.eq.s32.totalorder %s22, 1
    %p103 = por %p101, %p102
    %p104 = scmp.ne.s32.totalorder %s95, %s96
    %p105 = scmp.eq.s32.totalorder %s22, 0
    %p106 = por %p104, %p105
    %p107 = scmp.ne.s32.totalorder %s95, %s96
    %p108 = scmp.eq.s32.totalorder %s23, 1
    %p109 = por %p107, %p108
    %p111 = scmp.ne.s32.totalorder %s96, %s110
    %p112 = scmp.eq.s32.totalorder %s23, 0
    %p113 = por %p111, %p112
    %s115 = sadd.s32 %s114, 1
    %p118 = scmp.eq.s32.totalorder %s17, 1
    %p119 = scmp.ne.s32.totalorder %s114, %s116
    %p120 = scmp.eq.s32.totalorder %s17, 0
    %p121 = por %p119, %p120
    %p122 = scmp.ne.s32.totalorder %s114, %s116
    %p123 = scmp.eq.s32.totalorder %s22, 1
    %p124 = por %p122, %p123
    %p125 = scmp.ne.s32.totalorder %s116, %s117
    %p126 = scmp.eq.s32.totalorder %s22, 0
    %p127 = por %p125, %p126
    %p128 = scmp.ne.s32.totalorder %s116, %s117
    %p129 = scmp.eq.s32.totalorder %s23, 1
    %p130 = por %p128, %p129
    %p132 = scmp.ne.s32.totalorder %s117, %s131
    %p133 = scmp.eq.s32.totalorder %s23, 0
    %p134 = por %p132, %p133
    %s136 = sadd.s32 %s135, 1
    %p139 = scmp.eq.s32.totalorder %s17, 1
    %p140 = scmp.ne.s32.totalorder %s135, %s137
    %p141 = scmp.eq.s32.totalorder %s17, 0
    %p142 = por %p140, %p141
    %p143 = scmp.ne.s32.totalorder %s135, %s137
    %p144 = scmp.eq.s32.totalorder %s22, 1
    %p145 = por %p143, %p144
    %p146 = scmp.ne.s32.totalorder %s137, %s138
    %p147 = scmp.eq.s32.totalorder %s22, 0
    %p148 = por %p146, %p147
    %p149 = scmp.ne.s32.totalorder %s137, %s138
    %p150 = scmp.eq.s32.totalorder %s23, 1
    %p151 = por %p149, %p150
    %p153 = scmp.ne.s32.totalorder %s138, %s152
    %p154 = scmp.eq.s32.totalorder %s23, 0
    %p155 = por %p153, %p154
    %s156 = ssub.s32 %s17, %s24
    %p157 = scmp.eq.s32.totalorder %s156, 0
    %s159 = sadd.s32 %s158, 1
    %s160 = scalar_select %p157, %s158, %s159
    %p163 = pneg %p157
    %p164 = scmp.eq.s32.totalorder %s17, 1
    %p165 = por %p163, %p164
    %p166 = scmp.ne.s32.totalorder %s158, %s161
    %p167 = scmp.eq.s32.totalorder %s17, 0
    %p168 = por %p166, %p167
    %p169 = scmp.ne.s32.totalorder %s158, %s161
    %p170 = scmp.eq.s32.totalorder %s22, 1
    %p171 = por %p169, %p170
    %p172 = scmp.ne.s32.totalorder %s161, %s162
    %p173 = scmp.eq.s32.totalorder %s22, 0
    %p174 = por %p172, %p173
    %p175 = scmp.ne.s32.totalorder %s161, %s162
    %p176 = scmp.eq.s32.totalorder %s23, 1
    %p177 = por %p175, %p176
    %p179 = scmp.ne.s32.totalorder %s162, %s178
    %p180 = scmp.eq.s32.totalorder %s23, 0
    %p181 = por %p179, %p180
    %s182 = ssub.s32 %s17, %s24
    %p183 = scmp.eq.s32.totalorder %s182, 0
    %s185 = sadd.s32 %s184, 1
    %s186 = scalar_select %p183, %s184, %s185
    %p189 = pneg %p183
    %p190 = scmp.eq.s32.totalorder %s17, 1
    %p191 = por %p189, %p190
    %p192 = scmp.ne.s32.totalorder %s184, %s187
    %p193 = scmp.eq.s32.totalorder %s17, 0
    %p194 = por %p192, %p193
    %p195 = scmp.ne.s32.totalorder %s184, %s187
    %p196 = scmp.eq.s32.totalorder %s22, 1
    %p197 = por %p195, %p196
    %p198 = scmp.ne.s32.totalorder %s187, %s188
    %p199 = scmp.eq.s32.totalorder %s22, 0
    %p200 = por %p198, %p199
    %p201 = scmp.ne.s32.totalorder %s187, %s188
    %p202 = scmp.eq.s32.totalorder %s23, 1
    %p203 = por %p201, %p202
    %p205 = scmp.ne.s32.totalorder %s188, %s204
    %p206 = scmp.eq.s32.totalorder %s23, 0
    %p207 = por %p205, %p206
    %s208 = ssub.s32 %s17, %s24
    %p209 = scmp.eq.s32.totalorder %s208, 0
    %s211 = sadd.s32 %s210, 1
    %s212 = scalar_select %p209, %s210, %s211
    %p215 = pneg %p209
    %p216 = scmp.eq.s32.totalorder %s17, 1
    %p217 = por %p215, %p216
    %p218 = scmp.ne.s32.totalorder %s210, %s213
    %p219 = scmp.eq.s32.totalorder %s17, 0
    %p220 = por %p218, %p219
    %p221 = scmp.ne.s32.totalorder %s210, %s213
    %p222 = scmp.eq.s32.totalorder %s22, 1
    %p223 = por %p221, %p222
    %p224 = scmp.ne.s32.totalorder %s213, %s214
    %p225 = scmp.eq.s32.totalorder %s22, 0
    %p226 = por %p224, %p225
    %p227 = scmp.ne.s32.totalorder %s213, %s214
    %p228 = scmp.eq.s32.totalorder %s23, 1
    %p229 = por %p227, %p228
    %p231 = scmp.ne.s32.totalorder %s214, %s230
    %p232 = scmp.eq.s32.totalorder %s23, 0
    %p233 = por %p231, %p232
    %s235 = sadd.s32 %s234, 1
    %p238 = scmp.eq.s32.totalorder %s17, 1
    %p239 = scmp.ne.s32.totalorder %s234, %s236
    %p240 = scmp.eq.s32.totalorder %s17, 0
    %p241 = por %p239, %p240
    %p242 = scmp.ne.s32.totalorder %s234, %s236
    %p243 = scmp.eq.s32.totalorder %s22, 1
    %p244 = por %p242, %p243
    %p245 = scmp.ne.s32.totalorder %s236, %s237
    %p246 = scmp.eq.s32.totalorder %s22, 0
    %p247 = por %p245, %p246
    %p248 = scmp.ne.s32.totalorder %s236, %s237
    %p249 = scmp.eq.s32.totalorder %s23, 1
    %p250 = por %p248, %p249
    %p252 = scmp.ne.s32.totalorder %s237, %s251
    %p253 = scmp.eq.s32.totalorder %s23, 0
    %p254 = por %p252, %p253
    %s256 = sadd.s32 %s255, 1
    %p259 = scmp.eq.s32.totalorder %s17, 1
    %p260 = scmp.ne.s32.totalorder %s255, %s257
    %p261 = scmp.eq.s32.totalorder %s17, 0
    %p262 = por %p260, %p261
    %p263 = scmp.ne.s32.totalorder %s255, %s257
    %p264 = scmp.eq.s32.totalorder %s22, 1
    %p265 = por %p263, %p264
    %p266 = scmp.ne.s32.totalorder %s257, %s258
    %p267 = scmp.eq.s32.totalorder %s22, 0
    %p268 = por %p266, %p267
    %p269 = scmp.ne.s32.totalorder %s257, %s258
    %p270 = scmp.eq.s32.totalorder %s23, 1
    %p271 = por %p269, %p270
    %p273 = scmp.ne.s32.totalorder %s258, %s272
    %p274 = scmp.eq.s32.totalorder %s23, 0
    %p275 = por %p273, %p274
    %s276 = ssub.s32 %s17, %s24
    %p277 = scmp.eq.s32.totalorder %s276, 0
    %s279 = sadd.s32 %s278, 1
    %s280 = scalar_select %p277, %s278, %s279
    %p283 = pneg %p277
    %p284 = scmp.eq.s32.totalorder %s17, 1
    %p285 = por %p283, %p284
    %p286 = scmp.ne.s32.totalorder %s278, %s281
    %p287 = scmp.eq.s32.totalorder %s17, 0
    %p288 = por %p286, %p287
    %p289 = scmp.ne.s32.totalorder %s278, %s281
    %p290 = scmp.eq.s32.totalorder %s22, 1
    %p291 = por %p289, %p290
    %p292 = scmp.ne.s32.totalorder %s281, %s282
    %p293 = scmp.eq.s32.totalorder %s22, 0
    %p294 = por %p292, %p293
    %p295 = scmp.ne.s32.totalorder %s281, %s282
    %p296 = scmp.eq.s32.totalorder %s23, 1
    %p297 = por %p295, %p296
    %p299 = scmp.ne.s32.totalorder %s282, %s298
    %p300 = scmp.eq.s32.totalorder %s23, 0
    %p301 = por %p299, %p300
    %p302 = scmp.le.s32.totalorder 1, %s17
    %p303 = scmp.lt.s32.totalorder %s17, 3
    %p304 = pnand %p302, %p303
    %p305 = pneg %p304
    // Predicated region
    $region9: #{transformer_forward.5} parent=5 // pred_check
      _
    $region10: #{transformer_forward.5} parent=5 // pred_check_branch
      %307 = sbr.rel (%p304) target = $region12
    $region11: #{transformer_forward.5} parent=5 // pred_region
      %s308 = ssub.s32 %s17, 1
      // Predicated region
      $region13: #{transformer_forward.5} parent=11 // pred_check
        %p309 = pneg %p64
      $region14: #{transformer_forward.5} parent=11 // pred_check_branch
        %311 = sbr.rel (%p309) target = $region16
      $region15: #{transformer_forward.5} parent=11 // pred_region
        _
      $region16: #{transformer_forward.5} parent=11 // pred_fallthru
        _
      // Predicated region
      $region17: #{transformer_forward.5} parent=11 // pred_check
        %p312 = pneg %p85
      $region18: #{transformer_forward.5} parent=11 // pred_check_branch
        %314 = sbr.rel (%p312) target = $region20
      $region19: #{transformer_forward.5} parent=11 // pred_region
        _
      $region20: #{transformer_forward.5} parent=11 // pred_fallthru
        _
      // Predicated region
      $region21: #{transformer_forward.5} parent=11 // pred_check
        %p315 = pneg %p106
      $region22: #{transformer_forward.5} parent=11 // pred_check_branch
        %317 = sbr.rel (%p315) target = $region24
      $region23: #{transformer_forward.5} parent=11 // pred_region
        _
      $region24: #{transformer_forward.5} parent=11 // pred_fallthru
        _
      // Predicated region
      $region25: #{transformer_forward.5} parent=11 // pred_check
        %p318 = pneg %p127
      $region26: #{transformer_forward.5} parent=11 // pred_check_branch
        %320 = sbr.rel (%p318) target = $region28
      $region27: #{transformer_forward.5} parent=11 // pred_region
        _
      $region28: #{transformer_forward.5} parent=11 // pred_fallthru
        _
      // Predicated region
      $region29: #{transformer_forward.5} parent=11 // pred_check
        %p321 = pneg %p148
      $region30: #{transformer_forward.5} parent=11 // pred_check_branch
        %323 = sbr.rel (%p321) target = $region32
      $region31: #{transformer_forward.5} parent=11 // pred_region
        _
      $region32: #{transformer_forward.5} parent=11 // pred_fallthru
        _
      // Predicated region
      $region33: #{transformer_forward.5} parent=11 // pred_check
        %p324 = pneg %p247
      $region34: #{transformer_forward.5} parent=11 // pred_check_branch
        %326 = sbr.rel (%p324) target = $region36
      $region35: #{transformer_forward.5} parent=11 // pred_region
        _
      $region36: #{transformer_forward.5} parent=11 // pred_fallthru
        _
      // Predicated region
      $region37: #{transformer_forward.5} parent=11 // pred_check
        %p327 = pneg %p268
      $region38: #{transformer_forward.5} parent=11 // pred_check_branch
        %329 = sbr.rel (%p327) target = $region40
      $region39: #{transformer_forward.5} parent=11 // pred_region
        _
      $region40: #{transformer_forward.5} parent=11 // pred_fallthru
        _
    $region12: #{transformer_forward.5} parent=5 // pred_fallthru
      _
    %p330 = scmp.lt.s32.totalorder %s17, 2
    // Predicated region
    $region41: #{transformer_forward.5} parent=5 // pred_check
      %p331 = pneg %p330
    $region42: #{transformer_forward.5} parent=5 // pred_check_branch
      %333 = sbr.rel (%p331) target = $region44
    $region43: #{transformer_forward.5} parent=5 // pred_region
      // Predicated region
      $region45: #{transformer_forward.5} parent=43 // pred_check
        %p334 = pneg %p37
      $region46: #{transformer_forward.5} parent=43 // pred_check_branch
        %336 = sbr.rel (%p334) target = $region48
      $region47: #{transformer_forward.5} parent=43 // pred_region
        %p337 = scmp.lt.s32.totalorder %s17, 1
        %s338 = scalar_select %p337, %s17, 1
        %s339 = smul.addr %s338, 16
        %s340 = smul.addr %s339, 8
        %s341 = scalar_lea.vmem %s0, %s340
      $region48: #{transformer_forward.5} parent=43 // pred_fallthru
        _
      // Predicated region
      $region49: #{transformer_forward.5} parent=43 // pred_check
        %p342 = pneg %p168
      $region50: #{transformer_forward.5} parent=43 // pred_check_branch
        %344 = sbr.rel (%p342) target = $region52
      $region51: #{transformer_forward.5} parent=43 // pred_region
        %p345 = scmp.lt.s32.totalorder %s17, 1
        %s346 = scalar_select %p345, %s17, 1
        %s347 = smul.addr %s346, 16
        %s348 = smul.addr %s347, 8
        %s349 = scalar_lea.vmem %s6, %s348
      $region52: #{transformer_forward.5} parent=43 // pred_fallthru
        _
      // Predicated region
      $region53: #{transformer_forward.5} parent=43 // pred_check
        %p350 = pneg %p194
      $region54: #{transformer_forward.5} parent=43 // pred_check_branch
        %352 = sbr.rel (%p350) target = $region56
      $region55: #{transformer_forward.5} parent=43 // pred_region
        %p353 = scmp.lt.s32.totalorder %s17, 1
        %s354 = scalar_select %p353, %s17, 1
        %s355 = smul.addr %s354, 16
        %s356 = smul.addr %s355, 8
        %s357 = scalar_lea.vmem %s7, %s356
      $region56: #{transformer_forward.5} parent=43 // pred_fallthru
        _
      // Predicated region
      $region57: #{transformer_forward.5} parent=43 // pred_check
        %p358 = pneg %p220
      $region58: #{transformer_forward.5} parent=43 // pred_check_branch
        %360 = sbr.rel (%p358) target = $region60
      $region59: #{transformer_forward.5} parent=43 // pred_region
        %p361 = scmp.lt.s32.totalorder %s17, 1
        %s362 = scalar_select %p361, %s17, 1
        %s363 = smul.addr %s362, 4
        %s364 = smul.addr %s363, 8
        %s365 = scalar_lea.vmem %s8, %s364
      $region60: #{transformer_forward.5} parent=43 // pred_fallthru
        _
    $region44: #{transformer_forward.5} parent=5 // pred_fallthru
      _
    %p366 = scmp.le.s32.totalorder 1, %s17
    %p367 = scmp.lt.s32.totalorder %s17, 3
    %p368 = pnand %p366, %p367
    %p369 = pneg %p368
    // Predicated region
    $region61: #{transformer_forward.5} parent=5 // pred_check
      _
    $region62: #{transformer_forward.5} parent=5 // pred_check_branch
      %371 = sbr.rel (%p368) target = $region64
    $region63: #{transformer_forward.5} parent=5 // pred_region
      %s372 = ssub.s32 %s17, 1
      %p373 = scmp.lt.s32.totalorder %s22, 1
      %s374 = scalar_select %p373, %s22, 1
      %s375 = smul.addr %s374, 16
      %s376 = smul.addr %s375, 8
      %s377 = scalar_lea.vmem %s0, %s376
      %p378 = pneg %p43
      %p379 = pneg %p40
      %p380 = pneg %p64
      %p381 = pneg %p61
      %p382 = pneg %p85
      %p383 = pneg %p82
      %p384 = pneg %p106
      %p385 = pneg %p103
      %p386 = pneg %p127
      %p387 = pneg %p124
      %p388 = pneg %p148
      %p389 = pneg %p145
      %p390 = scmp.lt.s32.totalorder %s22, 1
      %s391 = scalar_select %p390, %s22, 1
      %s392 = smul.addr %s391, 16
      %s393 = smul.addr %s392, 8
      %s394 = scalar_lea.vmem %s6, %s393
      %p395 = pneg %p174
      %p396 = pneg %p171
      %p397 = scmp.lt.s32.totalorder %s22, 1
      %s398 = scalar_select %p397, %s22, 1
      %s399 = smul.addr %s398, 16
      %s400 = smul.addr %s399, 8
      %s401 = scalar_lea.vmem %s7, %s400
      %p402 = pneg %p200
      %p403 = pneg %p197
      %p404 = scmp.lt.s32.totalorder %s22, 1
      %s405 = scalar_select %p404, %s22, 1
      %s406 = smul.addr %s405, 4
      %s407 = smul.addr %s406, 8
      %s408 = scalar_lea.vmem %s8, %s407
      %p409 = pneg %p226
      %p410 = pneg %p223
      %p411 = pneg %p247
      %p412 = pneg %p244
      %p413 = pneg %p268
      %p414 = pneg %p265
      %p415 = pneg %p294
      %p416 = pneg %p291
      %p417 = scmp.lt.s32.totalorder %s22, 1
      %s418 = scalar_select %p417, %s22, 1
      %s419 = smul.addr %s418, 16
      %s420 = smul.addr %s419, 8
      %s421 = scalar_lea.vmem %s11, %s420
      %p422 = scmp.lt.s32.totalorder %s22, 1
      %s423 = scalar_select %p422, %s22, 1
      %s424 = smul.addr %s423, 16
      %s425 = smul.addr %s424, 8
      %s426 = scalar_lea.vmem %s0, %s425
      %p427 = scmp.lt.s32.totalorder %s22, 1
      %s428 = scalar_select %p427, %s22, 1
      %s429 = smul.addr %s428, 16
      %s430 = smul.addr %s429, 8
      %s431 = scalar_lea.vmem %s6, %s430
      %p432 = scmp.lt.s32.totalorder %s22, 1
      %s433 = scalar_select %p432, %s22, 1
      %s434 = smul.addr %s433, 16
      %s435 = smul.addr %s434, 8
      %s436 = scalar_lea.vmem %s7, %s435
      %p437 = scmp.lt.s32.totalorder %s22, 1
      %s438 = scalar_select %p437, %s22, 1
      %s439 = smul.addr %s438, 4
      %s440 = smul.addr %s439, 8
      %s441 = scalar_lea.vmem %s8, %s440
      %p442 = scmp.lt.s32.totalorder %s22, 1
      %s443 = scalar_select %p442, %s22, 1
      %s444 = smul.addr %s443, 16
      %s445 = smul.addr %s444, 8
      %s446 = scalar_lea.vmem %s11, %s445
      %v448 = vld [vmem:[%s426] sm:$0xff]
      %v449 = vld [vmem:[%s426 + $0x8] sm:$0xff]
      %v450 = vld [vmem:[%s426 + $0x10] sm:$0xff]
      %v451 = vld [vmem:[%s426 + $0x18] sm:$0xff]
      %v452 = vld [vmem:[%s426 + $0x20] sm:$0xff]
      %v453 = vld [vmem:[%s426 + $0x28] sm:$0xff]
      %v454 = vld [vmem:[%s426 + $0x30] sm:$0xff]
      %v455 = vld [vmem:[%s426 + $0x38] sm:$0xff]
      %v456 = vld [vmem:[%s426 + $0x40] sm:$0xff]
      %v457 = vld [vmem:[%s426 + $0x48] sm:$0xff]
      %v458 = vld [vmem:[%s426 + $0x50] sm:$0xff]
      %v459 = vld [vmem:[%s426 + $0x58] sm:$0xff]
      %v460 = vld [vmem:[%s426 + $0x60] sm:$0xff]
      %v461 = vld [vmem:[%s426 + $0x68] sm:$0xff]
      %v462 = vld [vmem:[%s426 + $0x70] sm:$0xff]
      %v463 = vld [vmem:[%s426 + $0x78] sm:$0xff]
      %v464 = vld [vmem:[%s1] sm:$0x1]
      %v465 = vld [vmem:[%s2] sm:$0x1]
      %vm466 = vcmask 261120
      %v467 = vsel %vm466, %v448, 0.0
      %468 = vadd.xlane.f32.xlu0 %v467
      %v469 = vpop.xlane.xlu0 %468
      %v470 = vsel %vm466, %v449, 0.0
      %471 = vadd.xlane.f32.xlu0 %v470
      %v472 = vpop.xlane.xlu0 %471
      %v473 = vsel %vm466, %v450, 0.0
      %474 = vadd.xlane.f32.xlu0 %v473
      %v475 = vpop.xlane.xlu0 %474
      %v476 = vsel %vm466, %v451, 0.0
      %477 = vadd.xlane.f32.xlu0 %v476
      %v478 = vpop.xlane.xlu0 %477
      %v479 = vsel %vm466, %v452, 0.0
      %480 = vadd.xlane.f32.xlu0 %v479
      %v481 = vpop.xlane.xlu0 %480
      %v482 = vsel %vm466, %v453, 0.0
      %483 = vadd.xlane.f32.xlu0 %v482
      %v484 = vpop.xlane.xlu0 %483
      %v485 = vsel %vm466, %v454, 0.0
      %486 = vadd.xlane.f32.xlu0 %v485
      %v487 = vpop.xlane.xlu0 %486
      %v488 = vsel %vm466, %v455, 0.0
      %489 = vadd.xlane.f32.xlu0 %v488
      %v490 = vpop.xlane.xlu0 %489
      %v491 = vsel %vm466, %v456, 0.0
      %492 = vadd.xlane.f32.xlu0 %v491
      %v493 = vpop.xlane.xlu0 %492
      %v494 = vsel %vm466, %v457, 0.0
      %495 = vadd.xlane.f32.xlu0 %v494
      %v496 = vpop.xlane.xlu0 %495
      %v497 = vsel %vm466, %v458, 0.0
      %498 = vadd.xlane.f32.xlu0 %v497
      %v499 = vpop.xlane.xlu0 %498
      %v500 = vsel %vm466, %v459, 0.0
      %501 = vadd.xlane.f32.xlu0 %v500
      %v502 = vpop.xlane.xlu0 %501
      %v503 = vsel %vm466, %v460, 0.0
      %504 = vadd.xlane.f32.xlu0 %v503
      %v505 = vpop.xlane.xlu0 %504
      %v506 = vsel %vm466, %v461, 0.0
      %507 = vadd.xlane.f32.xlu0 %v506
      %v508 = vpop.xlane.xlu0 %507
      %v509 = vsel %vm466, %v462, 0.0
      %510 = vadd.xlane.f32.xlu0 %v509
      %v511 = vpop.xlane.xlu0 %510
      %v512 = vsel %vm466, %v463, 0.0
      %513 = vadd.xlane.f32.xlu0 %v512
      %v514 = vpop.xlane.xlu0 %513
      %v515 = vrcp.pop 32.0
      %v516 = vmul.f32 32.0, %v515
      %v517 = vsub.f32 1.0, %v516
      %v518 = vmul.f32 %v515, %v517
      %v519 = vadd.f32 %v515, %v518
      %vm520 = vweird.f32 %v515
      %v521 = vsel %vm520, %v515, %v519
      %v522 = vmul.f32 %v469, %v521
      %v523 = vmul.f32 %v472, %v521
      %v524 = vmul.f32 %v475, %v521
      %v525 = vmul.f32 %v478, %v521
      %v526 = vmul.f32 %v481, %v521
      %v527 = vmul.f32 %v484, %v521
      %v528 = vmul.f32 %v487, %v521
      %v529 = vmul.f32 %v490, %v521
      %v530 = vmul.f32 %v493, %v521
      %v531 = vmul.f32 %v496, %v521
      %v532 = vmul.f32 %v499, %v521
      %v533 = vmul.f32 %v502, %v521
      %v534 = vmul.f32 %v505, %v521
      %v535 = vmul.f32 %v508, %v521
      %v536 = vmul.f32 %v511, %v521
      %v537 = vmul.f32 %v514, %v521
      %v538 = vsub.f32 %v448, %v522
      %v539 = vsub.f32 %v449, %v523
      %v540 = vsub.f32 %v450, %v524
      %v541 = vsub.f32 %v451, %v525
      %v542 = vsub.f32 %v452, %v526
      %v543 = vsub.f32 %v453, %v527
      %v544 = vsub.f32 %v454, %v528
      %v545 = vsub.f32 %v455, %v529
      %v546 = vsub.f32 %v456, %v530
      %v547 = vsub.f32 %v457, %v531
      %v548 = vsub.f32 %v458, %v532
      %v549 = vsub.f32 %v459, %v533
      %v550 = vsub.f32 %v460, %v534
      %v551 = vsub.f32 %v461, %v535
      %v552 = vsub.f32 %v462, %v536
      %v553 = vsub.f32 %v463, %v537
      %v554 = vmul.f32 %v538, %v538
      %v555 = vmul.f32 %v539, %v539
      %v556 = vmul.f32 %v540, %v540
      %v557 = vmul.f32 %v541, %v541
      %v558 = vmul.f32 %v542, %v542
      %v559 = vmul.f32 %v543, %v543
      %v560 = vmul.f32 %v544, %v544
      %v561 = vmul.f32 %v545, %v545
      %v562 = vmul.f32 %v546, %v546
      %v563 = vmul.f32 %v547, %v547
      %v564 = vmul.f32 %v548, %v548
      %v565 = vmul.f32 %v549, %v549
      %v566 = vmul.f32 %v550, %v550
      %v567 = vmul.f32 %v551, %v551
      %v568 = vmul.f32 %v552, %v552
      %v569 = vmul.f32 %v553, %v553
      %v570 = vsel %vm466, %v554, 0.0
      %571 = vadd.xlane.f32.xlu0 %v570
      %v572 = vpop.xlane.xlu0 %571
      %v573 = vsel %vm466, %v555, 0.0
      %574 = vadd.xlane.f32.xlu0 %v573
      %v575 = vpop.xlane.xlu0 %574
      %v576 = vsel %vm466, %v556, 0.0
      %577 = vadd.xlane.f32.xlu0 %v576
      %v578 = vpop.xlane.xlu0 %577
      %v579 = vsel %vm466, %v557, 0.0
      %580 = vadd.xlane.f32.xlu0 %v579
      %v581 = vpop.xlane.xlu0 %580
      %v582 = vsel %vm466, %v558, 0.0
      %583 = vadd.xlane.f32.xlu0 %v582
      %v584 = vpop.xlane.xlu0 %583
      %v585 = vsel %vm466, %v559, 0.0
      %586 = vadd.xlane.f32.xlu0 %v585
      %v587 = vpop.xlane.xlu0 %586
      %v588 = vsel %vm466, %v560, 0.0
      %589 = vadd.xlane.f32.xlu0 %v588
      %v590 = vpop.xlane.xlu0 %589
      %v591 = vsel %vm466, %v561, 0.0
      %592 = vadd.xlane.f32.xlu0 %v591
      %v593 = vpop.xlane.xlu0 %592
      %v594 = vsel %vm466, %v562, 0.0
      %595 = vadd.xlane.f32.xlu0 %v594
      %v596 = vpop.xlane.xlu0 %595
      %v597 = vsel %vm466, %v563, 0.0
      %598 = vadd.xlane.f32.xlu0 %v597
      %v599 = vpop.xlane.xlu0 %598
      %v600 = vsel %vm466, %v564, 0.0
      %601 = vadd.xlane.f32.xlu0 %v600
      %v602 = vpop.xlane.xlu0 %601
      %v603 = vsel %vm466, %v565, 0.0
      %604 = vadd.xlane.f32.xlu0 %v603
      %v605 = vpop.xlane.xlu0 %604
      %v606 = vsel %vm466, %v566, 0.0
      %607 = vadd.xlane.f32.xlu0 %v606
      %v608 = vpop.xlane.xlu0 %607
      %v609 = vsel %vm466, %v567, 0.0
      %610 = vadd.xlane.f32.xlu0 %v609
      %v611 = vpop.xlane.xlu0 %610
      %v612 = vsel %vm466, %v568, 0.0
      %613 = vadd.xlane.f32.xlu0 %v612
      %v614 = vpop.xlane.xlu0 %613
      %v615 = vsel %vm466, %v569, 0.0
      %616 = vadd.xlane.f32.xlu0 %v615
      %v617 = vpop.xlane.xlu0 %616
      %v618 = vmul.f32 %v572, %v521
      %v619 = vmul.f32 %v575, %v521
      %v620 = vmul.f32 %v578, %v521
      %v621 = vmul.f32 %v581, %v521
      %v622 = vmul.f32 %v584, %v521
      %v623 = vmul.f32 %v587, %v521
      %v624 = vmul.f32 %v590, %v521
      %v625 = vmul.f32 %v593, %v521
      %v626 = vmul.f32 %v596, %v521
      %v627 = vmul.f32 %v599, %v521
      %v628 = vmul.f32 %v602, %v521
      %v629 = vmul.f32 %v605, %v521
      %v630 = vmul.f32 %v608, %v521
      %v631 = vmul.f32 %v611, %v521
      %v632 = vmul.f32 %v614, %v521
      %v633 = vmul.f32 %v617, %v521
      %v634 = vadd.f32 %v618, 1e-05
      %v635 = vadd.f32 %v619, 1e-05
      %v636 = vadd.f32 %v620, 1e-05
      %v637 = vadd.f32 %v621, 1e-05
      %v638 = vadd.f32 %v622, 1e-05
      %v639 = vadd.f32 %v623, 1e-05
      %v640 = vadd.f32 %v624, 1e-05
      %v641 = vadd.f32 %v625, 1e-05
      %v642 = vadd.f32 %v626, 1e-05
      %v643 = vadd.f32 %v627, 1e-05
      %v644 = vadd.f32 %v628, 1e-05
      %v645 = vadd.f32 %v629, 1e-05
      %v646 = vadd.f32 %v630, 1e-05
      %v647 = vadd.f32 %v631, 1e-05
      %v648 = vadd.f32 %v632, 1e-05
      %v649 = vadd.f32 %v633, 1e-05
      %v650 = vrsqrt.pop %v634
      %v651 = vmul.f32 %v650, %v634
      %v652 = vmul.f32 %v651, %v650
      %v653 = vmul.f32 0.5, %v652
      %v654 = vsub.f32 1.5, %v653
      %v655 = vmul.f32 %v650, %v654
      %vm656 = vweird.f32 %v634
      %vm657 = vweird.f32 %v650
      %vm658 = vmor %vm656, %vm657
      %v659 = vsel %vm658, %v650, %v655
      %v660 = vrsqrt.pop %v635
      %v661 = vmul.f32 %v660, %v635
      %v662 = vmul.f32 %v661, %v660
      %v663 = vmul.f32 0.5, %v662
      %v664 = vsub.f32 1.5, %v663
      %v665 = vmul.f32 %v660, %v664
      %vm666 = vweird.f32 %v635
      %vm667 = vweird.f32 %v660
      %vm668 = vmor %vm666, %vm667
      %v669 = vsel %vm668, %v660, %v665
      %v670 = vrsqrt.pop %v636
      %v671 = vmul.f32 %v670, %v636
      %v672 = vmul.f32 %v671, %v670
      %v673 = vmul.f32 0.5, %v672
      %v674 = vsub.f32 1.5, %v673
      %v675 = vmul.f32 %v670, %v674
      %vm676 = vweird.f32 %v636
      %vm677 = vweird.f32 %v670
      %vm678 = vmor %vm676, %vm677
      %v679 = vsel %vm678, %v670, %v675
      %v680 = vrsqrt.pop %v637
      %v681 = vmul.f32 %v680, %v637
      %v682 = vmul.f32 %v681, %v680
      %v683 = vmul.f32 0.5, %v682
      %v684 = vsub.f32 1.5, %v683
      %v685 = vmul.f32 %v680, %v684
      %vm686 = vweird.f32 %v637
      %vm687 = vweird.f32 %v680
      %vm688 = vmor %vm686, %vm687
      %v689 = vsel %vm688, %v680, %v685
      %v690 = vrsqrt.pop %v638
      %v691 = vmul.f32 %v690, %v638
      %v692 = vmul.f32 %v691, %v690
      %v693 = vmul.f32 0.5, %v692
      %v694 = vsub.f32 1.5, %v693
      %v695 = vmul.f32 %v690, %v694
      %vm696 = vweird.f32 %v638
      %vm697 = vweird.f32 %v690
      %vm698 = vmor %vm696, %vm697
      %v699 = vsel %vm698, %v690, %v695
      %v700 = vrsqrt.pop %v639
      %v701 = vmul.f32 %v700, %v639
      %v702 = vmul.f32 %v701, %v700
      %v703 = vmul.f32 0.5, %v702
      %v704 = vsub.f32 1.5, %v703
      %v705 = vmul.f32 %v700, %v704
      %vm706 = vweird.f32 %v639
      %vm707 = vweird.f32 %v700
      %vm708 = vmor %vm706, %vm707
      %v709 = vsel %vm708, %v700, %v705
      %v710 = vrsqrt.pop %v640
      %v711 = vmul.f32 %v710, %v640
      %v712 = vmul.f32 %v711, %v710
      %v713 = vmul.f32 0.5, %v712
      %v714 = vsub.f32 1.5, %v713
      %v715 = vmul.f32 %v710, %v714
      %vm716 = vweird.f32 %v640
      %vm717 = vweird.f32 %v710
      %vm718 = vmor %vm716, %vm717
      %v719 = vsel %vm718, %v710, %v715
      %v720 = vrsqrt.pop %v641
      %v721 = vmul.f32 %v720, %v641
      %v722 = vmul.f32 %v721, %v720
      %v723 = vmul.f32 0.5, %v722
      %v724 = vsub.f32 1.5, %v723
      %v725 = vmul.f32 %v720, %v724
      %vm726 = vweird.f32 %v641
      %vm727 = vweird.f32 %v720
      %vm728 = vmor %vm726, %vm727
      %v729 = vsel %vm728, %v720, %v725
      %v730 = vrsqrt.pop %v642
      %v731 = vmul.f32 %v730, %v642
      %v732 = vmul.f32 %v731, %v730
      %v733 = vmul.f32 0.5, %v732
      %v734 = vsub.f32 1.5, %v733
      %v735 = vmul.f32 %v730, %v734
      %vm736 = vweird.f32 %v642
      %vm737 = vweird.f32 %v730
      %vm738 = vmor %vm736, %vm737
      %v739 = vsel %vm738, %v730, %v735
      %v740 = vrsqrt.pop %v643
      %v741 = vmul.f32 %v740, %v643
      %v742 = vmul.f32 %v741, %v740
      %v743 = vmul.f32 0.5, %v742
      %v744 = vsub.f32 1.5, %v743
      %v745 = vmul.f32 %v740, %v744
      %vm746 = vweird.f32 %v643
      %vm747 = vweird.f32 %v740
      %vm748 = vmor %vm746, %vm747
      %v749 = vsel %vm748, %v740, %v745
      %v750 = vrsqrt.pop %v644
      %v751 = vmul.f32 %v750, %v644
      %v752 = vmul.f32 %v751, %v750
      %v753 = vmul.f32 0.5, %v752
      %v754 = vsub.f32 1.5, %v753
      %v755 = vmul.f32 %v750, %v754
      %vm756 = vweird.f32 %v644
      %vm757 = vweird.f32 %v750
      %vm758 = vmor %vm756, %vm757
      %v759 = vsel %vm758, %v750, %v755
      %v760 = vrsqrt.pop %v645
      %v761 = vmul.f32 %v760, %v645
      %v762 = vmul.f32 %v761, %v760
      %v763 = vmul.f32 0.5, %v762
      %v764 = vsub.f32 1.5, %v763
      %v765 = vmul.f32 %v760, %v764
      %vm766 = vweird.f32 %v645
      %vm767 = vweird.f32 %v760
      %vm768 = vmor %vm766, %vm767
      %v769 = vsel %vm768, %v760, %v765
      %v770 = vrsqrt.pop %v646
      %v771 = vmul.f32 %v770, %v646
      %v772 = vmul.f32 %v771, %v770
      %v773 = vmul.f32 0.5, %v772
      %v774 = vsub.f32 1.5, %v773
      %v775 = vmul.f32 %v770, %v774
      %vm776 = vweird.f32 %v646
      %vm777 = vweird.f32 %v770
      %vm778 = vmor %vm776, %vm777
      %v779 = vsel %vm778, %v770, %v775
      %v780 = vrsqrt.pop %v647
      %v781 = vmul.f32 %v780, %v647
      %v782 = vmul.f32 %v781, %v780
      %v783 = vmul.f32 0.5, %v782
      %v784 = vsub.f32 1.5, %v783
      %v785 = vmul.f32 %v780, %v784
      %vm786 = vweird.f32 %v647
      %vm787 = vweird.f32 %v780
      %vm788 = vmor %vm786, %vm787
      %v789 = vsel %vm788, %v780, %v785
      %v790 = vrsqrt.pop %v648
      %v791 = vmul.f32 %v790, %v648
      %v792 = vmul.f32 %v791, %v790
      %v793 = vmul.f32 0.5, %v792
      %v794 = vsub.f32 1.5, %v793
      %v795 = vmul.f32 %v790, %v794
      %vm796 = vweird.f32 %v648
      %vm797 = vweird.f32 %v790
      %vm798 = vmor %vm796, %vm797
      %v799 = vsel %vm798, %v790, %v795
      %v800 = vrsqrt.pop %v649
      %v801 = vmul.f32 %v800, %v649
      %v802 = vmul.f32 %v801, %v800
      %v803 = vmul.f32 0.5, %v802
      %v804 = vsub.f32 1.5, %v803
      %v805 = vmul.f32 %v800, %v804
      %vm806 = vweird.f32 %v649
      %vm807 = vweird.f32 %v800
      %vm808 = vmor %vm806, %vm807
      %v809 = vsel %vm808, %v800, %v805
      %v810 = vmul.f32 %v538, %v659
      %v811 = vmul.f32 %v539, %v669
      %v812 = vmul.f32 %v540, %v679
      %v813 = vmul.f32 %v541, %v689
      %v814 = vmul.f32 %v542, %v699
      %v815 = vmul.f32 %v543, %v709
      %v816 = vmul.f32 %v544, %v719
      %v817 = vmul.f32 %v545, %v729
      %v818 = vmul.f32 %v546, %v739
      %v819 = vmul.f32 %v547, %v749
      %v820 = vmul.f32 %v548, %v759
      %v821 = vmul.f32 %v549, %v769
      %v822 = vmul.f32 %v550, %v779
      %v823 = vmul.f32 %v551, %v789
      %v824 = vmul.f32 %v552, %v799
      %v825 = vmul.f32 %v553, %v809
      %v827 = vperm.slane %v464, 0
      %v829 = vmul.f32 %v810, %v827
      %v830 = vmul.f32 %v811, %v827
      %v831 = vmul.f32 %v812, %v827
      %v832 = vmul.f32 %v813, %v827
      %v833 = vmul.f32 %v814, %v827
      %v834 = vmul.f32 %v815, %v827
      %v835 = vmul.f32 %v816, %v827
      %v836 = vmul.f32 %v817, %v827
      %v837 = vmul.f32 %v818, %v827
      %v838 = vmul.f32 %v819, %v827
      %v839 = vmul.f32 %v820, %v827
      %v840 = vmul.f32 %v821, %v827
      %v841 = vmul.f32 %v822, %v827
      %v842 = vmul.f32 %v823, %v827
      %v843 = vmul.f32 %v824, %v827
      %v844 = vmul.f32 %v825, %v827
      %v846 = vperm.slane %v465, 0
      %v848 = vadd.f32 %v829, %v846
      %v849 = vadd.f32 %v830, %v846
      %v850 = vadd.f32 %v831, %v846
      %v851 = vadd.f32 %v832, %v846
      %v852 = vadd.f32 %v833, %v846
      %v853 = vadd.f32 %v834, %v846
      %v854 = vadd.f32 %v835, %v846
      %v855 = vadd.f32 %v836, %v846
      %v856 = vadd.f32 %v837, %v846
      %v857 = vadd.f32 %v838, %v846
      %v858 = vadd.f32 %v839, %v846
      %v859 = vadd.f32 %v840, %v846
      %v860 = vadd.f32 %v841, %v846
      %v861 = vadd.f32 %v842, %v846
      %v862 = vadd.f32 %v843, %v846
      %v863 = vadd.f32 %v844, %v846
      %v864 = vpack.c.bf16 %v849, %v848
      %v865 = vpack.c.bf16 %v851, %v850
      %v866 = vpack.c.bf16 %v853, %v852
      %v867 = vpack.c.bf16 %v855, %v854
      %v868 = vpack.c.bf16 %v857, %v856
      %v869 = vpack.c.bf16 %v859, %v858
      %v870 = vpack.c.bf16 %v861, %v860
      %v871 = vpack.c.bf16 %v863, %v862
      %v872 = vld [vmem:[%s3] sm:$0xf]
      %v873 = vld [vmem:[%s3 + $0x4] sm:$0xf]
      %v874 = vld [vmem:[%s3 + $0x8] sm:$0xf]
      %v875 = vld [vmem:[%s3 + $0xc] sm:$0xf]
      %v876 = vld [vmem:[%s4] sm:$0x1]
      %v878 = vperm.slane %v876, 0
      %v884 = vunpack.c.l.b16 %v872
      %v885 = vunpack.c.l.b16 %v873
      %v886 = vunpack.c.l.b16 %v874
      %v887 = vunpack.c.l.b16 %v875
      %v888 = vpack.c.b16 %v885, %v884
      %v889 = vpack.c.b16 %v887, %v886
      %v893 = vsel %vm466, %v864, 0
      %v896 = vsel %vm466, %v865, 0
      %v899 = vsel %vm466, %v866, 0
      %v902 = vsel %vm466, %v867, 0
      %v905 = vsel %vm466, %v868, 0
      %v908 = vsel %vm466, %v869, 0
      %v911 = vsel %vm466, %v870, 0
      %v914 = vsel %vm466, %v871, 0
      %916 = vmatpush.bf16.msra.mxu0 0
      %917 = vmatpush.bf16.msra.mxu0 0
      %918 = vmatpush.bf16.msra.mxu0 0
      %919 = vmatpush.bf16.msra.mxu0 0
      %920 = vmatpush.bf16.msra.mxu0 0
      %921 = vmatpush.bf16.msra.mxu0 0
      %922 = vmatpush.bf16.msra.mxu0 %v889
      %923 = vmatpush.bf16.msra.mxu0 %v888
      %924 = vmatmul.bf16.gmra.mxu0 %v893
      %v925 = vpop.f32.mrf.mxu0
      %v926 = vadd.f32 %v878, %v925
      %v927 = vpop.f32.mrf.mxu0
      %v928 = vadd.f32 %v878, %v927
      %929 = vmatmul.bf16.gmra.mxu0 %v896
      %v930 = vpop.f32.mrf.mxu0
      %v931 = vadd.f32 %v878, %v930
      %v932 = vpop.f32.mrf.mxu0
      %v933 = vadd.f32 %v878, %v932
      %934 = vmatmul.bf16.gmra.mxu0 %v899
      %v935 = vpop.f32.mrf.mxu0
      %v936 = vadd.f32 %v878, %v935
      %v937 = vpop.f32.mrf.mxu0
      %v938 = vadd.f32 %v878, %v937
      %939 = vmatmul.bf16.gmra.mxu0 %v902
      %v940 = vpop.f32.mrf.mxu0
      %v941 = vadd.f32 %v878, %v940
      %v942 = vpop.f32.mrf.mxu0
      %v943 = vadd.f32 %v878, %v942
      %944 = vmatmul.bf16.gmra.mxu0 %v905
      %v945 = vpop.f32.mrf.mxu0
      %v946 = vadd.f32 %v878, %v945
      %v947 = vpop.f32.mrf.mxu0
      %v948 = vadd.f32 %v878, %v947
      %949 = vmatmul.bf16.gmra.mxu0 %v908
      %v950 = vpop.f32.mrf.mxu0
      %v951 = vadd.f32 %v878, %v950
      %v952 = vpop.f32.mrf.mxu0
      %v953 = vadd.f32 %v878, %v952
      %954 = vmatmul.bf16.gmra.mxu0 %v911
      %v955 = vpop.f32.mrf.mxu0
      %v956 = vadd.f32 %v878, %v955
      %v957 = vpop.f32.mrf.mxu0
      %v958 = vadd.f32 %v878, %v957
      %959 = vmatmul.bf16.gmra.mxu0 %v914
      %v960 = vpop.f32.mrf.mxu0
      %v961 = vadd.f32 %v878, %v960
      %v962 = vpop.f32.mrf.mxu0
      %v963 = vadd.f32 %v878, %v962
      %964 = vdwg.mxu0
      %v965 = vmul.f32 %v926, 0.25
      %v966 = vmul.f32 %v928, 0.25
      %v967 = vmul.f32 %v931, 0.25
      %v968 = vmul.f32 %v933, 0.25
      %v969 = vmul.f32 %v936, 0.25
      %v970 = vmul.f32 %v938, 0.25
      %v971 = vmul.f32 %v941, 0.25
      %v972 = vmul.f32 %v943, 0.25
      %v973 = vmul.f32 %v946, 0.25
      %v974 = vmul.f32 %v948, 0.25
      %v975 = vmul.f32 %v951, 0.25
      %v976 = vmul.f32 %v953, 0.25
      %v977 = vmul.f32 %v956, 0.25
      %v978 = vmul.f32 %v958, 0.25
      %v979 = vmul.f32 %v961, 0.25
      %v980 = vmul.f32 %v963, 0.25
      %v981 = vpack.c.bf16 %v926, %v926
      %v982 = vpack.c.bf16 %v928, %v928
      %v983 = vpack.c.bf16 %v931, %v931
      %v984 = vpack.c.bf16 %v933, %v933
      %v985 = vpack.c.bf16 %v936, %v936
      %v986 = vpack.c.bf16 %v938, %v938
      %v987 = vpack.c.bf16 %v941, %v941
      %v988 = vpack.c.bf16 %v943, %v943
      %v989 = vpack.c.bf16 %v946, %v946
      %v990 = vpack.c.bf16 %v948, %v948
      %v991 = vpack.c.bf16 %v951, %v951
      %v992 = vpack.c.bf16 %v953, %v953
      %v993 = vpack.c.bf16 %v956, %v956
      %v994 = vpack.c.bf16 %v958, %v958
      %v995 = vpack.c.bf16 %v961, %v961
      %v996 = vpack.c.bf16 %v963, %v963
      %v997 = vld [vmem:[%s431] sm:$0xff]
      %v998 = vld [vmem:[%s431 + $0x8] sm:$0xff]
      %v999 = vld [vmem:[%s431 + $0x10] sm:$0xff]
      %v1000 = vld [vmem:[%s431 + $0x18] sm:$0xff]
      %v1001 = vld [vmem:[%s431 + $0x20] sm:$0xff]
      %v1002 = vld [vmem:[%s431 + $0x28] sm:$0xff]
      %v1003 = vld [vmem:[%s431 + $0x30] sm:$0xff]
      %v1004 = vld [vmem:[%s431 + $0x38] sm:$0xff]
      %v1005 = vld [vmem:[%s431 + $0x40] sm:$0xff]
      %v1006 = vld [vmem:[%s431 + $0x48] sm:$0xff]
      %v1007 = vld [vmem:[%s431 + $0x50] sm:$0xff]
      %v1008 = vld [vmem:[%s431 + $0x58] sm:$0xff]
      %v1009 = vld [vmem:[%s431 + $0x60] sm:$0xff]
      %v1010 = vld [vmem:[%s431 + $0x68] sm:$0xff]
      %v1011 = vld [vmem:[%s431 + $0x70] sm:$0xff]
      %v1012 = vld [vmem:[%s431 + $0x78] sm:$0xff]
      %v1013 = vld [vmem:[%s436] sm:$0xff]
      %v1014 = vld [vmem:[%s436 + $0x8] sm:$0xff]
      %v1015 = vld [vmem:[%s436 + $0x10] sm:$0xff]
      %v1016 = vld [vmem:[%s436 + $0x18] sm:$0xff]
      %v1017 = vld [vmem:[%s436 + $0x20] sm:$0xff]
      %v1018 = vld [vmem:[%s436 + $0x28] sm:$0xff]
      %v1019 = vld [vmem:[%s436 + $0x30] sm:$0xff]
      %v1020 = vld [vmem:[%s436 + $0x38] sm:$0xff]
      %v1021 = vld [vmem:[%s436 + $0x40] sm:$0xff]
      %v1022 = vld [vmem:[%s436 + $0x48] sm:$0xff]
      %v1023 = vld [vmem:[%s436 + $0x50] sm:$0xff]
      %v1024 = vld [vmem:[%s436 + $0x58] sm:$0xff]
      %v1025 = vld [vmem:[%s436 + $0x60] sm:$0xff]
      %v1026 = vld [vmem:[%s436 + $0x68] sm:$0xff]
      %v1027 = vld [vmem:[%s436 + $0x70] sm:$0xff]
      %v1028 = vld [vmem:[%s436 + $0x78] sm:$0xff]
      %v1029 = vld [vmem:[%s5] sm:$0xf]
      %v1030 = vld [vmem:[%s5 + $0x4] sm:$0xf]
      %v1031 = vld [vmem:[%s5 + $0x8] sm:$0xf]
      %v1032 = vld [vmem:[%s5 + $0xc] sm:$0xf]
      %v1033 = vpack.c.bf16 %v966, %v965
      %v1034 = vpack.c.bf16 %v968, %v967
      %v1035 = vpack.c.bf16 %v970, %v969
      %v1036 = vpack.c.bf16 %v972, %v971
      %v1037 = vpack.c.bf16 %v974, %v973
      %v1038 = vpack.c.bf16 %v976, %v975
      %v1039 = vpack.c.bf16 %v978, %v977
      %v1040 = vpack.c.bf16 %v980, %v979
      %v1045 = vunpack.c.l.b16 %v1029
      %v1046 = vunpack.c.l.b16 %v1030
      %v1047 = vunpack.c.l.b16 %v1031
      %v1048 = vunpack.c.l.b16 %v1032
      %v1049 = vpack.c.b16 %v1046, %v1045
      %v1050 = vpack.c.b16 %v1048, %v1047
      %v1054 = vsel %vm466, %v1033, 0
      %v1057 = vsel %vm466, %v1034, 0
      %v1060 = vsel %vm466, %v1035, 0
      %v1063 = vsel %vm466, %v1036, 0
      %v1066 = vsel %vm466, %v1037, 0
      %v1069 = vsel %vm466, %v1038, 0
      %v1072 = vsel %vm466, %v1039, 0
      %v1075 = vsel %vm466, %v1040, 0
      %1077 = vmatpush.bf16.msra.mxu0 0
      %1078 = vmatpush.bf16.msra.mxu0 0
      %1079 = vmatpush.bf16.msra.mxu0 0
      %1080 = vmatpush.bf16.msra.mxu0 0
      %1081 = vmatpush.bf16.msra.mxu0 0
      %1082 = vmatpush.bf16.msra.mxu0 0
      %1083 = vmatpush.bf16.msra.mxu0 %v1050
      %1084 = vmatpush.bf16.msra.mxu0 %v1049
      %1085 = vmatmul.bf16.gmra.mxu0 %v1054
      %v1086 = vpop.f32.mrf.mxu0
      %v1087 = vadd.f32 0.0, %v1086
      %v1088 = vpop.f32.mrf.mxu0
      %v1089 = vadd.f32 0.0, %v1088
      %1090 = vmatmul.bf16.gmra.mxu0 %v1057
      %v1091 = vpop.f32.mrf.mxu0
      %v1092 = vadd.f32 0.0, %v1091
      %v1093 = vpop.f32.mrf.mxu0
      %v1094 = vadd.f32 0.0, %v1093
      %1095 = vmatmul.bf16.gmra.mxu0 %v1060
      %v1096 = vpop.f32.mrf.mxu0
      %v1097 = vadd.f32 0.0, %v1096
      %v1098 = vpop.f32.mrf.mxu0
      %v1099 = vadd.f32 0.0, %v1098
      %1100 = vmatmul.bf16.gmra.mxu0 %v1063
      %v1101 = vpop.f32.mrf.mxu0
      %v1102 = vadd.f32 0.0, %v1101
      %v1103 = vpop.f32.mrf.mxu0
      %v1104 = vadd.f32 0.0, %v1103
      %1105 = vmatmul.bf16.gmra.mxu0 %v1066
      %v1106 = vpop.f32.mrf.mxu0
      %v1107 = vadd.f32 0.0, %v1106
      %v1108 = vpop.f32.mrf.mxu0
      %v1109 = vadd.f32 0.0, %v1108
      %1110 = vmatmul.bf16.gmra.mxu0 %v1069
      %v1111 = vpop.f32.mrf.mxu0
      %v1112 = vadd.f32 0.0, %v1111
      %v1113 = vpop.f32.mrf.mxu0
      %v1114 = vadd.f32 0.0, %v1113
      %1115 = vmatmul.bf16.gmra.mxu0 %v1072
      %v1116 = vpop.f32.mrf.mxu0
      %v1117 = vadd.f32 0.0, %v1116
      %v1118 = vpop.f32.mrf.mxu0
      %v1119 = vadd.f32 0.0, %v1118
      %1120 = vmatmul.bf16.gmra.mxu0 %v1075
      %v1121 = vpop.f32.mrf.mxu0
      %v1122 = vadd.f32 0.0, %v1121
      %v1123 = vpop.f32.mrf.mxu0
      %v1124 = vadd.f32 0.0, %v1123
      %1125 = vdwg.mxu0
      %v1126 = vpack.c.bf16 %v928, %v926
      %v1127 = vpack.c.bf16 %v933, %v931
      %v1128 = vpack.c.bf16 %v938, %v936
      %v1129 = vpack.c.bf16 %v943, %v941
      %v1130 = vpack.c.bf16 %v948, %v946
      %v1131 = vpack.c.bf16 %v953, %v951
      %v1132 = vpack.c.bf16 %v958, %v956
      %v1133 = vpack.c.bf16 %v963, %v961
      %1142 = vrot.lane.b32.xlu0 %v1126, 96
      %v1143 = vpop.permute.xlu0 %1142
      %1144 = vrot.lane.b32.xlu0 %v1127, 96
      %v1145 = vpop.permute.xlu0 %1144
      %1146 = vrot.lane.b32.xlu0 %v1128, 96
      %v1147 = vpop.permute.xlu0 %1146
      %1148 = vrot.lane.b32.xlu0 %v1129, 96
      %v1149 = vpop.permute.xlu0 %1148
      %1150 = vrot.lane.b32.xlu0 %v1130, 96
      %v1151 = vpop.permute.xlu0 %1150
      %1152 = vrot.lane.b32.xlu0 %v1131, 96
      %v1153 = vpop.permute.xlu0 %1152
      %1154 = vrot.lane.b32.xlu0 %v1132, 96
      %v1155 = vpop.permute.xlu0 %1154
      %1156 = vrot.lane.b32.xlu0 %v1133, 96
      %v1157 = vpop.permute.xlu0 %1156
      %v1159 = vsel %vm466, %v1143, 0
      %v1162 = vsel %vm466, %v1145, 0
      %v1165 = vsel %vm466, %v1147, 0
      %v1168 = vsel %vm466, %v1149, 0
      %v1171 = vsel %vm466, %v1151, 0
      %v1174 = vsel %vm466, %v1153, 0
      %v1177 = vsel %vm466, %v1155, 0
      %v1180 = vsel %vm466, %v1157, 0
      %1182 = vmatpush.bf16.msra.mxu0 0
      %1183 = vmatpush.bf16.msra.mxu0 0
      %1184 = vmatpush.bf16.msra.mxu0 0
      %1185 = vmatpush.bf16.msra.mxu0 0
      %1186 = vmatpush.bf16.msra.mxu0 0
      %1187 = vmatpush.bf16.msra.mxu0 0
      %1188 = vmatpush.bf16.msra.mxu0 %v1050
      %1189 = vmatpush.bf16.msra.mxu0 %v1049
      %1190 = vmatmul.bf16.gmra.mxu0 %v1159
      %v1191 = vpop.f32.mrf.mxu0
      %v1192 = vadd.f32 0.0, %v1191
      %v1193 = vpop.f32.mrf.mxu0
      %v1194 = vadd.f32 0.0, %v1193
      %1195 = vmatmul.bf16.gmra.mxu0 %v1162
      %v1196 = vpop.f32.mrf.mxu0
      %v1197 = vadd.f32 0.0, %v1196
      %v1198 = vpop.f32.mrf.mxu0
      %v1199 = vadd.f32 0.0, %v1198
      %1200 = vmatmul.bf16.gmra.mxu0 %v1165
      %v1201 = vpop.f32.mrf.mxu0
      %v1202 = vadd.f32 0.0, %v1201
      %v1203 = vpop.f32.mrf.mxu0
      %v1204 = vadd.f32 0.0, %v1203
      %1205 = vmatmul.bf16.gmra.mxu0 %v1168
      %v1206 = vpop.f32.mrf.mxu0
      %v1207 = vadd.f32 0.0, %v1206
      %v1208 = vpop.f32.mrf.mxu0
      %v1209 = vadd.f32 0.0, %v1208
      %1210 = vmatmul.bf16.gmra.mxu0 %v1171
      %v1211 = vpop.f32.mrf.mxu0
      %v1212 = vadd.f32 0.0, %v1211
      %v1213 = vpop.f32.mrf.mxu0
      %v1214 = vadd.f32 0.0, %v1213
      %1215 = vmatmul.bf16.gmra.mxu0 %v1174
      %v1216 = vpop.f32.mrf.mxu0
      %v1217 = vadd.f32 0.0, %v1216
      %v1218 = vpop.f32.mrf.mxu0
      %v1219 = vadd.f32 0.0, %v1218
      %1220 = vmatmul.bf16.gmra.mxu0 %v1177
      %v1221 = vpop.f32.mrf.mxu0
      %v1222 = vadd.f32 0.0, %v1221
      %v1223 = vpop.f32.mrf.mxu0
      %v1224 = vadd.f32 0.0, %v1223
      %1225 = vmatmul.bf16.gmra.mxu0 %v1180
      %v1226 = vpop.f32.mrf.mxu0
      %v1227 = vadd.f32 0.0, %v1226
      %v1228 = vpop.f32.mrf.mxu0
      %v1229 = vadd.f32 0.0, %v1228
      %1230 = vdwg.mxu0
      %v1231 = vmul.f32 %v965, %v997
      %v1232 = vmul.f32 %v966, %v998
      %v1233 = vmul.f32 %v967, %v999
      %v1234 = vmul.f32 %v968, %v1000
      %v1235 = vmul.f32 %v969, %v1001
      %v1236 = vmul.f32 %v970, %v1002
      %v1237 = vmul.f32 %v971, %v1003
      %v1238 = vmul.f32 %v972, %v1004
      %v1239 = vmul.f32 %v973, %v1005
      %v1240 = vmul.f32 %v974, %v1006
      %v1241 = vmul.f32 %v975, %v1007
      %v1242 = vmul.f32 %v976, %v1008
      %v1243 = vmul.f32 %v977, %v1009
      %v1244 = vmul.f32 %v978, %v1010
      %v1245 = vmul.f32 %v979, %v1011
      %v1246 = vmul.f32 %v980, %v1012
      %v1247 = vmul.f32 %v1087, %v1013
      %v1248 = vmul.f32 %v1089, %v1014
      %v1249 = vmul.f32 %v1092, %v1015
      %v1250 = vmul.f32 %v1094, %v1016
      %v1251 = vmul.f32 %v1097, %v1017
      %v1252 = vmul.f32 %v1099, %v1018
      %v1253 = vmul.f32 %v1102, %v1019
      %v1254 = vmul.f32 %v1104, %v1020
      %v1255 = vmul.f32 %v1107, %v1021
      %v1256 = vmul.f32 %v1109, %v1022
      %v1257 = vmul.f32 %v1112, %v1023
      %v1258 = vmul.f32 %v1114, %v1024
      %v1259 = vmul.f32 %v1117, %v1025
      %v1260 = vmul.f32 %v1119, %v1026
      %v1261 = vmul.f32 %v1122, %v1027
      %v1262 = vmul.f32 %v1124, %v1028
      %v1263 = vadd.f32 %v1231, %v1247
      %v1264 = vadd.f32 %v1232, %v1248
      %v1265 = vadd.f32 %v1233, %v1249
      %v1266 = vadd.f32 %v1234, %v1250
      %v1267 = vadd.f32 %v1235, %v1251
      %v1268 = vadd.f32 %v1236, %v1252
      %v1269 = vadd.f32 %v1237, %v1253
      %v1270 = vadd.f32 %v1238, %v1254
      %v1271 = vadd.f32 %v1239, %v1255
      %v1272 = vadd.f32 %v1240, %v1256
      %v1273 = vadd.f32 %v1241, %v1257
      %v1274 = vadd.f32 %v1242, %v1258
      %v1275 = vadd.f32 %v1243, %v1259
      %v1276 = vadd.f32 %v1244, %v1260
      %v1277 = vadd.f32 %v1245, %v1261
      %v1278 = vadd.f32 %v1246, %v1262
      %v1279 = vpack.c.bf16 %v1263, %v1263
      %v1280 = vpack.c.bf16 %v1264, %v1264
      %v1281 = vpack.c.bf16 %v1265, %v1265
      %v1282 = vpack.c.bf16 %v1266, %v1266
      %v1283 = vpack.c.bf16 %v1267, %v1267
      %v1284 = vpack.c.bf16 %v1268, %v1268
      %v1285 = vpack.c.bf16 %v1269, %v1269
      %v1286 = vpack.c.bf16 %v1270, %v1270
      %v1287 = vpack.c.bf16 %v1271, %v1271
      %v1288 = vpack.c.bf16 %v1272, %v1272
      %v1289 = vpack.c.bf16 %v1273, %v1273
      %v1290 = vpack.c.bf16 %v1274, %v1274
      %v1291 = vpack.c.bf16 %v1275, %v1275
      %v1292 = vpack.c.bf16 %v1276, %v1276
      %v1293 = vpack.c.bf16 %v1277, %v1277
      %v1294 = vpack.c.bf16 %v1278, %v1278
      %1311 = vrot.lane.b32.xlu0 %v997, 32
      %v1312 = vpop.permute.xlu0 %1311
      %1313 = vrot.lane.b32.xlu0 %v998, 32
      %v1314 = vpop.permute.xlu0 %1313
      %1315 = vrot.lane.b32.xlu0 %v999, 32
      %v1316 = vpop.permute.xlu0 %1315
      %1317 = vrot.lane.b32.xlu0 %v1000, 32
      %v1318 = vpop.permute.xlu0 %1317
      %1319 = vrot.lane.b32.xlu0 %v1001, 32
      %v1320 = vpop.permute.xlu0 %1319
      %1321 = vrot.lane.b32.xlu0 %v1002, 32
      %v1322 = vpop.permute.xlu0 %1321
      %1323 = vrot.lane.b32.xlu0 %v1003, 32
      %v1324 = vpop.permute.xlu0 %1323
      %1325 = vrot.lane.b32.xlu0 %v1004, 32
      %v1326 = vpop.permute.xlu0 %1325
      %1327 = vrot.lane.b32.xlu0 %v1005, 32
      %v1328 = vpop.permute.xlu0 %1327
      %1329 = vrot.lane.b32.xlu0 %v1006, 32
      %v1330 = vpop.permute.xlu0 %1329
      %1331 = vrot.lane.b32.xlu0 %v1007, 32
      %v1332 = vpop.permute.xlu0 %1331
      %1333 = vrot.lane.b32.xlu0 %v1008, 32
      %v1334 = vpop.permute.xlu0 %1333
      %1335 = vrot.lane.b32.xlu0 %v1009, 32
      %v1336 = vpop.permute.xlu0 %1335
      %1337 = vrot.lane.b32.xlu0 %v1010, 32
      %v1338 = vpop.permute.xlu0 %1337
      %1339 = vrot.lane.b32.xlu0 %v1011, 32
      %v1340 = vpop.permute.xlu0 %1339
      %1341 = vrot.lane.b32.xlu0 %v1012, 32
      %v1342 = vpop.permute.xlu0 %1341
      %v1359 = vmul.f32 %v926, %v1312
      %v1360 = vmul.f32 %v928, %v1314
      %v1361 = vmul.f32 %v931, %v1316
      %v1362 = vmul.f32 %v933, %v1318
      %v1363 = vmul.f32 %v936, %v1320
      %v1364 = vmul.f32 %v938, %v1322
      %v1365 = vmul.f32 %v941, %v1324
      %v1366 = vmul.f32 %v943, %v1326
      %v1367 = vmul.f32 %v946, %v1328
      %v1368 = vmul.f32 %v948, %v1330
      %v1369 = vmul.f32 %v951, %v1332
      %v1370 = vmul.f32 %v953, %v1334
      %v1371 = vmul.f32 %v956, %v1336
      %v1372 = vmul.f32 %v958, %v1338
      %v1373 = vmul.f32 %v961, %v1340
      %v1374 = vmul.f32 %v963, %v1342
      %v1375 = vmul.f32 %v1192, %v1013
      %v1376 = vmul.f32 %v1194, %v1014
      %v1377 = vmul.f32 %v1197, %v1015
      %v1378 = vmul.f32 %v1199, %v1016
      %v1379 = vmul.f32 %v1202, %v1017
      %v1380 = vmul.f32 %v1204, %v1018
      %v1381 = vmul.f32 %v1207, %v1019
      %v1382 = vmul.f32 %v1209, %v1020
      %v1383 = vmul.f32 %v1212, %v1021
      %v1384 = vmul.f32 %v1214, %v1022
      %v1385 = vmul.f32 %v1217, %v1023
      %v1386 = vmul.f32 %v1219, %v1024
      %v1387 = vmul.f32 %v1222, %v1025
      %v1388 = vmul.f32 %v1224, %v1026
      %v1389 = vmul.f32 %v1227, %v1027
      %v1390 = vmul.f32 %v1229, %v1028
      %1407 = vrot.lane.b32.xlu0 %v1375, 32
      %v1408 = vpop.permute.xlu0 %1407
      %1409 = vrot.lane.b32.xlu0 %v1376, 32
      %v1410 = vpop.permute.xlu0 %1409
      %1411 = vrot.lane.b32.xlu0 %v1377, 32
      %v1412 = vpop.permute.xlu0 %1411
      %1413 = vrot.lane.b32.xlu0 %v1378, 32
      %v1414 = vpop.permute.xlu0 %1413
      %1415 = vrot.lane.b32.xlu0 %v1379, 32
      %v1416 = vpop.permute.xlu0 %1415
      %1417 = vrot.lane.b32.xlu0 %v1380, 32
      %v1418 = vpop.permute.xlu0 %1417
      %1419 = vrot.lane.b32.xlu0 %v1381, 32
      %v1420 = vpop.permute.xlu0 %1419
      %1421 = vrot.lane.b32.xlu0 %v1382, 32
      %v1422 = vpop.permute.xlu0 %1421
      %1423 = vrot.lane.b32.xlu0 %v1383, 32
      %v1424 = vpop.permute.xlu0 %1423
      %1425 = vrot.lane.b32.xlu0 %v1384, 32
      %v1426 = vpop.permute.xlu0 %1425
      %1427 = vrot.lane.b32.xlu0 %v1385, 32
      %v1428 = vpop.permute.xlu0 %1427
      %1429 = vrot.lane.b32.xlu0 %v1386, 32
      %v1430 = vpop.permute.xlu0 %1429
      %1431 = vrot.lane.b32.xlu0 %v1387, 32
      %v1432 = vpop.permute.xlu0 %1431
      %1433 = vrot.lane.b32.xlu0 %v1388, 32
      %v1434 = vpop.permute.xlu0 %1433
      %1435 = vrot.lane.b32.xlu0 %v1389, 32
      %v1436 = vpop.permute.xlu0 %1435
      %1437 = vrot.lane.b32.xlu0 %v1390, 32
      %v1438 = vpop.permute.xlu0 %1437
      %v1455 = vadd.f32 %v1359, %v1408
      %v1456 = vadd.f32 %v1360, %v1410
      %v1457 = vadd.f32 %v1361, %v1412
      %v1458 = vadd.f32 %v1362, %v1414
      %v1459 = vadd.f32 %v1363, %v1416
      %v1460 = vadd.f32 %v1364, %v1418
      %v1461 = vadd.f32 %v1365, %v1420
      %v1462 = vadd.f32 %v1366, %v1422
      %v1463 = vadd.f32 %v1367, %v1424
      %v1464 = vadd.f32 %v1368, %v1426
      %v1465 = vadd.f32 %v1369, %v1428
      %v1466 = vadd.f32 %v1370, %v1430
      %v1467 = vadd.f32 %v1371, %v1432
      %v1468 = vadd.f32 %v1372, %v1434
      %v1469 = vadd.f32 %v1373, %v1436
      %v1470 = vadd.f32 %v1374, %v1438
      %v1471 = vpack.c.bf16 %v1455, %v1455
      %v1472 = vpack.c.bf16 %v1456, %v1456
      %v1473 = vpack.c.bf16 %v1457, %v1457
      %v1474 = vpack.c.bf16 %v1458, %v1458
      %v1475 = vpack.c.bf16 %v1459, %v1459
      %v1476 = vpack.c.bf16 %v1460, %v1460
      %v1477 = vpack.c.bf16 %v1461, %v1461
      %v1478 = vpack.c.bf16 %v1462, %v1462
      %v1479 = vpack.c.bf16 %v1463, %v1463
      %v1480 = vpack.c.bf16 %v1464, %v1464
      %v1481 = vpack.c.bf16 %v1465, %v1465
      %v1482 = vpack.c.bf16 %v1466, %v1466
      %v1483 = vpack.c.bf16 %v1467, %v1467
      %v1484 = vpack.c.bf16 %v1468, %v1468
      %v1485 = vpack.c.bf16 %v1469, %v1469
      %v1486 = vpack.c.bf16 %v1470, %v1470
      %1503 = vrot.lane.b32.xlu0 %v1279, 112
      %v1504 = vpop.permute.xlu0 %1503
      %1505 = vrot.lane.b32.xlu0 %v1280, 112
      %v1506 = vpop.permute.xlu0 %1505
      %1507 = vrot.lane.b32.xlu0 %v1281, 112
      %v1508 = vpop.permute.xlu0 %1507
      %1509 = vrot.lane.b32.xlu0 %v1282, 112
      %v1510 = vpop.permute.xlu0 %1509
      %1511 = vrot.lane.b32.xlu0 %v1283, 112
      %v1512 = vpop.permute.xlu0 %1511
      %1513 = vrot.lane.b32.xlu0 %v1284, 112
      %v1514 = vpop.permute.xlu0 %1513
      %1515 = vrot.lane.b32.xlu0 %v1285, 112
      %v1516 = vpop.permute.xlu0 %1515
      %1517 = vrot.lane.b32.xlu0 %v1286, 112
      %v1518 = vpop.permute.xlu0 %1517
      %1519 = vrot.lane.b32.xlu0 %v1287, 112
      %v1520 = vpop.permute.xlu0 %1519
      %1521 = vrot.lane.b32.xlu0 %v1288, 112
      %v1522 = vpop.permute.xlu0 %1521
      %1523 = vrot.lane.b32.xlu0 %v1289, 112
      %v1524 = vpop.permute.xlu0 %1523
      %1525 = vrot.lane.b32.xlu0 %v1290, 112
      %v1526 = vpop.permute.xlu0 %1525
      %1527 = vrot.lane.b32.xlu0 %v1291, 112
      %v1528 = vpop.permute.xlu0 %1527
      %1529 = vrot.lane.b32.xlu0 %v1292, 112
      %v1530 = vpop.permute.xlu0 %1529
      %1531 = vrot.lane.b32.xlu0 %v1293, 112
      %v1532 = vpop.permute.xlu0 %1531
      %1533 = vrot.lane.b32.xlu0 %v1294, 112
      %v1534 = vpop.permute.xlu0 %1533
      %1551 = vrot.lane.b32.xlu0 %v1471, 112
      %v1552 = vpop.permute.xlu0 %1551
      %1553 = vrot.lane.b32.xlu0 %v1472, 112
      %v1554 = vpop.permute.xlu0 %1553
      %1555 = vrot.lane.b32.xlu0 %v1473, 112
      %v1556 = vpop.permute.xlu0 %1555
      %1557 = vrot.lane.b32.xlu0 %v1474, 112
      %v1558 = vpop.permute.xlu0 %1557
      %1559 = vrot.lane.b32.xlu0 %v1475, 112
      %v1560 = vpop.permute.xlu0 %1559
      %1561 = vrot.lane.b32.xlu0 %v1476, 112
      %v1562 = vpop.permute.xlu0 %1561
      %1563 = vrot.lane.b32.xlu0 %v1477, 112
      %v1564 = vpop.permute.xlu0 %1563
      %1565 = vrot.lane.b32.xlu0 %v1478, 112
      %v1566 = vpop.permute.xlu0 %1565
      %1567 = vrot.lane.b32.xlu0 %v1479, 112
      %v1568 = vpop.permute.xlu0 %1567
      %1569 = vrot.lane.b32.xlu0 %v1480, 112
      %v1570 = vpop.permute.xlu0 %1569
      %1571 = vrot.lane.b32.xlu0 %v1481, 112
      %v1572 = vpop.permute.xlu0 %1571
      %1573 = vrot.lane.b32.xlu0 %v1482, 112
      %v1574 = vpop.permute.xlu0 %1573
      %1575 = vrot.lane.b32.xlu0 %v1483, 112
      %v1576 = vpop.permute.xlu0 %1575
      %1577 = vrot.lane.b32.xlu0 %v1484, 112
      %v1578 = vpop.permute.xlu0 %1577
      %1579 = vrot.lane.b32.xlu0 %v1485, 112
      %v1580 = vpop.permute.xlu0 %1579
      %1581 = vrot.lane.b32.xlu0 %v1486, 112
      %v1582 = vpop.permute.xlu0 %1581
      %1599 = vrot.lane.b32.xlu0 %v981, 112
      %v1600 = vpop.permute.xlu0 %1599
      %1601 = vrot.lane.b32.xlu0 %v982, 112
      %v1602 = vpop.permute.xlu0 %1601
      %1603 = vrot.lane.b32.xlu0 %v983, 112
      %v1604 = vpop.permute.xlu0 %1603
      %1605 = vrot.lane.b32.xlu0 %v984, 112
      %v1606 = vpop.permute.xlu0 %1605
      %1607 = vrot.lane.b32.xlu0 %v985, 112
      %v1608 = vpop.permute.xlu0 %1607
      %1609 = vrot.lane.b32.xlu0 %v986, 112
      %v1610 = vpop.permute.xlu0 %1609
      %1611 = vrot.lane.b32.xlu0 %v987, 112
      %v1612 = vpop.permute.xlu0 %1611
      %1613 = vrot.lane.b32.xlu0 %v988, 112
      %v1614 = vpop.permute.xlu0 %1613
      %1615 = vrot.lane.b32.xlu0 %v989, 112
      %v1616 = vpop.permute.xlu0 %1615
      %1617 = vrot.lane.b32.xlu0 %v990, 112
      %v1618 = vpop.permute.xlu0 %1617
      %1619 = vrot.lane.b32.xlu0 %v991, 112
      %v1620 = vpop.permute.xlu0 %1619
      %1621 = vrot.lane.b32.xlu0 %v992, 112
      %v1622 = vpop.permute.xlu0 %1621
      %1623 = vrot.lane.b32.xlu0 %v993, 112
      %v1624 = vpop.permute.xlu0 %1623
      %1625 = vrot.lane.b32.xlu0 %v994, 112
      %v1626 = vpop.permute.xlu0 %1625
      %1627 = vrot.lane.b32.xlu0 %v995, 112
      %v1628 = vpop.permute.xlu0 %1627
      %1629 = vrot.lane.b32.xlu0 %v996, 112
      %v1630 = vpop.permute.xlu0 %1629
      %v1631 = vld [vmem:[%s441] sm:$0xff]
      %v1632 = vld [vmem:[%s441 + $0x8] sm:$0xff]
      %v1633 = vld [vmem:[%s441 + $0x10] sm:$0xff]
      %v1634 = vld [vmem:[%s441 + $0x18] sm:$0xff]
      %v1635 = vunpack.c.0.s8 %v1631
      %v1636 = vunpack.c.1.s8 %v1631
      %v1637 = vunpack.c.2.s8 %v1631
      %v1638 = vunpack.c.3.s8 %v1631
      %v1639 = vunpack.c.0.s8 %v1632
      %v1640 = vunpack.c.1.s8 %v1632
      %v1641 = vunpack.c.2.s8 %v1632
      %v1642 = vunpack.c.3.s8 %v1632
      %v1643 = vunpack.c.0.s8 %v1633
      %v1644 = vunpack.c.1.s8 %v1633
      %v1645 = vunpack.c.2.s8 %v1633
      %v1646 = vunpack.c.3.s8 %v1633
      %v1647 = vunpack.c.0.s8 %v1634
      %v1648 = vunpack.c.1.s8 %v1634
      %v1649 = vunpack.c.2.s8 %v1634
      %v1650 = vunpack.c.3.s8 %v1634
      %v1651 = vcvt.s32.f32 %v1635
      %v1652 = vcvt.s32.f32 %v1636
      %v1653 = vcvt.s32.f32 %v1637
      %v1654 = vcvt.s32.f32 %v1638
      %v1655 = vcvt.s32.f32 %v1639
      %v1656 = vcvt.s32.f32 %v1640
      %v1657 = vcvt.s32.f32 %v1641
      %v1658 = vcvt.s32.f32 %v1642
      %v1659 = vcvt.s32.f32 %v1643
      %v1660 = vcvt.s32.f32 %v1644
      %v1661 = vcvt.s32.f32 %v1645
      %v1662 = vcvt.s32.f32 %v1646
      %v1663 = vcvt.s32.f32 %v1647
      %v1664 = vcvt.s32.f32 %v1648
      %v1665 = vcvt.s32.f32 %v1649
      %v1666 = vcvt.s32.f32 %v1650
      %v1667 = vsub.f32 %v1651, 1.0
      %v1668 = vsub.f32 %v1652, 1.0
      %v1669 = vsub.f32 %v1653, 1.0
      %v1670 = vsub.f32 %v1654, 1.0
      %v1671 = vsub.f32 %v1655, 1.0
      %v1672 = vsub.f32 %v1656, 1.0
      %v1673 = vsub.f32 %v1657, 1.0
      %v1674 = vsub.f32 %v1658, 1.0
      %v1675 = vsub.f32 %v1659, 1.0
      %v1676 = vsub.f32 %v1660, 1.0
      %v1677 = vsub.f32 %v1661, 1.0
      %v1678 = vsub.f32 %v1662, 1.0
      %v1679 = vsub.f32 %v1663, 1.0
      %v1680 = vsub.f32 %v1664, 1.0
      %v1681 = vsub.f32 %v1665, 1.0
      %v1682 = vsub.f32 %v1666, 1.0
      %v1683 = vmul.f32 %v1667, 1e+30
      %v1684 = vmul.f32 %v1668, 1e+30
      %v1685 = vmul.f32 %v1669, 1e+30
      %v1686 = vmul.f32 %v1670, 1e+30
      %v1687 = vmul.f32 %v1671, 1e+30
      %v1688 = vmul.f32 %v1672, 1e+30
      %v1689 = vmul.f32 %v1673, 1e+30
      %v1690 = vmul.f32 %v1674, 1e+30
      %v1691 = vmul.f32 %v1675, 1e+30
      %v1692 = vmul.f32 %v1676, 1e+30
      %v1693 = vmul.f32 %v1677, 1e+30
      %v1694 = vmul.f32 %v1678, 1e+30
      %v1695 = vmul.f32 %v1679, 1e+30
      %v1696 = vmul.f32 %v1680, 1e+30
      %v1697 = vmul.f32 %v1681, 1e+30
      %v1698 = vmul.f32 %v1682, 1e+30
      %v1699 = vunpack.c.l.b16 %v1279
      %v1700 = vunpack.c.l.b16 %v1280
      %v1701 = vunpack.c.l.b16 %v1281
      %v1702 = vunpack.c.l.b16 %v1282
      %v1703 = vunpack.c.l.b16 %v1283
      %v1704 = vunpack.c.l.b16 %v1284
      %v1705 = vunpack.c.l.b16 %v1285
      %v1706 = vunpack.c.l.b16 %v1286
      %v1707 = vunpack.c.l.b16 %v1287
      %v1708 = vunpack.c.l.b16 %v1288
      %v1709 = vunpack.c.l.b16 %v1289
      %v1710 = vunpack.c.l.b16 %v1290
      %v1711 = vunpack.c.l.b16 %v1291
      %v1712 = vunpack.c.l.b16 %v1292
      %v1713 = vunpack.c.l.b16 %v1293
      %v1714 = vunpack.c.l.b16 %v1294
      %v1715 = vpack.c.b16 %v1700, %v1699
      %v1716 = vpack.c.b16 %v1702, %v1701
      %v1717 = vpack.c.b16 %v1704, %v1703
      %v1718 = vpack.c.b16 %v1706, %v1705
      %v1719 = vpack.c.b16 %v1708, %v1707
      %v1720 = vpack.c.b16 %v1710, %v1709
      %v1721 = vpack.c.b16 %v1712, %v1711
      %v1722 = vpack.c.b16 %v1714, %v1713
      %v1723 = vunpack.c.l.b16 %v1471
      %v1724 = vunpack.c.l.b16 %v1472
      %v1725 = vunpack.c.l.b16 %v1473
      %v1726 = vunpack.c.l.b16 %v1474
      %v1727 = vunpack.c.l.b16 %v1475
      %v1728 = vunpack.c.l.b16 %v1476
      %v1729 = vunpack.c.l.b16 %v1477
      %v1730 = vunpack.c.l.b16 %v1478
      %v1731 = vunpack.c.l.b16 %v1479
      %v1732 = vunpack.c.l.b16 %v1480
      %v1733 = vunpack.c.l.b16 %v1481
      %v1734 = vunpack.c.l.b16 %v1482
      %v1735 = vunpack.c.l.b16 %v1483
      %v1736 = vunpack.c.l.b16 %v1484
      %v1737 = vunpack.c.l.b16 %v1485
      %v1738 = vunpack.c.l.b16 %v1486
      %v1739 = vpack.c.b16 %v1724, %v1723
      %v1740 = vpack.c.b16 %v1726, %v1725
      %v1741 = vpack.c.b16 %v1728, %v1727
      %v1742 = vpack.c.b16 %v1730, %v1729
      %v1743 = vpack.c.b16 %v1732, %v1731
      %v1744 = vpack.c.b16 %v1734, %v1733
      %v1745 = vpack.c.b16 %v1736, %v1735
      %v1746 = vpack.c.b16 %v1738, %v1737
      %1747 = vrot.lane.b32.xlu0 %v1739, 96
      %v1748 = vpop.permute.xlu0 %1747
      %1749 = vrot.lane.b32.xlu0 %v1740, 96
      %v1750 = vpop.permute.xlu0 %1749
      %1751 = vrot.lane.b32.xlu0 %v1741, 96
      %v1752 = vpop.permute.xlu0 %1751
      %1753 = vrot.lane.b32.xlu0 %v1742, 96
      %v1754 = vpop.permute.xlu0 %1753
      %1755 = vrot.lane.b32.xlu0 %v1743, 96
      %v1756 = vpop.permute.xlu0 %1755
      %1757 = vrot.lane.b32.xlu0 %v1744, 96
      %v1758 = vpop.permute.xlu0 %1757
      %1759 = vrot.lane.b32.xlu0 %v1745, 96
      %v1760 = vpop.permute.xlu0 %1759
      %1761 = vrot.lane.b32.xlu0 %v1746, 96
      %v1762 = vpop.permute.xlu0 %1761
      %vm1763 = vcmask 130048
      %v1765 = vsel %vm1763, %v1715, 0
      %v1768 = vsel %vm1763, %v1716, 0
      %v1771 = vsel %vm1763, %v1717, 0
      %v1774 = vsel %vm1763, %v1718, 0
      %v1777 = vsel %vm1763, %v1719, 0
      %v1780 = vsel %vm1763, %v1720, 0
      %v1783 = vsel %vm1763, %v1721, 0
      %v1786 = vsel %vm1763, %v1722, 0
      %v1789 = vsel %vm1763, %v1748, 0
      %v1792 = vsel %vm1763, %v1750, 0
      %v1795 = vsel %vm1763, %v1752, 0
      %v1798 = vsel %vm1763, %v1754, 0
      %v1801 = vsel %vm1763, %v1756, 0
      %v1804 = vsel %vm1763, %v1758, 0
      %v1807 = vsel %vm1763, %v1760, 0
      %v1810 = vsel %vm1763, %v1762, 0
      %1812 = vmatpush.bf16.xpose.msra.mxu0 %v1810
      %1813 = vmatpush.bf16.xpose.msra.mxu0 %v1807
      %1814 = vmatpush.bf16.xpose.msra.mxu0 %v1804
      %1815 = vmatpush.bf16.xpose.msra.mxu0 %v1801
      %1816 = vmatpush.bf16.xpose.msra.mxu0 %v1798
      %1817 = vmatpush.bf16.xpose.msra.mxu0 %v1795
      %1818 = vmatpush.bf16.xpose.msra.mxu0 %v1792
      %1819 = vmatpush.bf16.xpose.msra.mxu0 %v1789
      %1820 = vmatmul.bf16.gmra.mxu0 %v1765
      %v1821 = vpop.f32.mrf.mxu0
      %v1822 = vadd.f32 %v1683, %v1821
      %v1823 = vpop.f32.mrf.mxu0
      %v1824 = vadd.f32 %v1684, %v1823
      %1825 = vmatmul.bf16.gmra.mxu0 %v1768
      %v1826 = vpop.f32.mrf.mxu0
      %v1827 = vadd.f32 %v1685, %v1826
      %v1828 = vpop.f32.mrf.mxu0
      %v1829 = vadd.f32 %v1686, %v1828
      %1830 = vmatmul.bf16.gmra.mxu0 %v1771
      %v1831 = vpop.f32.mrf.mxu0
      %v1832 = vadd.f32 %v1687, %v1831
      %v1833 = vpop.f32.mrf.mxu0
      %v1834 = vadd.f32 %v1688, %v1833
      %1835 = vmatmul.bf16.gmra.mxu0 %v1774
      %v1836 = vpop.f32.mrf.mxu0
      %v1837 = vadd.f32 %v1689, %v1836
      %v1838 = vpop.f32.mrf.mxu0
      %v1839 = vadd.f32 %v1690, %v1838
      %1840 = vmatmul.bf16.gmra.mxu0 %v1777
      %v1841 = vpop.f32.mrf.mxu0
      %v1842 = vadd.f32 %v1691, %v1841
      %v1843 = vpop.f32.mrf.mxu0
      %v1844 = vadd.f32 %v1692, %v1843
      %1845 = vmatmul.bf16.gmra.mxu0 %v1780
      %v1846 = vpop.f32.mrf.mxu0
      %v1847 = vadd.f32 %v1693, %v1846
      %v1848 = vpop.f32.mrf.mxu0
      %v1849 = vadd.f32 %v1694, %v1848
      %1850 = vmatmul.bf16.gmra.mxu0 %v1783
      %v1851 = vpop.f32.mrf.mxu0
      %v1852 = vadd.f32 %v1695, %v1851
      %v1853 = vpop.f32.mrf.mxu0
      %v1854 = vadd.f32 %v1696, %v1853
      %1855 = vmatmul.bf16.gmra.mxu0 %v1786
      %v1856 = vpop.f32.mrf.mxu0
      %v1857 = vadd.f32 %v1697, %v1856
      %v1858 = vpop.f32.mrf.mxu0
      %v1859 = vadd.f32 %v1698, %v1858
      %1860 = vdwg.mxu0
      %v1861 = vunpack.c.l.b16 %v1504
      %v1862 = vunpack.c.l.b16 %v1506
      %v1863 = vunpack.c.l.b16 %v1508
      %v1864 = vunpack.c.l.b16 %v1510
      %v1865 = vunpack.c.l.b16 %v1512
      %v1866 = vunpack.c.l.b16 %v1514
      %v1867 = vunpack.c.l.b16 %v1516
      %v1868 = vunpack.c.l.b16 %v1518
      %v1869 = vunpack.c.l.b16 %v1520
      %v1870 = vunpack.c.l.b16 %v1522
      %v1871 = vunpack.c.l.b16 %v1524
      %v1872 = vunpack.c.l.b16 %v1526
      %v1873 = vunpack.c.l.b16 %v1528
      %v1874 = vunpack.c.l.b16 %v1530
      %v1875 = vunpack.c.l.b16 %v1532
      %v1876 = vunpack.c.l.b16 %v1534
      %v1877 = vpack.c.b16 %v1862, %v1861
      %v1878 = vpack.c.b16 %v1864, %v1863
      %v1879 = vpack.c.b16 %v1866, %v1865
      %v1880 = vpack.c.b16 %v1868, %v1867
      %v1881 = vpack.c.b16 %v1870, %v1869
      %v1882 = vpack.c.b16 %v1872, %v1871
      %v1883 = vpack.c.b16 %v1874, %v1873
      %v1884 = vpack.c.b16 %v1876, %v1875
      %v1885 = vunpack.c.l.b16 %v1552
      %v1886 = vunpack.c.l.b16 %v1554
      %v1887 = vunpack.c.l.b16 %v1556
      %v1888 = vunpack.c.l.b16 %v1558
      %v1889 = vunpack.c.l.b16 %v1560
      %v1890 = vunpack.c.l.b16 %v1562
      %v1891 = vunpack.c.l.b16 %v1564
      %v1892 = vunpack.c.l.b16 %v1566
      %v1893 = vunpack.c.l.b16 %v1568
      %v1894 = vunpack.c.l.b16 %v1570
      %v1895 = vunpack.c.l.b16 %v1572
      %v1896 = vunpack.c.l.b16 %v1574
      %v1897 = vunpack.c.l.b16 %v1576
      %v1898 = vunpack.c.l.b16 %v1578
      %v1899 = vunpack.c.l.b16 %v1580
      %v1900 = vunpack.c.l.b16 %v1582
      %v1901 = vpack.c.b16 %v1886, %v1885
      %v1902 = vpack.c.b16 %v1888, %v1887
      %v1903 = vpack.c.b16 %v1890, %v1889
      %v1904 = vpack.c.b16 %v1892, %v1891
      %v1905 = vpack.c.b16 %v1894, %v1893
      %v1906 = vpack.c.b16 %v1896, %v1895
      %v1907 = vpack.c.b16 %v1898, %v1897
      %v1908 = vpack.c.b16 %v1900, %v1899
      %1909 = vrot.lane.b32.xlu0 %v1901, 96
      %v1910 = vpop.permute.xlu0 %1909
      %1911 = vrot.lane.b32.xlu0 %v1902, 96
      %v1912 = vpop.permute.xlu0 %1911
      %1913 = vrot.lane.b32.xlu0 %v1903, 96
      %v1914 = vpop.permute.xlu0 %1913
      %1915 = vrot.lane.b32.xlu0 %v1904, 96
      %v1916 = vpop.permute.xlu0 %1915
      %1917 = vrot.lane.b32.xlu0 %v1905, 96
      %v1918 = vpop.permute.xlu0 %1917
      %1919 = vrot.lane.b32.xlu0 %v1906, 96
      %v1920 = vpop.permute.xlu0 %1919
      %1921 = vrot.lane.b32.xlu0 %v1907, 96
      %v1922 = vpop.permute.xlu0 %1921
      %1923 = vrot.lane.b32.xlu0 %v1908, 96
      %v1924 = vpop.permute.xlu0 %1923
      %v1926 = vsel %vm1763, %v1877, 0
      %v1929 = vsel %vm1763, %v1878, 0
      %v1932 = vsel %vm1763, %v1879, 0
      %v1935 = vsel %vm1763, %v1880, 0
      %v1938 = vsel %vm1763, %v1881, 0
      %v1941 = vsel %vm1763, %v1882, 0
      %v1944 = vsel %vm1763, %v1883, 0
      %v1947 = vsel %vm1763, %v1884, 0
      %v1950 = vsel %vm1763, %v1910, 0
      %v1953 = vsel %vm1763, %v1912, 0
      %v1956 = vsel %vm1763, %v1914, 0
      %v1959 = vsel %vm1763, %v1916, 0
      %v1962 = vsel %vm1763, %v1918, 0
      %v1965 = vsel %vm1763, %v1920, 0
      %v1968 = vsel %vm1763, %v1922, 0
      %v1971 = vsel %vm1763, %v1924, 0
      %1973 = vmatpush.bf16.xpose.msra.mxu0 %v1971
      %1974 = vmatpush.bf16.xpose.msra.mxu0 %v1968
      %1975 = vmatpush.bf16.xpose.msra.mxu0 %v1965
      %1976 = vmatpush.bf16.xpose.msra.mxu0 %v1962
      %1977 = vmatpush.bf16.xpose.msra.mxu0 %v1959
      %1978 = vmatpush.bf16.xpose.msra.mxu0 %v1956
      %1979 = vmatpush.bf16.xpose.msra.mxu0 %v1953
      %1980 = vmatpush.bf16.xpose.msra.mxu0 %v1950
      %1981 = vmatmul.bf16.gmra.mxu0 %v1926
      %v1982 = vpop.f32.mrf.mxu0
      %v1983 = vadd.f32 %v1683, %v1982
      %v1984 = vpop.f32.mrf.mxu0
      %v1985 = vadd.f32 %v1684, %v1984
      %1986 = vmatmul.bf16.gmra.mxu0 %v1929
      %v1987 = vpop.f32.mrf.mxu0
      %v1988 = vadd.f32 %v1685, %v1987
      %v1989 = vpop.f32.mrf.mxu0
      %v1990 = vadd.f32 %v1686, %v1989
      %1991 = vmatmul.bf16.gmra.mxu0 %v1932
      %v1992 = vpop.f32.mrf.mxu0
      %v1993 = vadd.f32 %v1687, %v1992
      %v1994 = vpop.f32.mrf.mxu0
      %v1995 = vadd.f32 %v1688, %v1994
      %1996 = vmatmul.bf16.gmra.mxu0 %v1935
      %v1997 = vpop.f32.mrf.mxu0
      %v1998 = vadd.f32 %v1689, %v1997
      %v1999 = vpop.f32.mrf.mxu0
      %v2000 = vadd.f32 %v1690, %v1999
      %2001 = vmatmul.bf16.gmra.mxu0 %v1938
      %v2002 = vpop.f32.mrf.mxu0
      %v2003 = vadd.f32 %v1691, %v2002
      %v2004 = vpop.f32.mrf.mxu0
      %v2005 = vadd.f32 %v1692, %v2004
      %2006 = vmatmul.bf16.gmra.mxu0 %v1941
      %v2007 = vpop.f32.mrf.mxu0
      %v2008 = vadd.f32 %v1693, %v2007
      %v2009 = vpop.f32.mrf.mxu0
      %v2010 = vadd.f32 %v1694, %v2009
      %2011 = vmatmul.bf16.gmra.mxu0 %v1944
      %v2012 = vpop.f32.mrf.mxu0
      %v2013 = vadd.f32 %v1695, %v2012
      %v2014 = vpop.f32.mrf.mxu0
      %v2015 = vadd.f32 %v1696, %v2014
      %2016 = vmatmul.bf16.gmra.mxu0 %v1947
      %v2017 = vpop.f32.mrf.mxu0
      %v2018 = vadd.f32 %v1697, %v2017
      %v2019 = vpop.f32.mrf.mxu0
      %v2020 = vadd.f32 %v1698, %v2019
      %2021 = vdwg.mxu0
      %2022 = vmax.xlane.f32.xlu0 %v1822
      %v2023 = vpop.xlane.xlu0 %2022
      %2024 = vmax.xlane.f32.xlu0 %v1824
      %v2025 = vpop.xlane.xlu0 %2024
      %2026 = vmax.xlane.f32.xlu0 %v1827
      %v2027 = vpop.xlane.xlu0 %2026
      %2028 = vmax.xlane.f32.xlu0 %v1829
      %v2029 = vpop.xlane.xlu0 %2028
      %2030 = vmax.xlane.f32.xlu0 %v1832
      %v2031 = vpop.xlane.xlu0 %2030
      %2032 = vmax.xlane.f32.xlu0 %v1834
      %v2033 = vpop.xlane.xlu0 %2032
      %2034 = vmax.xlane.f32.xlu0 %v1837
      %v2035 = vpop.xlane.xlu0 %2034
      %2036 = vmax.xlane.f32.xlu0 %v1839
      %v2037 = vpop.xlane.xlu0 %2036
      %2038 = vmax.xlane.f32.xlu0 %v1842
      %v2039 = vpop.xlane.xlu0 %2038
      %2040 = vmax.xlane.f32.xlu0 %v1844
      %v2041 = vpop.xlane.xlu0 %2040
      %2042 = vmax.xlane.f32.xlu0 %v1847
      %v2043 = vpop.xlane.xlu0 %2042
      %2044 = vmax.xlane.f32.xlu0 %v1849
      %v2045 = vpop.xlane.xlu0 %2044
      %2046 = vmax.xlane.f32.xlu0 %v1852
      %v2047 = vpop.xlane.xlu0 %2046
      %2048 = vmax.xlane.f32.xlu0 %v1854
      %v2049 = vpop.xlane.xlu0 %2048
      %2050 = vmax.xlane.f32.xlu0 %v1857
      %v2051 = vpop.xlane.xlu0 %2050
      %2052 = vmax.xlane.f32.xlu0 %v1859
      %v2053 = vpop.xlane.xlu0 %2052
      %2054 = vmax.xlane.f32.xlu0 %v1983
      %v2055 = vpop.xlane.xlu0 %2054
      %2056 = vmax.xlane.f32.xlu0 %v1985
      %v2057 = vpop.xlane.xlu0 %2056
      %2058 = vmax.xlane.f32.xlu0 %v1988
      %v2059 = vpop.xlane.xlu0 %2058
      %2060 = vmax.xlane.f32.xlu0 %v1990
      %v2061 = vpop.xlane.xlu0 %2060
      %2062 = vmax.xlane.f32.xlu0 %v1993
      %v2063 = vpop.xlane.xlu0 %2062
      %2064 = vmax.xlane.f32.xlu0 %v1995
      %v2065 = vpop.xlane.xlu0 %2064
      %2066 = vmax.xlane.f32.xlu0 %v1998
      %v2067 = vpop.xlane.xlu0 %2066
      %2068 = vmax.xlane.f32.xlu0 %v2000
      %v2069 = vpop.xlane.xlu0 %2068
      %2070 = vmax.xlane.f32.xlu0 %v2003
      %v2071 = vpop.xlane.xlu0 %2070
      %2072 = vmax.xlane.f32.xlu0 %v2005
      %v2073 = vpop.xlane.xlu0 %2072
      %2074 = vmax.xlane.f32.xlu0 %v2008
      %v2075 = vpop.xlane.xlu0 %2074
      %2076 = vmax.xlane.f32.xlu0 %v2010
      %v2077 = vpop.xlane.xlu0 %2076
      %2078 = vmax.xlane.f32.xlu0 %v2013
      %v2079 = vpop.xlane.xlu0 %2078
      %2080 = vmax.xlane.f32.xlu0 %v2015
      %v2081 = vpop.xlane.xlu0 %2080
      %2082 = vmax.xlane.f32.xlu0 %v2018
      %v2083 = vpop.xlane.xlu0 %2082
      %2084 = vmax.xlane.f32.xlu0 %v2020
      %v2085 = vpop.xlane.xlu0 %2084
      %v2086 = vsub.f32 %v1822, %v2023
      %v2087 = vsub.f32 %v1824, %v2025
      %v2088 = vsub.f32 %v1827, %v2027
      %v2089 = vsub.f32 %v1829, %v2029
      %v2090 = vsub.f32 %v1832, %v2031
      %v2091 = vsub.f32 %v1834, %v2033
      %v2092 = vsub.f32 %v1837, %v2035
      %v2093 = vsub.f32 %v1839, %v2037
      %v2094 = vsub.f32 %v1842, %v2039
      %v2095 = vsub.f32 %v1844, %v2041
      %v2096 = vsub.f32 %v1847, %v2043
      %v2097 = vsub.f32 %v1849, %v2045
      %v2098 = vsub.f32 %v1852, %v2047
      %v2099 = vsub.f32 %v1854, %v2049
      %v2100 = vsub.f32 %v1857, %v2051
      %v2101 = vsub.f32 %v1859, %v2053
      %v2102 = vsub.f32 %v1983, %v2055
      %v2103 = vsub.f32 %v1985, %v2057
      %v2104 = vsub.f32 %v1988, %v2059
      %v2105 = vsub.f32 %v1990, %v2061
      %v2106 = vsub.f32 %v1993, %v2063
      %v2107 = vsub.f32 %v1995, %v2065
      %v2108 = vsub.f32 %v1998, %v2067
      %v2109 = vsub.f32 %v2000, %v2069
      %v2110 = vsub.f32 %v2003, %v2071
      %v2111 = vsub.f32 %v2005, %v2073
      %v2112 = vsub.f32 %v2008, %v2075
      %v2113 = vsub.f32 %v2010, %v2077
      %v2114 = vsub.f32 %v2013, %v2079
      %v2115 = vsub.f32 %v2015, %v2081
      %v2116 = vsub.f32 %v2018, %v2083
      %v2117 = vsub.f32 %v2020, %v2085
      %v2118 = vmul.f32 %v2086, 1.442695
      %v2119 = vpow.pop %v2118
      %v2120 = vmul.f32 %v2087, 1.442695
      %v2121 = vpow.pop %v2120
      %v2122 = vmul.f32 %v2088, 1.442695
      %v2123 = vpow.pop %v2122
      %v2124 = vmul.f32 %v2089, 1.442695
      %v2125 = vpow.pop %v2124
      %v2126 = vmul.f32 %v2090, 1.442695
      %v2127 = vpow.pop %v2126
      %v2128 = vmul.f32 %v2091, 1.442695
      %v2129 = vpow.pop %v2128
      %v2130 = vmul.f32 %v2092, 1.442695
      %v2131 = vpow.pop %v2130
      %v2132 = vmul.f32 %v2093, 1.442695
      %v2133 = vpow.pop %v2132
      %v2134 = vmul.f32 %v2094, 1.442695
      %v2135 = vpow.pop %v2134
      %v2136 = vmul.f32 %v2095, 1.442695
      %v2137 = vpow.pop %v2136
      %v2138 = vmul.f32 %v2096, 1.442695
      %v2139 = vpow.pop %v2138
      %v2140 = vmul.f32 %v2097, 1.442695
      %v2141 = vpow.pop %v2140
      %v2142 = vmul.f32 %v2098, 1.442695
      %v2143 = vpow.pop %v2142
      %v2144 = vmul.f32 %v2099, 1.442695
      %v2145 = vpow.pop %v2144
      %v2146 = vmul.f32 %v2100, 1.442695
      %v2147 = vpow.pop %v2146
      %v2148 = vmul.f32 %v2101, 1.442695
      %v2149 = vpow.pop %v2148
      %v2150 = vmul.f32 %v2102, 1.442695
      %v2151 = vpow.pop %v2150
      %v2152 = vmul.f32 %v2103, 1.442695
      %v2153 = vpow.pop %v2152
      %v2154 = vmul.f32 %v2104, 1.442695
      %v2155 = vpow.pop %v2154
      %v2156 = vmul.f32 %v2105, 1.442695
      %v2157 = vpow.pop %v2156
      %v2158 = vmul.f32 %v2106, 1.442695
      %v2159 = vpow.pop %v2158
      %v2160 = vmul.f32 %v2107, 1.442695
      %v2161 = vpow.pop %v2160
      %v2162 = vmul.f32 %v2108, 1.442695
      %v2163 = vpow.pop %v2162
      %v2164 = vmul.f32 %v2109, 1.442695
      %v2165 = vpow.pop %v2164
      %v2166 = vmul.f32 %v2110, 1.442695
      %v2167 = vpow.pop %v2166
      %v2168 = vmul.f32 %v2111, 1.442695
      %v2169 = vpow.pop %v2168
      %v2170 = vmul.f32 %v2112, 1.442695
      %v2171 = vpow.pop %v2170
      %v2172 = vmul.f32 %v2113, 1.442695
      %v2173 = vpow.pop %v2172
      %v2174 = vmul.f32 %v2114, 1.442695
      %v2175 = vpow.pop %v2174
      %v2176 = vmul.f32 %v2115, 1.442695
      %v2177 = vpow.pop %v2176
      %v2178 = vmul.f32 %v2116, 1.442695
      %v2179 = vpow.pop %v2178
      %v2180 = vmul.f32 %v2117, 1.442695
      %v2181 = vpow.pop %v2180
      %2182 = vadd.xlane.f32.xlu0 %v2119
      %v2183 = vpop.xlane.xlu0 %2182
      %2184 = vadd.xlane.f32.xlu0 %v2121
      %v2185 = vpop.xlane.xlu0 %2184
      %2186 = vadd.xlane.f32.xlu0 %v2123
      %v2187 = vpop.xlane.xlu0 %2186
      %2188 = vadd.xlane.f32.xlu0 %v2125
      %v2189 = vpop.xlane.xlu0 %2188
      %2190 = vadd.xlane.f32.xlu0 %v2127
      %v2191 = vpop.xlane.xlu0 %2190
      %2192 = vadd.xlane.f32.xlu0 %v2129
      %v2193 = vpop.xlane.xlu0 %2192
      %2194 = vadd.xlane.f32.xlu0 %v2131
      %v2195 = vpop.xlane.xlu0 %2194
      %2196 = vadd.xlane.f32.xlu0 %v2133
      %v2197 = vpop.xlane.xlu0 %2196
      %2198 = vadd.xlane.f32.xlu0 %v2135
      %v2199 = vpop.xlane.xlu0 %2198
      %2200 = vadd.xlane.f32.xlu0 %v2137
      %v2201 = vpop.xlane.xlu0 %2200
      %2202 = vadd.xlane.f32.xlu0 %v2139
      %v2203 = vpop.xlane.xlu0 %2202
      %2204 = vadd.xlane.f32.xlu0 %v2141
      %v2205 = vpop.xlane.xlu0 %2204
      %2206 = vadd.xlane.f32.xlu0 %v2143
      %v2207 = vpop.xlane.xlu0 %2206
      %2208 = vadd.xlane.f32.xlu0 %v2145
      %v2209 = vpop.xlane.xlu0 %2208
      %2210 = vadd.xlane.f32.xlu0 %v2147
      %v2211 = vpop.xlane.xlu0 %2210
      %2212 = vadd.xlane.f32.xlu0 %v2149
      %v2213 = vpop.xlane.xlu0 %2212
      %2214 = vadd.xlane.f32.xlu0 %v2151
      %v2215 = vpop.xlane.xlu0 %2214
      %2216 = vadd.xlane.f32.xlu0 %v2153
      %v2217 = vpop.xlane.xlu0 %2216
      %2218 = vadd.xlane.f32.xlu0 %v2155
      %v2219 = vpop.xlane.xlu0 %2218
      %2220 = vadd.xlane.f32.xlu0 %v2157
      %v2221 = vpop.xlane.xlu0 %2220
      %2222 = vadd.xlane.f32.xlu0 %v2159
      %v2223 = vpop.xlane.xlu0 %2222
      %2224 = vadd.xlane.f32.xlu0 %v2161
      %v2225 = vpop.xlane.xlu0 %2224
      %2226 = vadd.xlane.f32.xlu0 %v2163
      %v2227 = vpop.xlane.xlu0 %2226
      %2228 = vadd.xlane.f32.xlu0 %v2165
      %v2229 = vpop.xlane.xlu0 %2228
      %2230 = vadd.xlane.f32.xlu0 %v2167
      %v2231 = vpop.xlane.xlu0 %2230
      %2232 = vadd.xlane.f32.xlu0 %v2169
      %v2233 = vpop.xlane.xlu0 %2232
      %2234 = vadd.xlane.f32.xlu0 %v2171
      %v2235 = vpop.xlane.xlu0 %2234
      %2236 = vadd.xlane.f32.xlu0 %v2173
      %v2237 = vpop.xlane.xlu0 %2236
      %2238 = vadd.xlane.f32.xlu0 %v2175
      %v2239 = vpop.xlane.xlu0 %2238
      %2240 = vadd.xlane.f32.xlu0 %v2177
      %v2241 = vpop.xlane.xlu0 %2240
      %2242 = vadd.xlane.f32.xlu0 %v2179
      %v2243 = vpop.xlane.xlu0 %2242
      %2244 = vadd.xlane.f32.xlu0 %v2181
      %v2245 = vpop.xlane.xlu0 %2244
      %v2246 = vrcp.pop %v2183
      %v2247 = vrcp.pop %v2185
      %v2248 = vrcp.pop %v2187
      %v2249 = vrcp.pop %v2189
      %v2250 = vrcp.pop %v2191
      %v2251 = vrcp.pop %v2193
      %v2252 = vrcp.pop %v2195
      %v2253 = vrcp.pop %v2197
      %v2254 = vrcp.pop %v2199
      %v2255 = vrcp.pop %v2201
      %v2256 = vrcp.pop %v2203
      %v2257 = vrcp.pop %v2205
      %v2258 = vrcp.pop %v2207
      %v2259 = vrcp.pop %v2209
      %v2260 = vrcp.pop %v2211
      %v2261 = vrcp.pop %v2213
      %v2262 = vrcp.pop %v2215
      %v2263 = vrcp.pop %v2217
      %v2264 = vrcp.pop %v2219
      %v2265 = vrcp.pop %v2221
      %v2266 = vrcp.pop %v2223
      %v2267 = vrcp.pop %v2225
      %v2268 = vrcp.pop %v2227
      %v2269 = vrcp.pop %v2229
      %v2270 = vrcp.pop %v2231
      %v2271 = vrcp.pop %v2233
      %v2272 = vrcp.pop %v2235
      %v2273 = vrcp.pop %v2237
      %v2274 = vrcp.pop %v2239
      %v2275 = vrcp.pop %v2241
      %v2276 = vrcp.pop %v2243
      %v2277 = vrcp.pop %v2245
      %v2278 = vmul.f32 %v2119, %v2246
      %v2279 = vmul.f32 %v2121, %v2247
      %v2280 = vmul.f32 %v2123, %v2248
      %v2281 = vmul.f32 %v2125, %v2249
      %v2282 = vmul.f32 %v2127, %v2250
      %v2283 = vmul.f32 %v2129, %v2251
      %v2284 = vmul.f32 %v2131, %v2252
      %v2285 = vmul.f32 %v2133, %v2253
      %v2286 = vmul.f32 %v2135, %v2254
      %v2287 = vmul.f32 %v2137, %v2255
      %v2288 = vmul.f32 %v2139, %v2256
      %v2289 = vmul.f32 %v2141, %v2257
      %v2290 = vmul.f32 %v2143, %v2258
      %v2291 = vmul.f32 %v2145, %v2259
      %v2292 = vmul.f32 %v2147, %v2260
      %v2293 = vmul.f32 %v2149, %v2261
      %v2294 = vmul.f32 %v2151, %v2262
      %v2295 = vmul.f32 %v2153, %v2263
      %v2296 = vmul.f32 %v2155, %v2264
      %v2297 = vmul.f32 %v2157, %v2265
      %v2298 = vmul.f32 %v2159, %v2266
      %v2299 = vmul.f32 %v2161, %v2267
      %v2300 = vmul.f32 %v2163, %v2268
      %v2301 = vmul.f32 %v2165, %v2269
      %v2302 = vmul.f32 %v2167, %v2270
      %v2303 = vmul.f32 %v2169, %v2271
      %v2304 = vmul.f32 %v2171, %v2272
      %v2305 = vmul.f32 %v2173, %v2273
      %v2306 = vmul.f32 %v2175, %v2274
      %v2307 = vmul.f32 %v2177, %v2275
      %v2308 = vmul.f32 %v2179, %v2276
      %v2309 = vmul.f32 %v2181, %v2277
      %v2310 = vpack.c.bf16 %v2278, %v2278
      %v2311 = vpack.c.bf16 %v2279, %v2279
      %v2312 = vpack.c.bf16 %v2280, %v2280
      %v2313 = vpack.c.bf16 %v2281, %v2281
      %v2314 = vpack.c.bf16 %v2282, %v2282
      %v2315 = vpack.c.bf16 %v2283, %v2283
      %v2316 = vpack.c.bf16 %v2284, %v2284
      %v2317 = vpack.c.bf16 %v2285, %v2285
      %v2318 = vpack.c.bf16 %v2286, %v2286
      %v2319 = vpack.c.bf16 %v2287, %v2287
      %v2320 = vpack.c.bf16 %v2288, %v2288
      %v2321 = vpack.c.bf16 %v2289, %v2289
      %v2322 = vpack.c.bf16 %v2290, %v2290
      %v2323 = vpack.c.bf16 %v2291, %v2291
      %v2324 = vpack.c.bf16 %v2292, %v2292
      %v2325 = vpack.c.bf16 %v2293, %v2293
      %v2326 = vpack.c.bf16 %v2294, %v2294
      %v2327 = vpack.c.bf16 %v2295, %v2295
      %v2328 = vpack.c.bf16 %v2296, %v2296
      %v2329 = vpack.c.bf16 %v2297, %v2297
      %v2330 = vpack.c.bf16 %v2298, %v2298
      %v2331 = vpack.c.bf16 %v2299, %v2299
      %v2332 = vpack.c.bf16 %v2300, %v2300
      %v2333 = vpack.c.bf16 %v2301, %v2301
      %v2334 = vpack.c.bf16 %v2302, %v2302
      %v2335 = vpack.c.bf16 %v2303, %v2303
      %v2336 = vpack.c.bf16 %v2304, %v2304
      %v2337 = vpack.c.bf16 %v2305, %v2305
      %v2338 = vpack.c.bf16 %v2306, %v2306
      %v2339 = vpack.c.bf16 %v2307, %v2307
      %v2340 = vpack.c.bf16 %v2308, %v2308
      %v2341 = vpack.c.bf16 %v2309, %v2309
      %v2358 = vunpack.c.l.b16 %v2310
      %v2359 = vunpack.c.l.b16 %v2311
      %v2360 = vunpack.c.l.b16 %v2312
      %v2361 = vunpack.c.l.b16 %v2313
      %v2362 = vunpack.c.l.b16 %v2314
      %v2363 = vunpack.c.l.b16 %v2315
      %v2364 = vunpack.c.l.b16 %v2316
      %v2365 = vunpack.c.l.b16 %v2317
      %v2366 = vunpack.c.l.b16 %v2318
      %v2367 = vunpack.c.l.b16 %v2319
      %v2368 = vunpack.c.l.b16 %v2320
      %v2369 = vunpack.c.l.b16 %v2321
      %v2370 = vunpack.c.l.b16 %v2322
      %v2371 = vunpack.c.l.b16 %v2323
      %v2372 = vunpack.c.l.b16 %v2324
      %v2373 = vunpack.c.l.b16 %v2325
      %v2374 = vpack.c.b16 %v2359, %v2358
      %v2375 = vpack.c.b16 %v2361, %v2360
      %v2376 = vpack.c.b16 %v2363, %v2362
      %v2377 = vpack.c.b16 %v2365, %v2364
      %v2378 = vpack.c.b16 %v2367, %v2366
      %v2379 = vpack.c.b16 %v2369, %v2368
      %v2380 = vpack.c.b16 %v2371, %v2370
      %v2381 = vpack.c.b16 %v2373, %v2372
      %v2390 = vunpack.c.l.b16 %v981
      %v2391 = vunpack.c.l.b16 %v982
      %v2392 = vunpack.c.l.b16 %v983
      %v2393 = vunpack.c.l.b16 %v984
      %v2394 = vunpack.c.l.b16 %v985
      %v2395 = vunpack.c.l.b16 %v986
      %v2396 = vunpack.c.l.b16 %v987
      %v2397 = vunpack.c.l.b16 %v988
      %v2398 = vunpack.c.l.b16 %v989
      %v2399 = vunpack.c.l.b16 %v990
      %v2400 = vunpack.c.l.b16 %v991
      %v2401 = vunpack.c.l.b16 %v992
      %v2402 = vunpack.c.l.b16 %v993
      %v2403 = vunpack.c.l.b16 %v994
      %v2404 = vunpack.c.l.b16 %v995
      %v2405 = vunpack.c.l.b16 %v996
      %v2406 = vpack.c.b16 %v2391, %v2390
      %v2407 = vpack.c.b16 %v2393, %v2392
      %v2408 = vpack.c.b16 %v2395, %v2394
      %v2409 = vpack.c.b16 %v2397, %v2396
      %v2410 = vpack.c.b16 %v2399, %v2398
      %v2411 = vpack.c.b16 %v2401, %v2400
      %v2412 = vpack.c.b16 %v2403, %v2402
      %v2413 = vpack.c.b16 %v2405, %v2404
      %2414 = vrot.lane.b32.xlu0 %v2406, 64
      %v2415 = vpop.permute.xlu0 %2414
      %2416 = vrot.lane.b32.xlu0 %v2407, 64
      %v2417 = vpop.permute.xlu0 %2416
      %2418 = vrot.lane.b32.xlu0 %v2408, 64
      %v2419 = vpop.permute.xlu0 %2418
      %2420 = vrot.lane.b32.xlu0 %v2409, 64
      %v2421 = vpop.permute.xlu0 %2420
      %2422 = vrot.lane.b32.xlu0 %v2410, 64
      %v2423 = vpop.permute.xlu0 %2422
      %2424 = vrot.lane.b32.xlu0 %v2411, 64
      %v2425 = vpop.permute.xlu0 %2424
      %2426 = vrot.lane.b32.xlu0 %v2412, 64
      %v2427 = vpop.permute.xlu0 %2426
      %2428 = vrot.lane.b32.xlu0 %v2413, 64
      %v2429 = vpop.permute.xlu0 %2428
      %2438 = vmatpush.bf16.msra.mxu0 %v2429
      %2439 = vmatpush.bf16.msra.mxu0 %v2427
      %2440 = vmatpush.bf16.msra.mxu0 %v2425
      %2441 = vmatpush.bf16.msra.mxu0 %v2423
      %2442 = vmatpush.bf16.msra.mxu0 %v2421
      %2443 = vmatpush.bf16.msra.mxu0 %v2419
      %2444 = vmatpush.bf16.msra.mxu0 %v2417
      %2445 = vmatpush.bf16.msra.mxu0 %v2415
      %2446 = vmatmul.bf16.gmra.mxu0 %v2374
      %v2447 = vpop.f32.mrf.mxu0
      %v2448 = vadd.f32 0.0, %v2447
      %v2449 = vpop.f32.mrf.mxu0
      %v2450 = vadd.f32 0.0, %v2449
      %2451 = vmatmul.bf16.gmra.mxu0 %v2375
      %v2452 = vpop.f32.mrf.mxu0
      %v2453 = vadd.f32 0.0, %v2452
      %v2454 = vpop.f32.mrf.mxu0
      %v2455 = vadd.f32 0.0, %v2454
      %2456 = vmatmul.bf16.gmra.mxu0 %v2376
      %v2457 = vpop.f32.mrf.mxu0
      %v2458 = vadd.f32 0.0, %v2457
      %v2459 = vpop.f32.mrf.mxu0
      %v2460 = vadd.f32 0.0, %v2459
      %2461 = vmatmul.bf16.gmra.mxu0 %v2377
      %v2462 = vpop.f32.mrf.mxu0
      %v2463 = vadd.f32 0.0, %v2462
      %v2464 = vpop.f32.mrf.mxu0
      %v2465 = vadd.f32 0.0, %v2464
      %2466 = vmatmul.bf16.gmra.mxu0 %v2378
      %v2467 = vpop.f32.mrf.mxu0
      %v2468 = vadd.f32 0.0, %v2467
      %v2469 = vpop.f32.mrf.mxu0
      %v2470 = vadd.f32 0.0, %v2469
      %2471 = vmatmul.bf16.gmra.mxu0 %v2379
      %v2472 = vpop.f32.mrf.mxu0
      %v2473 = vadd.f32 0.0, %v2472
      %v2474 = vpop.f32.mrf.mxu0
      %v2475 = vadd.f32 0.0, %v2474
      %2476 = vmatmul.bf16.gmra.mxu0 %v2380
      %v2477 = vpop.f32.mrf.mxu0
      %v2478 = vadd.f32 0.0, %v2477
      %v2479 = vpop.f32.mrf.mxu0
      %v2480 = vadd.f32 0.0, %v2479
      %2481 = vmatmul.bf16.gmra.mxu0 %v2381
      %v2482 = vpop.f32.mrf.mxu0
      %v2483 = vadd.f32 0.0, %v2482
      %v2484 = vpop.f32.mrf.mxu0
      %v2485 = vadd.f32 0.0, %v2484
      %2486 = vdwg.mxu0
      %v2503 = vunpack.c.l.b16 %v2326
      %v2504 = vunpack.c.l.b16 %v2327
      %v2505 = vunpack.c.l.b16 %v2328
      %v2506 = vunpack.c.l.b16 %v2329
      %v2507 = vunpack.c.l.b16 %v2330
      %v2508 = vunpack.c.l.b16 %v2331
      %v2509 = vunpack.c.l.b16 %v2332
      %v2510 = vunpack.c.l.b16 %v2333
      %v2511 = vunpack.c.l.b16 %v2334
      %v2512 = vunpack.c.l.b16 %v2335
      %v2513 = vunpack.c.l.b16 %v2336
      %v2514 = vunpack.c.l.b16 %v2337
      %v2515 = vunpack.c.l.b16 %v2338
      %v2516 = vunpack.c.l.b16 %v2339
      %v2517 = vunpack.c.l.b16 %v2340
      %v2518 = vunpack.c.l.b16 %v2341
      %v2519 = vpack.c.b16 %v2504, %v2503
      %v2520 = vpack.c.b16 %v2506, %v2505
      %v2521 = vpack.c.b16 %v2508, %v2507
      %v2522 = vpack.c.b16 %v2510, %v2509
      %v2523 = vpack.c.b16 %v2512, %v2511
      %v2524 = vpack.c.b16 %v2514, %v2513
      %v2525 = vpack.c.b16 %v2516, %v2515
      %v2526 = vpack.c.b16 %v2518, %v2517
      %v2535 = vunpack.c.l.b16 %v1600
      %v2536 = vunpack.c.l.b16 %v1602
      %v2537 = vunpack.c.l.b16 %v1604
      %v2538 = vunpack.c.l.b16 %v1606
      %v2539 = vunpack.c.l.b16 %v1608
      %v2540 = vunpack.c.l.b16 %v1610
      %v2541 = vunpack.c.l.b16 %v1612
      %v2542 = vunpack.c.l.b16 %v1614
      %v2543 = vunpack.c.l.b16 %v1616
      %v2544 = vunpack.c.l.b16 %v1618
      %v2545 = vunpack.c.l.b16 %v1620
      %v2546 = vunpack.c.l.b16 %v1622
      %v2547 = vunpack.c.l.b16 %v1624
      %v2548 = vunpack.c.l.b16 %v1626
      %v2549 = vunpack.c.l.b16 %v1628
      %v2550 = vunpack.c.l.b16 %v1630
      %v2551 = vpack.c.b16 %v2536, %v2535
      %v2552 = vpack.c.b16 %v2538, %v2537
      %v2553 = vpack.c.b16 %v2540, %v2539
      %v2554 = vpack.c.b16 %v2542, %v2541
      %v2555 = vpack.c.b16 %v2544, %v2543
      %v2556 = vpack.c.b16 %v2546, %v2545
      %v2557 = vpack.c.b16 %v2548, %v2547
      %v2558 = vpack.c.b16 %v2550, %v2549
      %2559 = vrot.lane.b32.xlu0 %v2551, 64
      %v2560 = vpop.permute.xlu0 %2559
      %2561 = vrot.lane.b32.xlu0 %v2552, 64
      %v2562 = vpop.permute.xlu0 %2561
      %2563 = vrot.lane.b32.xlu0 %v2553, 64
      %v2564 = vpop.permute.xlu0 %2563
      %2565 = vrot.lane.b32.xlu0 %v2554, 64
      %v2566 = vpop.permute.xlu0 %2565
      %2567 = vrot.lane.b32.xlu0 %v2555, 64
      %v2568 = vpop.permute.xlu0 %2567
      %2569 = vrot.lane.b32.xlu0 %v2556, 64
      %v2570 = vpop.permute.xlu0 %2569
      %2571 = vrot.lane.b32.xlu0 %v2557, 64
      %v2572 = vpop.permute.xlu0 %2571
      %2573 = vrot.lane.b32.xlu0 %v2558, 64
      %v2574 = vpop.permute.xlu0 %2573
      %2583 = vmatpush.bf16.msra.mxu0 %v2574
      %2584 = vmatpush.bf16.msra.mxu0 %v2572
      %2585 = vmatpush.bf16.msra.mxu0 %v2570
      %2586 = vmatpush.bf16.msra.mxu0 %v2568
      %2587 = vmatpush.bf16.msra.mxu0 %v2566
      %2588 = vmatpush.bf16.msra.mxu0 %v2564
      %2589 = vmatpush.bf16.msra.mxu0 %v2562
      %2590 = vmatpush.bf16.msra.mxu0 %v2560
      %2591 = vmatmul.bf16.gmra.mxu0 %v2519
      %v2592 = vpop.f32.mrf.mxu0
      %v2593 = vadd.f32 0.0, %v2592
      %v2594 = vpop.f32.mrf.mxu0
      %v2595 = vadd.f32 0.0, %v2594
      %2596 = vmatmul.bf16.gmra.mxu0 %v2520
      %v2597 = vpop.f32.mrf.mxu0
      %v2598 = vadd.f32 0.0, %v2597
      %v2599 = vpop.f32.mrf.mxu0
      %v2600 = vadd.f32 0.0, %v2599
      %2601 = vmatmul.bf16.gmra.mxu0 %v2521
      %v2602 = vpop.f32.mrf.mxu0
      %v2603 = vadd.f32 0.0, %v2602
      %v2604 = vpop.f32.mrf.mxu0
      %v2605 = vadd.f32 0.0, %v2604
      %2606 = vmatmul.bf16.gmra.mxu0 %v2522
      %v2607 = vpop.f32.mrf.mxu0
      %v2608 = vadd.f32 0.0, %v2607
      %v2609 = vpop.f32.mrf.mxu0
      %v2610 = vadd.f32 0.0, %v2609
      %2611 = vmatmul.bf16.gmra.mxu0 %v2523
      %v2612 = vpop.f32.mrf.mxu0
      %v2613 = vadd.f32 0.0, %v2612
      %v2614 = vpop.f32.mrf.mxu0
      %v2615 = vadd.f32 0.0, %v2614
      %2616 = vmatmul.bf16.gmra.mxu0 %v2524
      %v2617 = vpop.f32.mrf.mxu0
      %v2618 = vadd.f32 0.0, %v2617
      %v2619 = vpop.f32.mrf.mxu0
      %v2620 = vadd.f32 0.0, %v2619
      %2621 = vmatmul.bf16.gmra.mxu0 %v2525
      %v2622 = vpop.f32.mrf.mxu0
      %v2623 = vadd.f32 0.0, %v2622
      %v2624 = vpop.f32.mrf.mxu0
      %v2625 = vadd.f32 0.0, %v2624
      %2626 = vmatmul.bf16.gmra.mxu0 %v2526
      %v2627 = vpop.f32.mrf.mxu0
      %v2628 = vadd.f32 0.0, %v2627
      %v2629 = vpop.f32.mrf.mxu0
      %v2630 = vadd.f32 0.0, %v2629
      %2631 = vdwg.mxu0
      %2648 = vrot.lane.b32.xlu0 %v2593, 16
      %v2649 = vpop.permute.xlu0 %2648
      %2650 = vrot.lane.b32.xlu0 %v2595, 16
      %v2651 = vpop.permute.xlu0 %2650
      %2652 = vrot.lane.b32.xlu0 %v2598, 16
      %v2653 = vpop.permute.xlu0 %2652
      %2654 = vrot.lane.b32.xlu0 %v2600, 16
      %v2655 = vpop.permute.xlu0 %2654
      %2656 = vrot.lane.b32.xlu0 %v2603, 16
      %v2657 = vpop.permute.xlu0 %2656
      %2658 = vrot.lane.b32.xlu0 %v2605, 16
      %v2659 = vpop.permute.xlu0 %2658
      %2660 = vrot.lane.b32.xlu0 %v2608, 16
      %v2661 = vpop.permute.xlu0 %2660
      %2662 = vrot.lane.b32.xlu0 %v2610, 16
      %v2663 = vpop.permute.xlu0 %2662
      %2664 = vrot.lane.b32.xlu0 %v2613, 16
      %v2665 = vpop.permute.xlu0 %2664
      %2666 = vrot.lane.b32.xlu0 %v2615, 16
      %v2667 = vpop.permute.xlu0 %2666
      %2668 = vrot.lane.b32.xlu0 %v2618, 16
      %v2669 = vpop.permute.xlu0 %2668
      %2670 = vrot.lane.b32.xlu0 %v2620, 16
      %v2671 = vpop.permute.xlu0 %2670
      %2672 = vrot.lane.b32.xlu0 %v2623, 16
      %v2673 = vpop.permute.xlu0 %2672
      %2674 = vrot.lane.b32.xlu0 %v2625, 16
      %v2675 = vpop.permute.xlu0 %2674
      %2676 = vrot.lane.b32.xlu0 %v2628, 16
      %v2677 = vpop.permute.xlu0 %2676
      %2678 = vrot.lane.b32.xlu0 %v2630, 16
      %v2679 = vpop.permute.xlu0 %2678
      %v2696 = vsel %vm1763, %v2448, %v2649
      %v2697 = vsel %vm1763, %v2450, %v2651
      %v2698 = vsel %vm1763, %v2453, %v2653
      %v2699 = vsel %vm1763, %v2455, %v2655
      %v2700 = vsel %vm1763, %v2458, %v2657
      %v2701 = vsel %vm1763, %v2460, %v2659
      %v2702 = vsel %vm1763, %v2463, %v2661
      %v2703 = vsel %vm1763, %v2465, %v2663
      %v2704 = vsel %vm1763, %v2468, %v2665
      %v2705 = vsel %vm1763, %v2470, %v2667
      %v2706 = vsel %vm1763, %v2473, %v2669
      %v2707 = vsel %vm1763, %v2475, %v2671
      %v2708 = vsel %vm1763, %v2478, %v2673
      %v2709 = vsel %vm1763, %v2480, %v2675
      %v2710 = vsel %vm1763, %v2483, %v2677
      %v2711 = vsel %vm1763, %v2485, %v2679
      %v2712 = vpack.c.bf16 %v2697, %v2696
      %v2713 = vpack.c.bf16 %v2699, %v2698
      %v2714 = vpack.c.bf16 %v2701, %v2700
      %v2715 = vpack.c.bf16 %v2703, %v2702
      %v2716 = vpack.c.bf16 %v2705, %v2704
      %v2717 = vpack.c.bf16 %v2707, %v2706
      %v2718 = vpack.c.bf16 %v2709, %v2708
      %v2719 = vpack.c.bf16 %v2711, %v2710
      %v2720 = vld [vmem:[%s9] sm:$0xf]
      %v2721 = vld [vmem:[%s9 + $0x4] sm:$0xf]
      %v2722 = vld [vmem:[%s9 + $0x8] sm:$0xf]
      %v2723 = vld [vmem:[%s9 + $0xc] sm:$0xf]
      %v2724 = vld [vmem:[%s10] sm:$0x1]
      %v2726 = vperm.slane %v2724, 0
      %v2732 = vunpack.c.l.b16 %v2720
      %v2733 = vunpack.c.l.b16 %v2721
      %v2734 = vunpack.c.l.b16 %v2722
      %v2735 = vunpack.c.l.b16 %v2723
      %v2736 = vpack.c.b16 %v2733, %v2732
      %v2737 = vpack.c.b16 %v2735, %v2734
      %v2741 = vsel %vm466, %v2712, 0
      %v2744 = vsel %vm466, %v2713, 0
      %v2747 = vsel %vm466, %v2714, 0
      %v2750 = vsel %vm466, %v2715, 0
      %v2753 = vsel %vm466, %v2716, 0
      %v2756 = vsel %vm466, %v2717, 0
      %v2759 = vsel %vm466, %v2718, 0
      %v2762 = vsel %vm466, %v2719, 0
      %2764 = vmatpush.bf16.msra.mxu0 0
      %2765 = vmatpush.bf16.msra.mxu0 0
      %2766 = vmatpush.bf16.msra.mxu0 0
      %2767 = vmatpush.bf16.msra.mxu0 0
      %2768 = vmatpush.bf16.msra.mxu0 0
      %2769 = vmatpush.bf16.msra.mxu0 0
      %2770 = vmatpush.bf16.msra.mxu0 %v2737
      %2771 = vmatpush.bf16.msra.mxu0 %v2736
      %2772 = vmatmul.bf16.gmra.mxu0 %v2741
      %v2773 = vpop.f32.mrf.mxu0
      %v2774 = vadd.f32 %v2726, %v2773
      %v2775 = vpop.f32.mrf.mxu0
      %v2776 = vadd.f32 %v2726, %v2775
      %2777 = vmatmul.bf16.gmra.mxu0 %v2744
      %v2778 = vpop.f32.mrf.mxu0
      %v2779 = vadd.f32 %v2726, %v2778
      %v2780 = vpop.f32.mrf.mxu0
      %v2781 = vadd.f32 %v2726, %v2780
      %2782 = vmatmul.bf16.gmra.mxu0 %v2747
      %v2783 = vpop.f32.mrf.mxu0
      %v2784 = vadd.f32 %v2726, %v2783
      %v2785 = vpop.f32.mrf.mxu0
      %v2786 = vadd.f32 %v2726, %v2785
      %2787 = vmatmul.bf16.gmra.mxu0 %v2750
      %v2788 = vpop.f32.mrf.mxu0
      %v2789 = vadd.f32 %v2726, %v2788
      %v2790 = vpop.f32.mrf.mxu0
      %v2791 = vadd.f32 %v2726, %v2790
      %2792 = vmatmul.bf16.gmra.mxu0 %v2753
      %v2793 = vpop.f32.mrf.mxu0
      %v2794 = vadd.f32 %v2726, %v2793
      %v2795 = vpop.f32.mrf.mxu0
      %v2796 = vadd.f32 %v2726, %v2795
      %2797 = vmatmul.bf16.gmra.mxu0 %v2756
      %v2798 = vpop.f32.mrf.mxu0
      %v2799 = vadd.f32 %v2726, %v2798
      %v2800 = vpop.f32.mrf.mxu0
      %v2801 = vadd.f32 %v2726, %v2800
      %2802 = vmatmul.bf16.gmra.mxu0 %v2759
      %v2803 = vpop.f32.mrf.mxu0
      %v2804 = vadd.f32 %v2726, %v2803
      %v2805 = vpop.f32.mrf.mxu0
      %v2806 = vadd.f32 %v2726, %v2805
      %2807 = vmatmul.bf16.gmra.mxu0 %v2762
      %v2808 = vpop.f32.mrf.mxu0
      %v2809 = vadd.f32 %v2726, %v2808
      %v2810 = vpop.f32.mrf.mxu0
      %v2811 = vadd.f32 %v2726, %v2810
      %2812 = vdwg.mxu0
      %v2813 = vadd.f32 %v2774, %v448
      %v2814 = vadd.f32 %v2776, %v449
      %v2815 = vadd.f32 %v2779, %v450
      %v2816 = vadd.f32 %v2781, %v451
      %v2817 = vadd.f32 %v2784, %v452
      %v2818 = vadd.f32 %v2786, %v453
      %v2819 = vadd.f32 %v2789, %v454
      %v2820 = vadd.f32 %v2791, %v455
      %v2821 = vadd.f32 %v2794, %v456
      %v2822 = vadd.f32 %v2796, %v457
      %v2823 = vadd.f32 %v2799, %v458
      %v2824 = vadd.f32 %v2801, %v459
      %v2825 = vadd.f32 %v2804, %v460
      %v2826 = vadd.f32 %v2806, %v461
      %v2827 = vadd.f32 %v2809, %v462
      %v2828 = vadd.f32 %v2811, %v463
      %2829 = vst.msk [vmem:[%s446] sm:$0xff] %vm466, %v2813
      %2830 = vst.msk [vmem:[%s446 + $0x8] sm:$0xff] %vm466, %v2814
      %2831 = vst.msk [vmem:[%s446 + $0x10] sm:$0xff] %vm466, %v2815
      %2832 = vst.msk [vmem:[%s446 + $0x18] sm:$0xff] %vm466, %v2816
      %2833 = vst.msk [vmem:[%s446 + $0x20] sm:$0xff] %vm466, %v2817
      %2834 = vst.msk [vmem:[%s446 + $0x28] sm:$0xff] %vm466, %v2818
      %2835 = vst.msk [vmem:[%s446 + $0x30] sm:$0xff] %vm466, %v2819
      %2836 = vst.msk [vmem:[%s446 + $0x38] sm:$0xff] %vm466, %v2820
      %2837 = vst.msk [vmem:[%s446 + $0x40] sm:$0xff] %vm466, %v2821
      %2838 = vst.msk [vmem:[%s446 + $0x48] sm:$0xff] %vm466, %v2822
      %2839 = vst.msk [vmem:[%s446 + $0x50] sm:$0xff] %vm466, %v2823
      %2840 = vst.msk [vmem:[%s446 + $0x58] sm:$0xff] %vm466, %v2824
      %2841 = vst.msk [vmem:[%s446 + $0x60] sm:$0xff] %vm466, %v2825
      %2842 = vst.msk [vmem:[%s446 + $0x68] sm:$0xff] %vm466, %v2826
      %2843 = vst.msk [vmem:[%s446 + $0x70] sm:$0xff] %vm466, %v2827
      %2844 = vst.msk [vmem:[%s446 + $0x78] sm:$0xff] %vm466, %v2828
      %p2845 = scmp.lt.s32.totalorder %s22, 1
      %s2846 = scalar_select %p2845, %s22, 1
      %s2847 = smul.addr %s2846, 16
      %s2848 = smul.addr %s2847, 8
      %s2849 = scalar_lea.vmem %s11, %s2848
      // Predicated region
      $region65: #{transformer_forward.5} parent=63 // pred_check
        %p2850 = pneg %p291
      $region66: #{transformer_forward.5} parent=63 // pred_check_branch
        %2852 = sbr.rel (%p2850) target = $region68
      $region67: #{transformer_forward.5} parent=63 // pred_region
        _
      $region68: #{transformer_forward.5} parent=63 // pred_fallthru
        _
    $region64: #{transformer_forward.5} parent=5 // pred_fallthru
      _
    %p2853 = scmp.le.s32.totalorder 2, %s17
    // Predicated region
    $region69: #{transformer_forward.5} parent=5 // pred_check
      %p2854 = pneg %p2853
    $region70: #{transformer_forward.5} parent=5 // pred_check_branch
      %2856 = sbr.rel (%p2854) target = $region72
    $region71: #{transformer_forward.5} parent=5 // pred_region
      %s2857 = ssub.s32 %s17, 2
      // Predicated region
      $region73: #{transformer_forward.5} parent=71 // pred_check
        %p2858 = pneg %p297
      $region74: #{transformer_forward.5} parent=71 // pred_check_branch
        %2860 = sbr.rel (%p2858) target = $region76
      $region75: #{transformer_forward.5} parent=71 // pred_region
        %p2861 = scmp.lt.s32.totalorder %s23, 1
        %s2862 = scalar_select %p2861, %s23, 1
        %s2863 = smul.addr %s2862, 16
        %s2864 = smul.addr %s2863, 8
        %s2865 = scalar_lea.vmem %s11, %s2864
      $region76: #{transformer_forward.5} parent=71 // pred_fallthru
        _
    $region72: #{transformer_forward.5} parent=5 // pred_fallthru
      _
  $region6: #{transformer_forward.5} parent=0 // loop_footer
    %s21 = sadd.s32 1, %s17
  $region7: #{transformer_forward.5} parent=0 // loop_footer_branch
    %16 = sbr.rel target = $region3
  $region8: #{transformer_forward.5} parent=0 // loop_exit
    _

</llo_original>
